<compile_context>
chip_gen: v5e
topology: v5e:2x2
jax: 0.10.0
libtpu: 0.0.40
codegen_flags: <defaults>
</compile_context>

<pallas_src>
import functools

import jax
import jax.numpy as jnp
from jax import lax
from jax.experimental import pallas as pl
from jax.experimental.pallas import tpu as pltpu

# ---------------------------------------------------------------------------
# Model dimensions (concrete instantiation of the generic Model structure).
# ---------------------------------------------------------------------------
C_IN = 4       # input channels
C1 = 8         # backbone conv1 output channels
C2 = 16        # backbone conv2 output channels
HID = 32       # neck linear hidden size
N_CLS = 10     # head logits
CP = 128       # lane padding for the *wide* channel axes (conv2 out / FC out)
CHUNK_ROWS = 8  # image rows per conv matmul chunk  -> M = 8*W = 128


def _conv3x3_relu_chunk(src_ref, w_ref, b_row, r0, rows, W, cin):
    """ReLU(3x3 conv (pad=1) + bias) for `rows` output rows starting at r0.

    src_ref : (H+2, W+2, cin) halo-padded f32 ref (input image or conv1 act.)
    w_ref   : (9, cin, cout)  bf16 per-tap weights (K = cin, unpadded)
    b_row   : (1, cout)       f32 bias row
    returns : (rows*W, cout)  f32
    """
    acc = None
    for kh in range(3):
        for kw in range(3):
            # Narrow (cin-lane) patch slice; cast to bf16 right before the MXU.
            patch = src_ref[r0 + kh:r0 + kh + rows, kw:kw + W, :]
            patch = patch.reshape(rows * W, cin).astype(jnp.bfloat16)
            d = jnp.dot(patch, w_ref[kh * 3 + kw],
                        preferred_element_type=jnp.float32)
            acc = d if acc is None else acc + d
    return jnp.maximum(acc + b_row, 0.0)


def _fused_model_kernel(x_ref, w1_ref, b1_ref, w2_ref, b2_ref,
                        wf1_ref, bf1_ref, wf2_ref, bf2_ref,
                        out_ref, h1p_ref, *, H, W):
    """Whole forward pass for one image, entirely in VMEM.

    x_ref    : (H+2, W+2, C_IN) halo-padded NHWC input (f32)
    w1_ref   : (9, C_IN, C1)    bf16  conv1 taps (K=4, no padding)
    b1_ref   : (1, C1)          f32
    w2_ref   : (9, C1, CP)      bf16  conv2 taps (K=8, out padded to 128)
    b2_ref   : (1, CP)          f32
    wf1_ref  : (C2, CP)         bf16  neck linear (K=16)
    bf1_ref  : (1, CP)          f32
    wf2_ref  : (HID, CP)        bf16  head linear (K=32)
    bf2_ref  : (1, CP)          f32
    out_ref  : (1, 1, CP)       padded logits row
    h1p_ref  : (H+2, W+2, C1)   f32 VMEM scratch: halo-padded conv1 activation
    """
    n_chunks = H // CHUNK_ROWS

    # Small (~10 KiB) scratch; re-zero every step so the 1-px halo ring is
    # correct on every core even when the batch grid is megacore-partitioned.
    h1p_ref[...] = jnp.zeros_like(h1p_ref)

    # ---- backbone conv1 (3x3, pad=1) + ReLU, chunked over image rows -------
    b1 = b1_ref[...]
    for c in range(n_chunks):
        r0 = c * CHUNK_ROWS
        h1 = _conv3x3_relu_chunk(x_ref, w1_ref, b1, r0, CHUNK_ROWS, W, C_IN)
        # Interior-only store; halo ring stays zero.
        h1p_ref[pl.ds(1 + r0, CHUNK_ROWS), pl.ds(1, W), :] = (
            h1.reshape(CHUNK_ROWS, W, C1))

    # ---- backbone conv2 (3x3, pad=1) + ReLU + fused global-avg-pool --------
    b2 = b2_ref[...]
    pooled = jnp.zeros((1, CP), jnp.float32)
    for c in range(n_chunks):
        r0 = c * CHUNK_ROWS
        h2 = _conv3x3_relu_chunk(h1p_ref, w2_ref, b2, r0, CHUNK_ROWS, W, C1)
        pooled = pooled + jnp.sum(h2, axis=0, keepdims=True)
    pooled = pooled * (1.0 / (H * W))            # (1, CP); padded lanes are 0

    # ---- neck: Linear(16->32) + ReLU (K kept at its real size of 16) -------
    f1 = jnp.maximum(
        jnp.dot(pooled[:, :C2].astype(jnp.bfloat16), wf1_ref[...],
                preferred_element_type=jnp.float32) + bf1_ref[...], 0.0)

    # ---- head: Linear(32->10) logits ----------------------------------------
    # TODO(synk): the head's training loss vs. `label` is registry-dependent;
    #             we return inference-style logits and ignore the label.
    logits = (jnp.dot(f1[:, :HID].astype(jnp.bfloat16), wf2_ref[...],
                      preferred_element_type=jnp.float32) + bf2_ref[...])
    out_ref[...] = logits.reshape(1, 1, CP)


def _pad_last(a, n):
    return jnp.pad(a, [(0, 0)] * (a.ndim - 1) + [(0, n - a.shape[-1])])


@jax.jit
def model_forward(x, params):
    """x: (N, C_IN, H, W) NCHW float32 -> logits (N, N_CLS)."""
    w1, b1, w2, b2, wf1, bf1, wf2, bf2 = params
    N, _, H, W = x.shape
    HP, WP = H + 2, W + 2

    # NCHW -> halo-padded NHWC (tiny; fused into the XLA prologue).
    # TODO(synk): accept NHWC inputs directly to skip this relayout pass.
    x_pad = jnp.pad(jnp.transpose(x, (0, 2, 3, 1)),
                    ((0, 0), (1, 1), (1, 1), (0, 0)))

    # Tap-major weight relayout.  Contraction (K) axes keep their real size
    # (4 / 8 / 16 / 32); only genuinely wide output axes are padded to 128
    # lanes.  MXU operands are bf16, biases stay f32.
    w1k = jnp.transpose(w1, (2, 3, 1, 0)).reshape(9, C_IN, C1).astype(jnp.bfloat16)
    b1k = b1.reshape(1, C1).astype(jnp.float32)
    w2k = _pad_last(jnp.transpose(w2, (2, 3, 1, 0)).reshape(9, C1, C2),
                    CP).astype(jnp.bfloat16)
    b2k = _pad_last(b2.reshape(1, C2), CP).astype(jnp.float32)
    wf1k = _pad_last(wf1.T, CP).astype(jnp.bfloat16)     # (C2, HID) -> (C2, CP)
    bf1k = _pad_last(bf1.reshape(1, HID), CP).astype(jnp.float32)
    wf2k = _pad_last(wf2.T, CP).astype(jnp.bfloat16)     # (HID, N_CLS) -> (HID, CP)
    bf2k = _pad_last(bf2.reshape(1, N_CLS), CP).astype(jnp.float32)

    kernel = functools.partial(_fused_model_kernel, H=H, W=W)

    grid_spec = pltpu.PrefetchScalarGridSpec(
        num_scalar_prefetch=0,
        grid=(N,),   # 1 image / step keeps >=2 steps for v7x's 2 TCs at N=2
        in_specs=[
            pl.BlockSpec((None, HP, WP, C_IN), lambda n: (n, 0, 0, 0)),
            pl.BlockSpec((9, C_IN, C1), lambda n: (0, 0, 0)),
            pl.BlockSpec((1, C1), lambda n: (0, 0)),
            pl.BlockSpec((9, C1, CP), lambda n: (0, 0, 0)),
            pl.BlockSpec((1, CP), lambda n: (0, 0)),
            pl.BlockSpec((C2, CP), lambda n: (0, 0)),
            pl.BlockSpec((1, CP), lambda n: (0, 0)),
            pl.BlockSpec((HID, CP), lambda n: (0, 0)),
            pl.BlockSpec((1, CP), lambda n: (0, 0)),
        ],
        out_specs=pl.BlockSpec((1, 1, CP), lambda n: (n, 0, 0)),
        scratch_shapes=[pltpu.VMEM((HP, WP, C1), jnp.float32)],
    )

    out_padded = pl.pallas_call(
        kernel,
        out_shape=jax.ShapeDtypeStruct((N, 1, CP), jnp.float32),
        grid_spec=grid_spec,
        compiler_params=pltpu.CompilerParams(
            dimension_semantics=("parallel",),   # batch split across TCs (v7x)
        ),
    )(x_pad, w1k, b1k, w2k, b2k, wf1k, bf1k, wf2k, bf2k)

    return out_padded[:, 0, :N_CLS]              # strip lane padding


def reference_forward(x, params):
    """Pure-JAX reference matching the PyTorch module's forward."""
    w1, b1, w2, b2, wf1, bf1, wf2, bf2 = params
    dn = ('NCHW', 'OIHW', 'NCHW')
    h = lax.conv_general_dilated(x, w1, (1, 1), ((1, 1), (1, 1)),
                                 dimension_numbers=dn,
                                 precision=lax.Precision.HIGHEST)
    h = jax.nn.relu(h + b1[None, :, None, None])
    h = lax.conv_general_dilated(h, w2, (1, 1), ((1, 1), (1, 1)),
                                 dimension_numbers=dn,
                                 precision=lax.Precision.HIGHEST)
    h = jax.nn.relu(h + b2[None, :, None, None])
    pooled = jnp.mean(h, axis=(2, 3))
    f = jax.nn.relu(jnp.dot(pooled, wf1.T, precision=lax.Precision.HIGHEST) + bf1)
    return jnp.dot(f, wf2.T, precision=lax.Precision.HIGHEST) + bf2


if __name__ == "__main__":
    key = jax.random.PRNGKey(0)
    kx, k1, k2, k3, k4, k5, k6, k7, k8 = jax.random.split(key, 9)
    N, H, W = 2, 16, 16
    x = jax.random.normal(kx, (N, C_IN, H, W), jnp.float32)
    params = (
        0.1 * jax.random.normal(k1, (C1, C_IN, 3, 3), jnp.float32),
        0.1 * jax.random.normal(k2, (C1,), jnp.float32),
        0.1 * jax.random.normal(k3, (C2, C1, 3, 3), jnp.float32),
        0.1 * jax.random.normal(k4, (C2,), jnp.float32),
        0.1 * jax.random.normal(k5, (HID, C2), jnp.float32),
        0.1 * jax.random.normal(k6, (HID,), jnp.float32),
        0.1 * jax.random.normal(k7, (N_CLS, HID), jnp.float32),
        0.1 * jax.random.normal(k8, (N_CLS,), jnp.float32),
    )

    logits = jax.block_until_ready(model_forward(x, params))
    ref = jax.block_until_ready(reference_forward(x, params))

    assert logits.shape == (N, N_CLS)
    if not jnp.allclose(logits, ref, atol=2e-2, rtol=2e-2):
        raise AssertionError(
            "Pallas output mismatch vs reference; max abs err = "
            f"{float(jnp.max(jnp.abs(logits - ref)))}")
    print("KERNEL_OK")
</pallas_src>

<mosaic_0001>
module attributes {stable_mosaic.version = 11 : i64} {
  func.func @_fused_model_kernel(%arg0: i32, %arg1: memref<1x18x18x4xf32, #tpu.memory_space<vmem>>, %arg2: memref<9x4x8xbf16, #tpu.memory_space<vmem>>, %arg3: memref<1x8xf32, #tpu.memory_space<vmem>>, %arg4: memref<9x8x128xbf16, #tpu.memory_space<vmem>>, %arg5: memref<1x128xf32, #tpu.memory_space<vmem>>, %arg6: memref<16x128xbf16, #tpu.memory_space<vmem>>, %arg7: memref<1x128xf32, #tpu.memory_space<vmem>>, %arg8: memref<32x128xbf16, #tpu.memory_space<vmem>>, %arg9: memref<1x128xf32, #tpu.memory_space<vmem>>, %arg10: memref<1x1x128xf32, #tpu.memory_space<vmem>>, %arg11: memref<18x18x8xf32, #tpu.memory_space<vmem>>) attributes {dimension_semantics = [#tpu.dimension_semantics<parallel>], iteration_bounds = array<i64: 2>, scalar_prefetch = 0 : i64, scratch_operands = 1 : i64, tpu.core_type = #tpu.core_type<tc>, window_params = [{transform_indices = @transform_0, window_bounds = array<i64: 1, 18, 18, 4>}, {pipeline_mode = #tpu.pipeline_mode<synchronous>, transform_indices = @transform_1, window_bounds = array<i64: 9, 4, 8>}, {pipeline_mode = #tpu.pipeline_mode<synchronous>, transform_indices = @transform_2, window_bounds = array<i64: 1, 8>}, {pipeline_mode = #tpu.pipeline_mode<synchronous>, transform_indices = @transform_3, window_bounds = array<i64: 9, 8, 128>}, {pipeline_mode = #tpu.pipeline_mode<synchronous>, transform_indices = @transform_4, window_bounds = array<i64: 1, 128>}, {pipeline_mode = #tpu.pipeline_mode<synchronous>, transform_indices = @transform_5, window_bounds = array<i64: 16, 128>}, {pipeline_mode = #tpu.pipeline_mode<synchronous>, transform_indices = @transform_6, window_bounds = array<i64: 1, 128>}, {pipeline_mode = #tpu.pipeline_mode<synchronous>, transform_indices = @transform_7, window_bounds = array<i64: 32, 128>}, {pipeline_mode = #tpu.pipeline_mode<synchronous>, transform_indices = @transform_8, window_bounds = array<i64: 1, 128>}, {transform_indices = @transform_9, window_bounds = array<i64: 1, 1, 128>}]} {
    %cst = arith.constant 0.000000e+00 : f32
    %0 = vector.broadcast %cst : f32 to vector<18x18x8xf32>
    %c0 = arith.constant 0 : index
    %c0_0 = arith.constant 0 : index
    %c0_1 = arith.constant 0 : index
    %1 = vector.load %arg11[%c0, %c0_0, %c0_1] : memref<18x18x8xf32, #tpu.memory_space<vmem>>, vector<18x18x8xf32>
    tpu.vector_store %arg11[%c0, %c0_0, %c0_1], %0 {strides = array<i32>} : memref<18x18x8xf32, #tpu.memory_space<vmem>>, vector<18x18x8xf32>,
    %c0_2 = arith.constant 0 : index
    %c0_3 = arith.constant 0 : index
    %2 = vector.load %arg3[%c0_2, %c0_3] : memref<1x8xf32, #tpu.memory_space<vmem>>, vector<1x8xf32>
    %c0_4 = arith.constant 0 : index
    %c0_5 = arith.constant 0 : index
    %c0_6 = arith.constant 0 : index
    %c0_7 = arith.constant 0 : index
    %3 = vector.load %arg1[%c0_4, %c0_5, %c0_6, %c0_7] : memref<1x18x18x4xf32, #tpu.memory_space<vmem>>, vector<1x8x16x4xf32>
    %4 = vector.shape_cast %3 : vector<1x8x16x4xf32> to vector<8x16x4xf32>
    %5 = vector.shape_cast %4 : vector<8x16x4xf32> to vector<128x4xf32>
    %6 = arith.truncf %5 : vector<128x4xf32> to vector<128x4xbf16>
    %c0_8 = arith.constant 0 : index
    %c0_9 = arith.constant 0 : index
    %c0_10 = arith.constant 0 : index
    %7 = vector.load %arg2[%c0_8, %c0_9, %c0_10] : memref<9x4x8xbf16, #tpu.memory_space<vmem>>, vector<1x4x8xbf16>
    %8 = vector.shape_cast %7 : vector<1x4x8xbf16> to vector<4x8xbf16>
    %cst_11 = arith.constant dense<0.000000e+00> : vector<128x8xf32>
    %9 = tpu.matmul %6, %8, %cst_11 {dimension_numbers = #tpu.dot_dimension_numbers<[1], [0], [0], [1], [0, 0, 1, 1], [], []>} : vector<128x4xbf16>, vector<4x8xbf16>, vector<128x8xf32> -> vector<128x8xf32>
    %c0_12 = arith.constant 0 : index
    %c0_13 = arith.constant 0 : index
    %c1 = arith.constant 1 : index
    %c0_14 = arith.constant 0 : index
    %10 = vector.load %arg1[%c0_12, %c0_13, %c1, %c0_14] : memref<1x18x18x4xf32, #tpu.memory_space<vmem>>, vector<1x8x16x4xf32>
    %11 = vector.shape_cast %10 : vector<1x8x16x4xf32> to vector<8x16x4xf32>
    %12 = vector.shape_cast %11 : vector<8x16x4xf32> to vector<128x4xf32>
    %13 = arith.truncf %12 : vector<128x4xf32> to vector<128x4xbf16>
    %c1_15 = arith.constant 1 : index
    %c0_16 = arith.constant 0 : index
    %c0_17 = arith.constant 0 : index
    %14 = vector.load %arg2[%c1_15, %c0_16, %c0_17] : memref<9x4x8xbf16, #tpu.memory_space<vmem>>, vector<1x4x8xbf16>
    %15 = vector.shape_cast %14 : vector<1x4x8xbf16> to vector<4x8xbf16>
    %cst_18 = arith.constant dense<0.000000e+00> : vector<128x8xf32>
    %16 = tpu.matmul %13, %15, %cst_18 {dimension_numbers = #tpu.dot_dimension_numbers<[1], [0], [0], [1], [0, 0, 1, 1], [], []>} : vector<128x4xbf16>, vector<4x8xbf16>, vector<128x8xf32> -> vector<128x8xf32>
    %17 = arith.addf %9, %16 : vector<128x8xf32>
    %c0_19 = arith.constant 0 : index
    %c0_20 = arith.constant 0 : index
    %c2 = arith.constant 2 : index
    %c0_21 = arith.constant 0 : index
    %18 = vector.load %arg1[%c0_19, %c0_20, %c2, %c0_21] : memref<1x18x18x4xf32, #tpu.memory_space<vmem>>, vector<1x8x16x4xf32>
    %19 = vector.shape_cast %18 : vector<1x8x16x4xf32> to vector<8x16x4xf32>
    %20 = vector.shape_cast %19 : vector<8x16x4xf32> to vector<128x4xf32>
    %21 = arith.truncf %20 : vector<128x4xf32> to vector<128x4xbf16>
    %c2_22 = arith.constant 2 : index
    %c0_23 = arith.constant 0 : index
    %c0_24 = arith.constant 0 : index
    %22 = vector.load %arg2[%c2_22, %c0_23, %c0_24] : memref<9x4x8xbf16, #tpu.memory_space<vmem>>, vector<1x4x8xbf16>
    %23 = vector.shape_cast %22 : vector<1x4x8xbf16> to vector<4x8xbf16>
    %cst_25 = arith.constant dense<0.000000e+00> : vector<128x8xf32>
    %24 = tpu.matmul %21, %23, %cst_25 {dimension_numbers = #tpu.dot_dimension_numbers<[1], [0], [0], [1], [0, 0, 1, 1], [], []>} : vector<128x4xbf16>, vector<4x8xbf16>, vector<128x8xf32> -> vector<128x8xf32>
    %25 = arith.addf %17, %24 : vector<128x8xf32>
    %c0_26 = arith.constant 0 : index
    %c1_27 = arith.constant 1 : index
    %c0_28 = arith.constant 0 : index
    %c0_29 = arith.constant 0 : index
    %26 = vector.load %arg1[%c0_26, %c1_27, %c0_28, %c0_29] : memref<1x18x18x4xf32, #tpu.memory_space<vmem>>, vector<1x8x16x4xf32>
    %27 = vector.shape_cast %26 : vector<1x8x16x4xf32> to vector<8x16x4xf32>
    %28 = vector.shape_cast %27 : vector<8x16x4xf32> to vector<128x4xf32>
    %29 = arith.truncf %28 : vector<128x4xf32> to vector<128x4xbf16>
    %c3 = arith.constant 3 : index
    %c0_30 = arith.constant 0 : index
    %c0_31 = arith.constant 0 : index
    %30 = vector.load %arg2[%c3, %c0_30, %c0_31] : memref<9x4x8xbf16, #tpu.memory_space<vmem>>, vector<1x4x8xbf16>
    %31 = vector.shape_cast %30 : vector<1x4x8xbf16> to vector<4x8xbf16>
    %cst_32 = arith.constant dense<0.000000e+00> : vector<128x8xf32>
    %32 = tpu.matmul %29, %31, %cst_32 {dimension_numbers = #tpu.dot_dimension_numbers<[1], [0], [0], [1], [0, 0, 1, 1], [], []>} : vector<128x4xbf16>, vector<4x8xbf16>, vector<128x8xf32> -> vector<128x8xf32>
    %33 = arith.addf %25, %32 : vector<128x8xf32>
    %c0_33 = arith.constant 0 : index
    %c1_34 = arith.constant 1 : index
    %c1_35 = arith.constant 1 : index
    %c0_36 = arith.constant 0 : index
    %34 = vector.load %arg1[%c0_33, %c1_34, %c1_35, %c0_36] : memref<1x18x18x4xf32, #tpu.memory_space<vmem>>, vector<1x8x16x4xf32>
    %35 = vector.shape_cast %34 : vector<1x8x16x4xf32> to vector<8x16x4xf32>
    %36 = vector.shape_cast %35 : vector<8x16x4xf32> to vector<128x4xf32>
    %37 = arith.truncf %36 : vector<128x4xf32> to vector<128x4xbf16>
    %c4 = arith.constant 4 : index
    %c0_37 = arith.constant 0 : index
    %c0_38 = arith.constant 0 : index
    %38 = vector.load %arg2[%c4, %c0_37, %c0_38] : memref<9x4x8xbf16, #tpu.memory_space<vmem>>, vector<1x4x8xbf16>
    %39 = vector.shape_cast %38 : vector<1x4x8xbf16> to vector<4x8xbf16>
    %cst_39 = arith.constant dense<0.000000e+00> : vector<128x8xf32>
    %40 = tpu.matmul %37, %39, %cst_39 {dimension_numbers = #tpu.dot_dimension_numbers<[1], [0], [0], [1], [0, 0, 1, 1], [], []>} : vector<128x4xbf16>, vector<4x8xbf16>, vector<128x8xf32> -> vector<128x8xf32>
    %41 = arith.addf %33, %40 : vector<128x8xf32>
    %c0_40 = arith.constant 0 : index
    %c1_41 = arith.constant 1 : index
    %c2_42 = arith.constant 2 : index
    %c0_43 = arith.constant 0 : index
    %42 = vector.load %arg1[%c0_40, %c1_41, %c2_42, %c0_43] : memref<1x18x18x4xf32, #tpu.memory_space<vmem>>, vector<1x8x16x4xf32>
    %43 = vector.shape_cast %42 : vector<1x8x16x4xf32> to vector<8x16x4xf32>
    %44 = vector.shape_cast %43 : vector<8x16x4xf32> to vector<128x4xf32>
    %45 = arith.truncf %44 : vector<128x4xf32> to vector<128x4xbf16>
    %c5 = arith.constant 5 : index
    %c0_44 = arith.constant 0 : index
    %c0_45 = arith.constant 0 : index
    %46 = vector.load %arg2[%c5, %c0_44, %c0_45] : memref<9x4x8xbf16, #tpu.memory_space<vmem>>, vector<1x4x8xbf16>
    %47 = vector.shape_cast %46 : vector<1x4x8xbf16> to vector<4x8xbf16>
    %cst_46 = arith.constant dense<0.000000e+00> : vector<128x8xf32>
    %48 = tpu.matmul %45, %47, %cst_46 {dimension_numbers = #tpu.dot_dimension_numbers<[1], [0], [0], [1], [0, 0, 1, 1], [], []>} : vector<128x4xbf16>, vector<4x8xbf16>, vector<128x8xf32> -> vector<128x8xf32>
    %49 = arith.addf %41, %48 : vector<128x8xf32>
    %c0_47 = arith.constant 0 : index
    %c2_48 = arith.constant 2 : index
    %c0_49 = arith.constant 0 : index
    %c0_50 = arith.constant 0 : index
    %50 = vector.load %arg1[%c0_47, %c2_48, %c0_49, %c0_50] : memref<1x18x18x4xf32, #tpu.memory_space<vmem>>, vector<1x8x16x4xf32>
    %51 = vector.shape_cast %50 : vector<1x8x16x4xf32> to vector<8x16x4xf32>
    %52 = vector.shape_cast %51 : vector<8x16x4xf32> to vector<128x4xf32>
    %53 = arith.truncf %52 : vector<128x4xf32> to vector<128x4xbf16>
    %c6 = arith.constant 6 : index
    %c0_51 = arith.constant 0 : index
    %c0_52 = arith.constant 0 : index
    %54 = vector.load %arg2[%c6, %c0_51, %c0_52] : memref<9x4x8xbf16, #tpu.memory_space<vmem>>, vector<1x4x8xbf16>
    %55 = vector.shape_cast %54 : vector<1x4x8xbf16> to vector<4x8xbf16>
    %cst_53 = arith.constant dense<0.000000e+00> : vector<128x8xf32>
    %56 = tpu.matmul %53, %55, %cst_53 {dimension_numbers = #tpu.dot_dimension_numbers<[1], [0], [0], [1], [0, 0, 1, 1], [], []>} : vector<128x4xbf16>, vector<4x8xbf16>, vector<128x8xf32> -> vector<128x8xf32>
    %57 = arith.addf %49, %56 : vector<128x8xf32>
    %c0_54 = arith.constant 0 : index
    %c2_55 = arith.constant 2 : index
    %c1_56 = arith.constant 1 : index
    %c0_57 = arith.constant 0 : index
    %58 = vector.load %arg1[%c0_54, %c2_55, %c1_56, %c0_57] : memref<1x18x18x4xf32, #tpu.memory_space<vmem>>, vector<1x8x16x4xf32>
    %59 = vector.shape_cast %58 : vector<1x8x16x4xf32> to vector<8x16x4xf32>
    %60 = vector.shape_cast %59 : vector<8x16x4xf32> to vector<128x4xf32>
    %61 = arith.truncf %60 : vector<128x4xf32> to vector<128x4xbf16>
    %c7 = arith.constant 7 : index
    %c0_58 = arith.constant 0 : index
    %c0_59 = arith.constant 0 : index
    %62 = vector.load %arg2[%c7, %c0_58, %c0_59] : memref<9x4x8xbf16, #tpu.memory_space<vmem>>, vector<1x4x8xbf16>
    %63 = vector.shape_cast %62 : vector<1x4x8xbf16> to vector<4x8xbf16>
    %cst_60 = arith.constant dense<0.000000e+00> : vector<128x8xf32>
    %64 = tpu.matmul %61, %63, %cst_60 {dimension_numbers = #tpu.dot_dimension_numbers<[1], [0], [0], [1], [0, 0, 1, 1], [], []>} : vector<128x4xbf16>, vector<4x8xbf16>, vector<128x8xf32> -> vector<128x8xf32>
    %65 = arith.addf %57, %64 : vector<128x8xf32>
    %c0_61 = arith.constant 0 : index
    %c2_62 = arith.constant 2 : index
    %c2_63 = arith.constant 2 : index
    %c0_64 = arith.constant 0 : index
    %66 = vector.load %arg1[%c0_61, %c2_62, %c2_63, %c0_64] : memref<1x18x18x4xf32, #tpu.memory_space<vmem>>, vector<1x8x16x4xf32>
    %67 = vector.shape_cast %66 : vector<1x8x16x4xf32> to vector<8x16x4xf32>
    %68 = vector.shape_cast %67 : vector<8x16x4xf32> to vector<128x4xf32>
    %69 = arith.truncf %68 : vector<128x4xf32> to vector<128x4xbf16>
    %c8 = arith.constant 8 : index
    %c0_65 = arith.constant 0 : index
    %c0_66 = arith.constant 0 : index
    %70 = vector.load %arg2[%c8, %c0_65, %c0_66] : memref<9x4x8xbf16, #tpu.memory_space<vmem>>, vector<1x4x8xbf16>
    %71 = vector.shape_cast %70 : vector<1x4x8xbf16> to vector<4x8xbf16>
    %cst_67 = arith.constant dense<0.000000e+00> : vector<128x8xf32>
    %72 = tpu.matmul %69, %71, %cst_67 {dimension_numbers = #tpu.dot_dimension_numbers<[1], [0], [0], [1], [0, 0, 1, 1], [], []>} : vector<128x4xbf16>, vector<4x8xbf16>, vector<128x8xf32> -> vector<128x8xf32>
    %73 = arith.addf %65, %72 : vector<128x8xf32>
    %74 = vector.broadcast %2 : vector<1x8xf32> to vector<128x8xf32>
    %75 = arith.addf %73, %74 : vector<128x8xf32>
    %cst_68 = arith.constant 0.000000e+00 : f32
    %76 = vector.broadcast %cst_68 : f32 to vector<128x8xf32>
    %77 = arith.maximumf %75, %76 : vector<128x8xf32>
    %78 = vector.shape_cast %77 : vector<128x8xf32> to vector<8x16x8xf32>
    %c1_69 = arith.constant 1 : index
    %c1_70 = arith.constant 1 : index
    %c0_71 = arith.constant 0 : index
    %79 = vector.load %arg11[%c1_69, %c1_70, %c0_71] : memref<18x18x8xf32, #tpu.memory_space<vmem>>, vector<8x16x8xf32>
    tpu.vector_store %arg11[%c1_69, %c1_70, %c0_71], %78 {strides = array<i32>} : memref<18x18x8xf32, #tpu.memory_space<vmem>>, vector<8x16x8xf32>,
    %c0_72 = arith.constant 0 : index
    %c8_73 = arith.constant 8 : index
    %c0_74 = arith.constant 0 : index
    %c0_75 = arith.constant 0 : index
    %80 = vector.load %arg1[%c0_72, %c8_73, %c0_74, %c0_75] : memref<1x18x18x4xf32, #tpu.memory_space<vmem>>, vector<1x8x16x4xf32>
    %81 = vector.shape_cast %80 : vector<1x8x16x4xf32> to vector<8x16x4xf32>
    %82 = vector.shape_cast %81 : vector<8x16x4xf32> to vector<128x4xf32>
    %83 = arith.truncf %82 : vector<128x4xf32> to vector<128x4xbf16>
    %c0_76 = arith.constant 0 : index
    %c0_77 = arith.constant 0 : index
    %c0_78 = arith.constant 0 : index
    %84 = vector.load %arg2[%c0_76, %c0_77, %c0_78] : memref<9x4x8xbf16, #tpu.memory_space<vmem>>, vector<1x4x8xbf16>
    %85 = vector.shape_cast %84 : vector<1x4x8xbf16> to vector<4x8xbf16>
    %cst_79 = arith.constant dense<0.000000e+00> : vector<128x8xf32>
    %86 = tpu.matmul %83, %85, %cst_79 {dimension_numbers = #tpu.dot_dimension_numbers<[1], [0], [0], [1], [0, 0, 1, 1], [], []>} : vector<128x4xbf16>, vector<4x8xbf16>, vector<128x8xf32> -> vector<128x8xf32>
    %c0_80 = arith.constant 0 : index
    %c8_81 = arith.constant 8 : index
    %c1_82 = arith.constant 1 : index
    %c0_83 = arith.constant 0 : index
    %87 = vector.load %arg1[%c0_80, %c8_81, %c1_82, %c0_83] : memref<1x18x18x4xf32, #tpu.memory_space<vmem>>, vector<1x8x16x4xf32>
    %88 = vector.shape_cast %87 : vector<1x8x16x4xf32> to vector<8x16x4xf32>
    %89 = vector.shape_cast %88 : vector<8x16x4xf32> to vector<128x4xf32>
    %90 = arith.truncf %89 : vector<128x4xf32> to vector<128x4xbf16>
    %c1_84 = arith.constant 1 : index
    %c0_85 = arith.constant 0 : index
    %c0_86 = arith.constant 0 : index
    %91 = vector.load %arg2[%c1_84, %c0_85, %c0_86] : memref<9x4x8xbf16, #tpu.memory_space<vmem>>, vector<1x4x8xbf16>
    %92 = vector.shape_cast %91 : vector<1x4x8xbf16> to vector<4x8xbf16>
    %cst_87 = arith.constant dense<0.000000e+00> : vector<128x8xf32>
    %93 = tpu.matmul %90, %92, %cst_87 {dimension_numbers = #tpu.dot_dimension_numbers<[1], [0], [0], [1], [0, 0, 1, 1], [], []>} : vector<128x4xbf16>, vector<4x8xbf16>, vector<128x8xf32> -> vector<128x8xf32>
    %94 = arith.addf %86, %93 : vector<128x8xf32>
    %c0_88 = arith.constant 0 : index
    %c8_89 = arith.constant 8 : index
    %c2_90 = arith.constant 2 : index
    %c0_91 = arith.constant 0 : index
    %95 = vector.load %arg1[%c0_88, %c8_89, %c2_90, %c0_91] : memref<1x18x18x4xf32, #tpu.memory_space<vmem>>, vector<1x8x16x4xf32>
    %96 = vector.shape_cast %95 : vector<1x8x16x4xf32> to vector<8x16x4xf32>
    %97 = vector.shape_cast %96 : vector<8x16x4xf32> to vector<128x4xf32>
    %98 = arith.truncf %97 : vector<128x4xf32> to vector<128x4xbf16>
    %c2_92 = arith.constant 2 : index
    %c0_93 = arith.constant 0 : index
    %c0_94 = arith.constant 0 : index
    %99 = vector.load %arg2[%c2_92, %c0_93, %c0_94] : memref<9x4x8xbf16, #tpu.memory_space<vmem>>, vector<1x4x8xbf16>
    %100 = vector.shape_cast %99 : vector<1x4x8xbf16> to vector<4x8xbf16>
    %cst_95 = arith.constant dense<0.000000e+00> : vector<128x8xf32>
    %101 = tpu.matmul %98, %100, %cst_95 {dimension_numbers = #tpu.dot_dimension_numbers<[1], [0], [0], [1], [0, 0, 1, 1], [], []>} : vector<128x4xbf16>, vector<4x8xbf16>, vector<128x8xf32> -> vector<128x8xf32>
    %102 = arith.addf %94, %101 : vector<128x8xf32>
    %c0_96 = arith.constant 0 : index
    %c9 = arith.constant 9 : index
    %c0_97 = arith.constant 0 : index
    %c0_98 = arith.constant 0 : index
    %103 = vector.load %arg1[%c0_96, %c9, %c0_97, %c0_98] : memref<1x18x18x4xf32, #tpu.memory_space<vmem>>, vector<1x8x16x4xf32>
    %104 = vector.shape_cast %103 : vector<1x8x16x4xf32> to vector<8x16x4xf32>
    %105 = vector.shape_cast %104 : vector<8x16x4xf32> to vector<128x4xf32>
    %106 = arith.truncf %105 : vector<128x4xf32> to vector<128x4xbf16>
    %c3_99 = arith.constant 3 : index
    %c0_100 = arith.constant 0 : index
    %c0_101 = arith.constant 0 : index
    %107 = vector.load %arg2[%c3_99, %c0_100, %c0_101] : memref<9x4x8xbf16, #tpu.memory_space<vmem>>, vector<1x4x8xbf16>
    %108 = vector.shape_cast %107 : vector<1x4x8xbf16> to vector<4x8xbf16>
    %cst_102 = arith.constant dense<0.000000e+00> : vector<128x8xf32>
    %109 = tpu.matmul %106, %108, %cst_102 {dimension_numbers = #tpu.dot_dimension_numbers<[1], [0], [0], [1], [0, 0, 1, 1], [], []>} : vector<128x4xbf16>, vector<4x8xbf16>, vector<128x8xf32> -> vector<128x8xf32>
    %110 = arith.addf %102, %109 : vector<128x8xf32>
    %c0_103 = arith.constant 0 : index
    %c9_104 = arith.constant 9 : index
    %c1_105 = arith.constant 1 : index
    %c0_106 = arith.constant 0 : index
    %111 = vector.load %arg1[%c0_103, %c9_104, %c1_105, %c0_106] : memref<1x18x18x4xf32, #tpu.memory_space<vmem>>, vector<1x8x16x4xf32>
    %112 = vector.shape_cast %111 : vector<1x8x16x4xf32> to vector<8x16x4xf32>
    %113 = vector.shape_cast %112 : vector<8x16x4xf32> to vector<128x4xf32>
    %114 = arith.truncf %113 : vector<128x4xf32> to vector<128x4xbf16>
    %c4_107 = arith.constant 4 : index
    %c0_108 = arith.constant 0 : index
    %c0_109 = arith.constant 0 : index
    %115 = vector.load %arg2[%c4_107, %c0_108, %c0_109] : memref<9x4x8xbf16, #tpu.memory_space<vmem>>, vector<1x4x8xbf16>
    %116 = vector.shape_cast %115 : vector<1x4x8xbf16> to vector<4x8xbf16>
    %cst_110 = arith.constant dense<0.000000e+00> : vector<128x8xf32>
    %117 = tpu.matmul %114, %116, %cst_110 {dimension_numbers = #tpu.dot_dimension_numbers<[1], [0], [0], [1], [0, 0, 1, 1], [], []>} : vector<128x4xbf16>, vector<4x8xbf16>, vector<128x8xf32> -> vector<128x8xf32>
    %118 = arith.addf %110, %117 : vector<128x8xf32>
    %c0_111 = arith.constant 0 : index
    %c9_112 = arith.constant 9 : index
    %c2_113 = arith.constant 2 : index
    %c0_114 = arith.constant 0 : index
    %119 = vector.load %arg1[%c0_111, %c9_112, %c2_113, %c0_114] : memref<1x18x18x4xf32, #tpu.memory_space<vmem>>, vector<1x8x16x4xf32>
    %120 = vector.shape_cast %119 : vector<1x8x16x4xf32> to vector<8x16x4xf32>
    %121 = vector.shape_cast %120 : vector<8x16x4xf32> to vector<128x4xf32>
    %122 = arith.truncf %121 : vector<128x4xf32> to vector<128x4xbf16>
    %c5_115 = arith.constant 5 : index
    %c0_116 = arith.constant 0 : index
    %c0_117 = arith.constant 0 : index
    %123 = vector.load %arg2[%c5_115, %c0_116, %c0_117] : memref<9x4x8xbf16, #tpu.memory_space<vmem>>, vector<1x4x8xbf16>
    %124 = vector.shape_cast %123 : vector<1x4x8xbf16> to vector<4x8xbf16>
    %cst_118 = arith.constant dense<0.000000e+00> : vector<128x8xf32>
    %125 = tpu.matmul %122, %124, %cst_118 {dimension_numbers = #tpu.dot_dimension_numbers<[1], [0], [0], [1], [0, 0, 1, 1], [], []>} : vector<128x4xbf16>, vector<4x8xbf16>, vector<128x8xf32> -> vector<128x8xf32>
    %126 = arith.addf %118, %125 : vector<128x8xf32>
    %c0_119 = arith.constant 0 : index
    %c10 = arith.constant 10 : index
    %c0_120 = arith.constant 0 : index
    %c0_121 = arith.constant 0 : index
    %127 = vector.load %arg1[%c0_119, %c10, %c0_120, %c0_121] : memref<1x18x18x4xf32, #tpu.memory_space<vmem>>, vector<1x8x16x4xf32>
    %128 = vector.shape_cast %127 : vector<1x8x16x4xf32> to vector<8x16x4xf32>
    %129 = vector.shape_cast %128 : vector<8x16x4xf32> to vector<128x4xf32>
    %130 = arith.truncf %129 : vector<128x4xf32> to vector<128x4xbf16>
    %c6_122 = arith.constant 6 : index
    %c0_123 = arith.constant 0 : index
    %c0_124 = arith.constant 0 : index
    %131 = vector.load %arg2[%c6_122, %c0_123, %c0_124] : memref<9x4x8xbf16, #tpu.memory_space<vmem>>, vector<1x4x8xbf16>
    %132 = vector.shape_cast %131 : vector<1x4x8xbf16> to vector<4x8xbf16>
    %cst_125 = arith.constant dense<0.000000e+00> : vector<128x8xf32>
    %133 = tpu.matmul %130, %132, %cst_125 {dimension_numbers = #tpu.dot_dimension_numbers<[1], [0], [0], [1], [0, 0, 1, 1], [], []>} : vector<128x4xbf16>, vector<4x8xbf16>, vector<128x8xf32> -> vector<128x8xf32>
    %134 = arith.addf %126, %133 : vector<128x8xf32>
    %c0_126 = arith.constant 0 : index
    %c10_127 = arith.constant 10 : index
    %c1_128 = arith.constant 1 : index
    %c0_129 = arith.constant 0 : index
    %135 = vector.load %arg1[%c0_126, %c10_127, %c1_128, %c0_129] : memref<1x18x18x4xf32, #tpu.memory_space<vmem>>, vector<1x8x16x4xf32>
    %136 = vector.shape_cast %135 : vector<1x8x16x4xf32> to vector<8x16x4xf32>
    %137 = vector.shape_cast %136 : vector<8x16x4xf32> to vector<128x4xf32>
    %138 = arith.truncf %137 : vector<128x4xf32> to vector<128x4xbf16>
    %c7_130 = arith.constant 7 : index
    %c0_131 = arith.constant 0 : index
    %c0_132 = arith.constant 0 : index
    %139 = vector.load %arg2[%c7_130, %c0_131, %c0_132] : memref<9x4x8xbf16, #tpu.memory_space<vmem>>, vector<1x4x8xbf16>
    %140 = vector.shape_cast %139 : vector<1x4x8xbf16> to vector<4x8xbf16>
    %cst_133 = arith.constant dense<0.000000e+00> : vector<128x8xf32>
    %141 = tpu.matmul %138, %140, %cst_133 {dimension_numbers = #tpu.dot_dimension_numbers<[1], [0], [0], [1], [0, 0, 1, 1], [], []>} : vector<128x4xbf16>, vector<4x8xbf16>, vector<128x8xf32> -> vector<128x8xf32>
    %142 = arith.addf %134, %141 : vector<128x8xf32>
    %c0_134 = arith.constant 0 : index
    %c10_135 = arith.constant 10 : index
    %c2_136 = arith.constant 2 : index
    %c0_137 = arith.constant 0 : index
    %143 = vector.load %arg1[%c0_134, %c10_135, %c2_136, %c0_137] : memref<1x18x18x4xf32, #tpu.memory_space<vmem>>, vector<1x8x16x4xf32>
    %144 = vector.shape_cast %143 : vector<1x8x16x4xf32> to vector<8x16x4xf32>
    %145 = vector.shape_cast %144 : vector<8x16x4xf32> to vector<128x4xf32>
    %146 = arith.truncf %145 : vector<128x4xf32> to vector<128x4xbf16>
    %c8_138 = arith.constant 8 : index
    %c0_139 = arith.constant 0 : index
    %c0_140 = arith.constant 0 : index
    %147 = vector.load %arg2[%c8_138, %c0_139, %c0_140] : memref<9x4x8xbf16, #tpu.memory_space<vmem>>, vector<1x4x8xbf16>
    %148 = vector.shape_cast %147 : vector<1x4x8xbf16> to vector<4x8xbf16>
    %cst_141 = arith.constant dense<0.000000e+00> : vector<128x8xf32>
    %149 = tpu.matmul %146, %148, %cst_141 {dimension_numbers = #tpu.dot_dimension_numbers<[1], [0], [0], [1], [0, 0, 1, 1], [], []>} : vector<128x4xbf16>, vector<4x8xbf16>, vector<128x8xf32> -> vector<128x8xf32>
    %150 = arith.addf %142, %149 : vector<128x8xf32>
    %151 = vector.broadcast %2 : vector<1x8xf32> to vector<128x8xf32>
    %152 = arith.addf %150, %151 : vector<128x8xf32>
    %cst_142 = arith.constant 0.000000e+00 : f32
    %153 = vector.broadcast %cst_142 : f32 to vector<128x8xf32>
    %154 = arith.maximumf %152, %153 : vector<128x8xf32>
    %155 = vector.shape_cast %154 : vector<128x8xf32> to vector<8x16x8xf32>
    %c9_143 = arith.constant 9 : index
    %c1_144 = arith.constant 1 : index
    %c0_145 = arith.constant 0 : index
    %156 = vector.load %arg11[%c9_143, %c1_144, %c0_145] : memref<18x18x8xf32, #tpu.memory_space<vmem>>, vector<8x16x8xf32>
    tpu.vector_store %arg11[%c9_143, %c1_144, %c0_145], %155 {strides = array<i32>} : memref<18x18x8xf32, #tpu.memory_space<vmem>>, vector<8x16x8xf32>,
    %c0_146 = arith.constant 0 : index
    %c0_147 = arith.constant 0 : index
    %157 = vector.load %arg5[%c0_146, %c0_147] : memref<1x128xf32, #tpu.memory_space<vmem>>, vector<1x128xf32>
    %cst_148 = arith.constant 0.000000e+00 : f32
    %158 = vector.broadcast %cst_148 : f32 to vector<1x128xf32>
    %c0_149 = arith.constant 0 : index
    %c0_150 = arith.constant 0 : index
    %c0_151 = arith.constant 0 : index
    %159 = vector.load %arg11[%c0_149, %c0_150, %c0_151] : memref<18x18x8xf32, #tpu.memory_space<vmem>>, vector<8x16x8xf32>
    %160 = vector.shape_cast %159 : vector<8x16x8xf32> to vector<128x8xf32>
    %161 = arith.truncf %160 : vector<128x8xf32> to vector<128x8xbf16>
    %c0_152 = arith.constant 0 : index
    %c0_153 = arith.constant 0 : index
    %c0_154 = arith.constant 0 : index
    %162 = vector.load %arg4[%c0_152, %c0_153, %c0_154] : memref<9x8x128xbf16, #tpu.memory_space<vmem>>, vector<1x8x128xbf16>
    %163 = vector.shape_cast %162 : vector<1x8x128xbf16> to vector<8x128xbf16>
    %cst_155 = arith.constant dense<0.000000e+00> : vector<128x128xf32>
    %164 = tpu.matmul %161, %163, %cst_155 {dimension_numbers = #tpu.dot_dimension_numbers<[1], [0], [0], [1], [0, 0, 1, 1], [], []>} : vector<128x8xbf16>, vector<8x128xbf16>, vector<128x128xf32> -> vector<128x128xf32>
    %c0_156 = arith.constant 0 : index
    %c1_157 = arith.constant 1 : index
    %c0_158 = arith.constant 0 : index
    %165 = vector.load %arg11[%c0_156, %c1_157, %c0_158] : memref<18x18x8xf32, #tpu.memory_space<vmem>>, vector<8x16x8xf32>
    %166 = vector.shape_cast %165 : vector<8x16x8xf32> to vector<128x8xf32>
    %167 = arith.truncf %166 : vector<128x8xf32> to vector<128x8xbf16>
    %c1_159 = arith.constant 1 : index
    %c0_160 = arith.constant 0 : index
    %c0_161 = arith.constant 0 : index
    %168 = vector.load %arg4[%c1_159, %c0_160, %c0_161] : memref<9x8x128xbf16, #tpu.memory_space<vmem>>, vector<1x8x128xbf16>
    %169 = vector.shape_cast %168 : vector<1x8x128xbf16> to vector<8x128xbf16>
    %cst_162 = arith.constant dense<0.000000e+00> : vector<128x128xf32>
    %170 = tpu.matmul %167, %169, %cst_162 {dimension_numbers = #tpu.dot_dimension_numbers<[1], [0], [0], [1], [0, 0, 1, 1], [], []>} : vector<128x8xbf16>, vector<8x128xbf16>, vector<128x128xf32> -> vector<128x128xf32>
    %171 = arith.addf %164, %170 : vector<128x128xf32>
    %c0_163 = arith.constant 0 : index
    %c2_164 = arith.constant 2 : index
    %c0_165 = arith.constant 0 : index
    %172 = vector.load %arg11[%c0_163, %c2_164, %c0_165] : memref<18x18x8xf32, #tpu.memory_space<vmem>>, vector<8x16x8xf32>
    %173 = vector.shape_cast %172 : vector<8x16x8xf32> to vector<128x8xf32>
    %174 = arith.truncf %173 : vector<128x8xf32> to vector<128x8xbf16>
    %c2_166 = arith.constant 2 : index
    %c0_167 = arith.constant 0 : index
    %c0_168 = arith.constant 0 : index
    %175 = vector.load %arg4[%c2_166, %c0_167, %c0_168] : memref<9x8x128xbf16, #tpu.memory_space<vmem>>, vector<1x8x128xbf16>
    %176 = vector.shape_cast %175 : vector<1x8x128xbf16> to vector<8x128xbf16>
    %cst_169 = arith.constant dense<0.000000e+00> : vector<128x128xf32>
    %177 = tpu.matmul %174, %176, %cst_169 {dimension_numbers = #tpu.dot_dimension_numbers<[1], [0], [0], [1], [0, 0, 1, 1], [], []>} : vector<128x8xbf16>, vector<8x128xbf16>, vector<128x128xf32> -> vector<128x128xf32>
    %178 = arith.addf %171, %177 : vector<128x128xf32>
    %c1_170 = arith.constant 1 : index
    %c0_171 = arith.constant 0 : index
    %c0_172 = arith.constant 0 : index
    %179 = vector.load %arg11[%c1_170, %c0_171, %c0_172] : memref<18x18x8xf32, #tpu.memory_space<vmem>>, vector<8x16x8xf32>
    %180 = vector.shape_cast %179 : vector<8x16x8xf32> to vector<128x8xf32>
    %181 = arith.truncf %180 : vector<128x8xf32> to vector<128x8xbf16>
    %c3_173 = arith.constant 3 : index
    %c0_174 = arith.constant 0 : index
    %c0_175 = arith.constant 0 : index
    %182 = vector.load %arg4[%c3_173, %c0_174, %c0_175] : memref<9x8x128xbf16, #tpu.memory_space<vmem>>, vector<1x8x128xbf16>
    %183 = vector.shape_cast %182 : vector<1x8x128xbf16> to vector<8x128xbf16>
    %cst_176 = arith.constant dense<0.000000e+00> : vector<128x128xf32>
    %184 = tpu.matmul %181, %183, %cst_176 {dimension_numbers = #tpu.dot_dimension_numbers<[1], [0], [0], [1], [0, 0, 1, 1], [], []>} : vector<128x8xbf16>, vector<8x128xbf16>, vector<128x128xf32> -> vector<128x128xf32>
    %185 = arith.addf %178, %184 : vector<128x128xf32>
    %c1_177 = arith.constant 1 : index
    %c1_178 = arith.constant 1 : index
    %c0_179 = arith.constant 0 : index
    %186 = vector.load %arg11[%c1_177, %c1_178, %c0_179] : memref<18x18x8xf32, #tpu.memory_space<vmem>>, vector<8x16x8xf32>
    %187 = vector.shape_cast %186 : vector<8x16x8xf32> to vector<128x8xf32>
    %188 = arith.truncf %187 : vector<128x8xf32> to vector<128x8xbf16>
    %c4_180 = arith.constant 4 : index
    %c0_181 = arith.constant 0 : index
    %c0_182 = arith.constant 0 : index
    %189 = vector.load %arg4[%c4_180, %c0_181, %c0_182] : memref<9x8x128xbf16, #tpu.memory_space<vmem>>, vector<1x8x128xbf16>
    %190 = vector.shape_cast %189 : vector<1x8x128xbf16> to vector<8x128xbf16>
    %cst_183 = arith.constant dense<0.000000e+00> : vector<128x128xf32>
    %191 = tpu.matmul %188, %190, %cst_183 {dimension_numbers = #tpu.dot_dimension_numbers<[1], [0], [0], [1], [0, 0, 1, 1], [], []>} : vector<128x8xbf16>, vector<8x128xbf16>, vector<128x128xf32> -> vector<128x128xf32>
    %192 = arith.addf %185, %191 : vector<128x128xf32>
    %c1_184 = arith.constant 1 : index
    %c2_185 = arith.constant 2 : index
    %c0_186 = arith.constant 0 : index
    %193 = vector.load %arg11[%c1_184, %c2_185, %c0_186] : memref<18x18x8xf32, #tpu.memory_space<vmem>>, vector<8x16x8xf32>
    %194 = vector.shape_cast %193 : vector<8x16x8xf32> to vector<128x8xf32>
    %195 = arith.truncf %194 : vector<128x8xf32> to vector<128x8xbf16>
    %c5_187 = arith.constant 5 : index
    %c0_188 = arith.constant 0 : index
    %c0_189 = arith.constant 0 : index
    %196 = vector.load %arg4[%c5_187, %c0_188, %c0_189] : memref<9x8x128xbf16, #tpu.memory_space<vmem>>, vector<1x8x128xbf16>
    %197 = vector.shape_cast %196 : vector<1x8x128xbf16> to vector<8x128xbf16>
    %cst_190 = arith.constant dense<0.000000e+00> : vector<128x128xf32>
    %198 = tpu.matmul %195, %197, %cst_190 {dimension_numbers = #tpu.dot_dimension_numbers<[1], [0], [0], [1], [0, 0, 1, 1], [], []>} : vector<128x8xbf16>, vector<8x128xbf16>, vector<128x128xf32> -> vector<128x128xf32>
    %199 = arith.addf %192, %198 : vector<128x128xf32>
    %c2_191 = arith.constant 2 : index
    %c0_192 = arith.constant 0 : index
    %c0_193 = arith.constant 0 : index
    %200 = vector.load %arg11[%c2_191, %c0_192, %c0_193] : memref<18x18x8xf32, #tpu.memory_space<vmem>>, vector<8x16x8xf32>
    %201 = vector.shape_cast %200 : vector<8x16x8xf32> to vector<128x8xf32>
    %202 = arith.truncf %201 : vector<128x8xf32> to vector<128x8xbf16>
    %c6_194 = arith.constant 6 : index
    %c0_195 = arith.constant 0 : index
    %c0_196 = arith.constant 0 : index
    %203 = vector.load %arg4[%c6_194, %c0_195, %c0_196] : memref<9x8x128xbf16, #tpu.memory_space<vmem>>, vector<1x8x128xbf16>
    %204 = vector.shape_cast %203 : vector<1x8x128xbf16> to vector<8x128xbf16>
    %cst_197 = arith.constant dense<0.000000e+00> : vector<128x128xf32>
    %205 = tpu.matmul %202, %204, %cst_197 {dimension_numbers = #tpu.dot_dimension_numbers<[1], [0], [0], [1], [0, 0, 1, 1], [], []>} : vector<128x8xbf16>, vector<8x128xbf16>, vector<128x128xf32> -> vector<128x128xf32>
    %206 = arith.addf %199, %205 : vector<128x128xf32>
    %c2_198 = arith.constant 2 : index
    %c1_199 = arith.constant 1 : index
    %c0_200 = arith.constant 0 : index
    %207 = vector.load %arg11[%c2_198, %c1_199, %c0_200] : memref<18x18x8xf32, #tpu.memory_space<vmem>>, vector<8x16x8xf32>
    %208 = vector.shape_cast %207 : vector<8x16x8xf32> to vector<128x8xf32>
    %209 = arith.truncf %208 : vector<128x8xf32> to vector<128x8xbf16>
    %c7_201 = arith.constant 7 : index
    %c0_202 = arith.constant 0 : index
    %c0_203 = arith.constant 0 : index
    %210 = vector.load %arg4[%c7_201, %c0_202, %c0_203] : memref<9x8x128xbf16, #tpu.memory_space<vmem>>, vector<1x8x128xbf16>
    %211 = vector.shape_cast %210 : vector<1x8x128xbf16> to vector<8x128xbf16>
    %cst_204 = arith.constant dense<0.000000e+00> : vector<128x128xf32>
    %212 = tpu.matmul %209, %211, %cst_204 {dimension_numbers = #tpu.dot_dimension_numbers<[1], [0], [0], [1], [0, 0, 1, 1], [], []>} : vector<128x8xbf16>, vector<8x128xbf16>, vector<128x128xf32> -> vector<128x128xf32>
    %213 = arith.addf %206, %212 : vector<128x128xf32>
    %c2_205 = arith.constant 2 : index
    %c2_206 = arith.constant 2 : index
    %c0_207 = arith.constant 0 : index
    %214 = vector.load %arg11[%c2_205, %c2_206, %c0_207] : memref<18x18x8xf32, #tpu.memory_space<vmem>>, vector<8x16x8xf32>
    %215 = vector.shape_cast %214 : vector<8x16x8xf32> to vector<128x8xf32>
    %216 = arith.truncf %215 : vector<128x8xf32> to vector<128x8xbf16>
    %c8_208 = arith.constant 8 : index
    %c0_209 = arith.constant 0 : index
    %c0_210 = arith.constant 0 : index
    %217 = vector.load %arg4[%c8_208, %c0_209, %c0_210] : memref<9x8x128xbf16, #tpu.memory_space<vmem>>, vector<1x8x128xbf16>
    %218 = vector.shape_cast %217 : vector<1x8x128xbf16> to vector<8x128xbf16>
    %cst_211 = arith.constant dense<0.000000e+00> : vector<128x128xf32>
    %219 = tpu.matmul %216, %218, %cst_211 {dimension_numbers = #tpu.dot_dimension_numbers<[1], [0], [0], [1], [0, 0, 1, 1], [], []>} : vector<128x8xbf16>, vector<8x128xbf16>, vector<128x128xf32> -> vector<128x128xf32>
    %220 = arith.addf %213, %219 : vector<128x128xf32>
    %221 = vector.broadcast %157 : vector<1x128xf32> to vector<128x128xf32>
    %222 = arith.addf %220, %221 : vector<128x128xf32>
    %cst_212 = arith.constant 0.000000e+00 : f32
    %223 = vector.broadcast %cst_212 : f32 to vector<128x128xf32>
    %224 = arith.maximumf %222, %223 : vector<128x128xf32>
    %cst_213 = arith.constant dense<0.000000e+00> : vector<128xf32>
    %225 = vector.multi_reduction <add>, %224, %cst_213 [0] : vector<128x128xf32> to vector<128xf32>
    %226 = vector.shape_cast %225 : vector<128xf32> to vector<1x128xf32>
    %227 = arith.addf %158, %226 : vector<1x128xf32>
    %c8_214 = arith.constant 8 : index
    %c0_215 = arith.constant 0 : index
    %c0_216 = arith.constant 0 : index
    %228 = vector.load %arg11[%c8_214, %c0_215, %c0_216] : memref<18x18x8xf32, #tpu.memory_space<vmem>>, vector<8x16x8xf32>
    %229 = vector.shape_cast %228 : vector<8x16x8xf32> to vector<128x8xf32>
    %230 = arith.truncf %229 : vector<128x8xf32> to vector<128x8xbf16>
    %c0_217 = arith.constant 0 : index
    %c0_218 = arith.constant 0 : index
    %c0_219 = arith.constant 0 : index
    %231 = vector.load %arg4[%c0_217, %c0_218, %c0_219] : memref<9x8x128xbf16, #tpu.memory_space<vmem>>, vector<1x8x128xbf16>
    %232 = vector.shape_cast %231 : vector<1x8x128xbf16> to vector<8x128xbf16>
    %cst_220 = arith.constant dense<0.000000e+00> : vector<128x128xf32>
    %233 = tpu.matmul %230, %232, %cst_220 {dimension_numbers = #tpu.dot_dimension_numbers<[1], [0], [0], [1], [0, 0, 1, 1], [], []>} : vector<128x8xbf16>, vector<8x128xbf16>, vector<128x128xf32> -> vector<128x128xf32>
    %c8_221 = arith.constant 8 : index
    %c1_222 = arith.constant 1 : index
    %c0_223 = arith.constant 0 : index
    %234 = vector.load %arg11[%c8_221, %c1_222, %c0_223] : memref<18x18x8xf32, #tpu.memory_space<vmem>>, vector<8x16x8xf32>
    %235 = vector.shape_cast %234 : vector<8x16x8xf32> to vector<128x8xf32>
    %236 = arith.truncf %235 : vector<128x8xf32> to vector<128x8xbf16>
    %c1_224 = arith.constant 1 : index
    %c0_225 = arith.constant 0 : index
    %c0_226 = arith.constant 0 : index
    %237 = vector.load %arg4[%c1_224, %c0_225, %c0_226] : memref<9x8x128xbf16, #tpu.memory_space<vmem>>, vector<1x8x128xbf16>
    %238 = vector.shape_cast %237 : vector<1x8x128xbf16> to vector<8x128xbf16>
    %cst_227 = arith.constant dense<0.000000e+00> : vector<128x128xf32>
    %239 = tpu.matmul %236, %238, %cst_227 {dimension_numbers = #tpu.dot_dimension_numbers<[1], [0], [0], [1], [0, 0, 1, 1], [], []>} : vector<128x8xbf16>, vector<8x128xbf16>, vector<128x128xf32> -> vector<128x128xf32>
    %240 = arith.addf %233, %239 : vector<128x128xf32>
    %c8_228 = arith.constant 8 : index
    %c2_229 = arith.constant 2 : index
    %c0_230 = arith.constant 0 : index
    %241 = vector.load %arg11[%c8_228, %c2_229, %c0_230] : memref<18x18x8xf32, #tpu.memory_space<vmem>>, vector<8x16x8xf32>
    %242 = vector.shape_cast %241 : vector<8x16x8xf32> to vector<128x8xf32>
    %243 = arith.truncf %242 : vector<128x8xf32> to vector<128x8xbf16>
    %c2_231 = arith.constant 2 : index
    %c0_232 = arith.constant 0 : index
    %c0_233 = arith.constant 0 : index
    %244 = vector.load %arg4[%c2_231, %c0_232, %c0_233] : memref<9x8x128xbf16, #tpu.memory_space<vmem>>, vector<1x8x128xbf16>
    %245 = vector.shape_cast %244 : vector<1x8x128xbf16> to vector<8x128xbf16>
    %cst_234 = arith.constant dense<0.000000e+00> : vector<128x128xf32>
    %246 = tpu.matmul %243, %245, %cst_234 {dimension_numbers = #tpu.dot_dimension_numbers<[1], [0], [0], [1], [0, 0, 1, 1], [], []>} : vector<128x8xbf16>, vector<8x128xbf16>, vector<128x128xf32> -> vector<128x128xf32>
    %247 = arith.addf %240, %246 : vector<128x128xf32>
    %c9_235 = arith.constant 9 : index
    %c0_236 = arith.constant 0 : index
    %c0_237 = arith.constant 0 : index
    %248 = vector.load %arg11[%c9_235, %c0_236, %c0_237] : memref<18x18x8xf32, #tpu.memory_space<vmem>>, vector<8x16x8xf32>
    %249 = vector.shape_cast %248 : vector<8x16x8xf32> to vector<128x8xf32>
    %250 = arith.truncf %249 : vector<128x8xf32> to vector<128x8xbf16>
    %c3_238 = arith.constant 3 : index
    %c0_239 = arith.constant 0 : index
    %c0_240 = arith.constant 0 : index
    %251 = vector.load %arg4[%c3_238, %c0_239, %c0_240] : memref<9x8x128xbf16, #tpu.memory_space<vmem>>, vector<1x8x128xbf16>
    %252 = vector.shape_cast %251 : vector<1x8x128xbf16> to vector<8x128xbf16>
    %cst_241 = arith.constant dense<0.000000e+00> : vector<128x128xf32>
    %253 = tpu.matmul %250, %252, %cst_241 {dimension_numbers = #tpu.dot_dimension_numbers<[1], [0], [0], [1], [0, 0, 1, 1], [], []>} : vector<128x8xbf16>, vector<8x128xbf16>, vector<128x128xf32> -> vector<128x128xf32>
    %254 = arith.addf %247, %253 : vector<128x128xf32>
    %c9_242 = arith.constant 9 : index
    %c1_243 = arith.constant 1 : index
    %c0_244 = arith.constant 0 : index
    %255 = vector.load %arg11[%c9_242, %c1_243, %c0_244] : memref<18x18x8xf32, #tpu.memory_space<vmem>>, vector<8x16x8xf32>
    %256 = vector.shape_cast %255 : vector<8x16x8xf32> to vector<128x8xf32>
    %257 = arith.truncf %256 : vector<128x8xf32> to vector<128x8xbf16>
    %c4_245 = arith.constant 4 : index
    %c0_246 = arith.constant 0 : index
    %c0_247 = arith.constant 0 : index
    %258 = vector.load %arg4[%c4_245, %c0_246, %c0_247] : memref<9x8x128xbf16, #tpu.memory_space<vmem>>, vector<1x8x128xbf16>
    %259 = vector.shape_cast %258 : vector<1x8x128xbf16> to vector<8x128xbf16>
    %cst_248 = arith.constant dense<0.000000e+00> : vector<128x128xf32>
    %260 = tpu.matmul %257, %259, %cst_248 {dimension_numbers = #tpu.dot_dimension_numbers<[1], [0], [0], [1], [0, 0, 1, 1], [], []>} : vector<128x8xbf16>, vector<8x128xbf16>, vector<128x128xf32> -> vector<128x128xf32>
    %261 = arith.addf %254, %260 : vector<128x128xf32>
    %c9_249 = arith.constant 9 : index
    %c2_250 = arith.constant 2 : index
    %c0_251 = arith.constant 0 : index
    %262 = vector.load %arg11[%c9_249, %c2_250, %c0_251] : memref<18x18x8xf32, #tpu.memory_space<vmem>>, vector<8x16x8xf32>
    %263 = vector.shape_cast %262 : vector<8x16x8xf32> to vector<128x8xf32>
    %264 = arith.truncf %263 : vector<128x8xf32> to vector<128x8xbf16>
    %c5_252 = arith.constant 5 : index
    %c0_253 = arith.constant 0 : index
    %c0_254 = arith.constant 0 : index
    %265 = vector.load %arg4[%c5_252, %c0_253, %c0_254] : memref<9x8x128xbf16, #tpu.memory_space<vmem>>, vector<1x8x128xbf16>
    %266 = vector.shape_cast %265 : vector<1x8x128xbf16> to vector<8x128xbf16>
    %cst_255 = arith.constant dense<0.000000e+00> : vector<128x128xf32>
    %267 = tpu.matmul %264, %266, %cst_255 {dimension_numbers = #tpu.dot_dimension_numbers<[1], [0], [0], [1], [0, 0, 1, 1], [], []>} : vector<128x8xbf16>, vector<8x128xbf16>, vector<128x128xf32> -> vector<128x128xf32>
    %268 = arith.addf %261, %267 : vector<128x128xf32>
    %c10_256 = arith.constant 10 : index
    %c0_257 = arith.constant 0 : index
    %c0_258 = arith.constant 0 : index
    %269 = vector.load %arg11[%c10_256, %c0_257, %c0_258] : memref<18x18x8xf32, #tpu.memory_space<vmem>>, vector<8x16x8xf32>
    %270 = vector.shape_cast %269 : vector<8x16x8xf32> to vector<128x8xf32>
    %271 = arith.truncf %270 : vector<128x8xf32> to vector<128x8xbf16>
    %c6_259 = arith.constant 6 : index
    %c0_260 = arith.constant 0 : index
    %c0_261 = arith.constant 0 : index
    %272 = vector.load %arg4[%c6_259, %c0_260, %c0_261] : memref<9x8x128xbf16, #tpu.memory_space<vmem>>, vector<1x8x128xbf16>
    %273 = vector.shape_cast %272 : vector<1x8x128xbf16> to vector<8x128xbf16>
    %cst_262 = arith.constant dense<0.000000e+00> : vector<128x128xf32>
    %274 = tpu.matmul %271, %273, %cst_262 {dimension_numbers = #tpu.dot_dimension_numbers<[1], [0], [0], [1], [0, 0, 1, 1], [], []>} : vector<128x8xbf16>, vector<8x128xbf16>, vector<128x128xf32> -> vector<128x128xf32>
    %275 = arith.addf %268, %274 : vector<128x128xf32>
    %c10_263 = arith.constant 10 : index
    %c1_264 = arith.constant 1 : index
    %c0_265 = arith.constant 0 : index
    %276 = vector.load %arg11[%c10_263, %c1_264, %c0_265] : memref<18x18x8xf32, #tpu.memory_space<vmem>>, vector<8x16x8xf32>
    %277 = vector.shape_cast %276 : vector<8x16x8xf32> to vector<128x8xf32>
    %278 = arith.truncf %277 : vector<128x8xf32> to vector<128x8xbf16>
    %c7_266 = arith.constant 7 : index
    %c0_267 = arith.constant 0 : index
    %c0_268 = arith.constant 0 : index
    %279 = vector.load %arg4[%c7_266, %c0_267, %c0_268] : memref<9x8x128xbf16, #tpu.memory_space<vmem>>, vector<1x8x128xbf16>
    %280 = vector.shape_cast %279 : vector<1x8x128xbf16> to vector<8x128xbf16>
    %cst_269 = arith.constant dense<0.000000e+00> : vector<128x128xf32>
    %281 = tpu.matmul %278, %280, %cst_269 {dimension_numbers = #tpu.dot_dimension_numbers<[1], [0], [0], [1], [0, 0, 1, 1], [], []>} : vector<128x8xbf16>, vector<8x128xbf16>, vector<128x128xf32> -> vector<128x128xf32>
    %282 = arith.addf %275, %281 : vector<128x128xf32>
    %c10_270 = arith.constant 10 : index
    %c2_271 = arith.constant 2 : index
    %c0_272 = arith.constant 0 : index
    %283 = vector.load %arg11[%c10_270, %c2_271, %c0_272] : memref<18x18x8xf32, #tpu.memory_space<vmem>>, vector<8x16x8xf32>
    %284 = vector.shape_cast %283 : vector<8x16x8xf32> to vector<128x8xf32>
    %285 = arith.truncf %284 : vector<128x8xf32> to vector<128x8xbf16>
    %c8_273 = arith.constant 8 : index
    %c0_274 = arith.constant 0 : index
    %c0_275 = arith.constant 0 : index
    %286 = vector.load %arg4[%c8_273, %c0_274, %c0_275] : memref<9x8x128xbf16, #tpu.memory_space<vmem>>, vector<1x8x128xbf16>
    %287 = vector.shape_cast %286 : vector<1x8x128xbf16> to vector<8x128xbf16>
    %cst_276 = arith.constant dense<0.000000e+00> : vector<128x128xf32>
    %288 = tpu.matmul %285, %287, %cst_276 {dimension_numbers = #tpu.dot_dimension_numbers<[1], [0], [0], [1], [0, 0, 1, 1], [], []>} : vector<128x8xbf16>, vector<8x128xbf16>, vector<128x128xf32> -> vector<128x128xf32>
    %289 = arith.addf %282, %288 : vector<128x128xf32>
    %290 = vector.broadcast %157 : vector<1x128xf32> to vector<128x128xf32>
    %291 = arith.addf %289, %290 : vector<128x128xf32>
    %cst_277 = arith.constant 0.000000e+00 : f32
    %292 = vector.broadcast %cst_277 : f32 to vector<128x128xf32>
    %293 = arith.maximumf %291, %292 : vector<128x128xf32>
    %cst_278 = arith.constant dense<0.000000e+00> : vector<128xf32>
    %294 = vector.multi_reduction <add>, %293, %cst_278 [0] : vector<128x128xf32> to vector<128xf32>
    %295 = vector.shape_cast %294 : vector<128xf32> to vector<1x128xf32>
    %296 = arith.addf %227, %295 : vector<1x128xf32>
    %cst_279 = arith.constant 3.906250e-03 : f32
    %297 = vector.broadcast %cst_279 : f32 to vector<1x128xf32>
    %298 = arith.mulf %296, %297 : vector<1x128xf32>
    %299 = vector.extract_strided_slice %298 {offsets = [0, 0], sizes = [1, 16], strides = [1, 1]} : vector<1x128xf32> to vector<1x16xf32>
    %300 = arith.truncf %299 : vector<1x16xf32> to vector<1x16xbf16>
    %c0_280 = arith.constant 0 : index
    %c0_281 = arith.constant 0 : index
    %301 = vector.load %arg6[%c0_280, %c0_281] : memref<16x128xbf16, #tpu.memory_space<vmem>>, vector<16x128xbf16>
    %cst_282 = arith.constant dense<0.000000e+00> : vector<1x128xf32>
    %302 = tpu.matmul %300, %301, %cst_282 {dimension_numbers = #tpu.dot_dimension_numbers<[1], [0], [0], [1], [0, 0, 1, 1], [], []>} : vector<1x16xbf16>, vector<16x128xbf16>, vector<1x128xf32> -> vector<1x128xf32>
    %c0_283 = arith.constant 0 : index
    %c0_284 = arith.constant 0 : index
    %303 = vector.load %arg7[%c0_283, %c0_284] : memref<1x128xf32, #tpu.memory_space<vmem>>, vector<1x128xf32>
    %304 = arith.addf %302, %303 : vector<1x128xf32>
    %cst_285 = arith.constant 0.000000e+00 : f32
    %305 = vector.broadcast %cst_285 : f32 to vector<1x128xf32>
    %306 = arith.maximumf %304, %305 : vector<1x128xf32>
    %307 = vector.extract_strided_slice %306 {offsets = [0, 0], sizes = [1, 32], strides = [1, 1]} : vector<1x128xf32> to vector<1x32xf32>
    %308 = arith.truncf %307 : vector<1x32xf32> to vector<1x32xbf16>
    %c0_286 = arith.constant 0 : index
    %c0_287 = arith.constant 0 : index
    %309 = vector.load %arg8[%c0_286, %c0_287] : memref<32x128xbf16, #tpu.memory_space<vmem>>, vector<32x128xbf16>
    %cst_288 = arith.constant dense<0.000000e+00> : vector<1x128xf32>
    %310 = tpu.matmul %308, %309, %cst_288 {dimension_numbers = #tpu.dot_dimension_numbers<[1], [0], [0], [1], [0, 0, 1, 1], [], []>} : vector<1x32xbf16>, vector<32x128xbf16>, vector<1x128xf32> -> vector<1x128xf32>
    %c0_289 = arith.constant 0 : index
    %c0_290 = arith.constant 0 : index
    %311 = vector.load %arg9[%c0_289, %c0_290] : memref<1x128xf32, #tpu.memory_space<vmem>>, vector<1x128xf32>
    %312 = arith.addf %310, %311 : vector<1x128xf32>
    %313 = vector.shape_cast %312 : vector<1x128xf32> to vector<1x1x128xf32>
    %c0_291 = arith.constant 0 : index
    %c0_292 = arith.constant 0 : index
    %c0_293 = arith.constant 0 : index
    %314 = vector.load %arg10[%c0_291, %c0_292, %c0_293] : memref<1x1x128xf32, #tpu.memory_space<vmem>>, vector<1x1x128xf32>
    tpu.vector_store %arg10[%c0_291, %c0_292, %c0_293], %313 {strides = array<i32>} : memref<1x1x128xf32, #tpu.memory_space<vmem>>, vector<1x1x128xf32>,
    return
  }
  func.func @transform_0(%arg0: i32) -> (i32, i32, i32, i32) {
    %c0_i32 = arith.constant 0 : i32
    %c0_i32_0 = arith.constant 0 : i32
    %c0_i32_1 = arith.constant 0 : i32
    %c0_i32_2 = arith.constant 0 : i32
    return %arg0, %c0_i32, %c0_i32_0, %c0_i32_1 : i32, i32, i32, i32
  }
  func.func @transform_1(%arg0: i32) -> (i32, i32, i32) {
    %c0_i32 = arith.constant 0 : i32
    %c0_i32_0 = arith.constant 0 : i32
    %c0_i32_1 = arith.constant 0 : i32
    %c0_i32_2 = arith.constant 0 : i32
    return %c0_i32, %c0_i32_0, %c0_i32_1 : i32, i32, i32
  }
  func.func @transform_2(%arg0: i32) -> (i32, i32) {
    %c0_i32 = arith.constant 0 : i32
    %c0_i32_0 = arith.constant 0 : i32
    %c0_i32_1 = arith.constant 0 : i32
    return %c0_i32, %c0_i32_0 : i32, i32
  }
  func.func @transform_3(%arg0: i32) -> (i32, i32, i32) {
    %c0_i32 = arith.constant 0 : i32
    %c0_i32_0 = arith.constant 0 : i32
    %c0_i32_1 = arith.constant 0 : i32
    %c0_i32_2 = arith.constant 0 : i32
    return %c0_i32, %c0_i32_0, %c0_i32_1 : i32, i32, i32
  }
  func.func @transform_4(%arg0: i32) -> (i32, i32) {
    %c0_i32 = arith.constant 0 : i32
    %c0_i32_0 = arith.constant 0 : i32
    %c0_i32_1 = arith.constant 0 : i32
    return %c0_i32, %c0_i32_0 : i32, i32
  }
  func.func @transform_5(%arg0: i32) -> (i32, i32) {
    %c0_i32 = arith.constant 0 : i32
    %c0_i32_0 = arith.constant 0 : i32
    %c0_i32_1 = arith.constant 0 : i32
    return %c0_i32, %c0_i32_0 : i32, i32
  }
  func.func @transform_6(%arg0: i32) -> (i32, i32) {
    %c0_i32 = arith.constant 0 : i32
    %c0_i32_0 = arith.constant 0 : i32
    %c0_i32_1 = arith.constant 0 : i32
    return %c0_i32, %c0_i32_0 : i32, i32
  }
  func.func @transform_7(%arg0: i32) -> (i32, i32) {
    %c0_i32 = arith.constant 0 : i32
    %c0_i32_0 = arith.constant 0 : i32
    %c0_i32_1 = arith.constant 0 : i32
    return %c0_i32, %c0_i32_0 : i32, i32
  }
  func.func @transform_8(%arg0: i32) -> (i32, i32) {
    %c0_i32 = arith.constant 0 : i32
    %c0_i32_0 = arith.constant 0 : i32
    %c0_i32_1 = arith.constant 0 : i32
    return %c0_i32, %c0_i32_0 : i32, i32
  }
  func.func @transform_9(%arg0: i32) -> (i32, i32, i32) {
    %c0_i32 = arith.constant 0 : i32
    %c0_i32_0 = arith.constant 0 : i32
    %c0_i32_1 = arith.constant 0 : i32
    return %arg0, %c0_i32, %c0_i32_0 : i32, i32, i32
  }
}

</mosaic_0001>

<llo_original>
// kernel: model_forward.1
$region0: #{model_forward.1}
  #allocation0 [shape = 'u32[]', space=smem, size = 0x4, offset = 0x4, fixed_abs, tag = 'smem constant byte address 0x4 - core index']
  #allocation1 [shape = 'u32[72,128]{1,0:T(1,128)}', space=vmem, size = 0x9000, scoped, tag = 'internal scratch']
  #allocation2 [shape = 'f32[18,18,8]{2,1,0:T(8,128)}', space=vmem, size = 0x36000, scoped, tag = 'scratch operand']
  %s0 = inlined_call_operand.vmem [shape: f32[2,18,18,4], index: 0, kind: input, shape index: {}]
  %s1 = inlined_call_operand.vmem [shape: bf16[9,4,8], index: 1, kind: input, shape index: {}]
  %s2 = inlined_call_operand.vmem [shape: f32[1,8], index: 2, kind: input, shape index: {}]
  %s3 = inlined_call_operand.vmem [shape: bf16[9,8,128], index: 3, kind: input, shape index: {}]
  %s4 = inlined_call_operand.vmem [shape: f32[1,128], index: 4, kind: input, shape index: {}]
  %s5 = inlined_call_operand.vmem [shape: bf16[16,128], index: 5, kind: input, shape index: {}]
  %s6 = inlined_call_operand.vmem [shape: f32[1,128], index: 6, kind: input, shape index: {}]
  %s7 = inlined_call_operand.vmem [shape: bf16[32,128], index: 7, kind: input, shape index: {}]
  %s8 = inlined_call_operand.vmem [shape: f32[1,128], index: 8, kind: input, shape index: {}]
  %s9 = inlined_call_operand.hbm [shape: f32[2,1,128], index: 9, kind: output, shape index: {}]
  %s10 = sld [smem:[#allocation0]]
  $region69: #{model_forward.1} parent=0
    _
  %s12 = ssub.s32 1, %s10
  %s13 = scalar_select 0, %s12, %s10
  $region1: #{model_forward.1} parent=0
    #allocation3 [shape = 'u8[1024]{0}', space=vmem, size = 0x400, scoped, tag = 'output window, operand 0']
    #allocation4 [shape = 's32[2]{0}', space=sflag, size = 0x8, scoped, tag = 'scoped memory for model_forward.1']
    %14 = vsyncpa [#allocation4], 0
    %s15 = scalar_lea.sflag [#allocation4], 1
    %16 = vsyncpa %s15, 0
    loop: start=0, step=1, limit=4
    $region2: #{model_forward.1} parent=1 // loop_pre_header
      _
    $region3: #{model_forward.1} parent=1 // loop_header
      %s18 = sphi 0, %s22
      %p19 = scmp.ge.s32.totalorder %s18, 4
      %s28 = sphi 0, %s30
      %s31 = sphi 0, %s28
      %s32 = sphi 0, %s31
      %s48 = sphi 0, %s32
      %s52 = sphi 0, %s52
      %s54 = sphi 0, %s52
      %s55 = sphi 0, %s54
      %s69 = sphi 0, %s55
      %s73 = sphi 0, %s73
      %s75 = sphi 0, %s73
      %s76 = sphi 0, %s75
      %s90 = sphi 0, %s76
      %s94 = sphi 0, %s94
      %s96 = sphi 0, %s94
      %s97 = sphi 0, %s96
      %s111 = sphi 0, %s97
      %s115 = sphi 0, %s115
      %s117 = sphi 0, %s115
      %s118 = sphi 0, %s117
      %s132 = sphi 0, %s118
      %s136 = sphi 0, %s136
      %s138 = sphi 0, %s136
      %s139 = sphi 0, %s138
      %s153 = sphi 0, %s139
      %s157 = sphi 0, %s157
      %s159 = sphi 0, %s157
      %s160 = sphi 0, %s159
      %s174 = sphi 0, %s160
      %s178 = sphi 0, %s178
      %s180 = sphi 0, %s178
      %s181 = sphi 0, %s180
      %s195 = sphi 0, %s181
      %s199 = sphi 0, %s199
      %s201 = sphi 0, %s199
      %s202 = sphi 0, %s201
      %s216 = sphi 0, %s202
      %s222 = sphi 0, %s224
      %s225 = sphi 0, %s222
      %s226 = sphi 0, %s225
      %s242 = sphi 0, %s226
    $region4: #{model_forward.1} parent=1 // loop_header_branch
      %21 = sbr.rel (%p19) target = $region8
    $region5: #{model_forward.1} parent=1 // loop_body
      %s23 = ssub.s32 %s18, 1
      %s24 = ssub.s32 %s18, 2
      %s25 = sadd.s32 %s18, 1
      %s26 = ssub.s32 %s18, %s25
      %p27 = scmp.eq.s32.totalorder %s26, 0
      %s29 = sadd.s32 %s28, 1
      %s30 = scalar_select %p27, %s28, %s29
      %p33 = pneg %p27
      %p34 = scmp.eq.s32.totalorder %s18, 1
      %p35 = por %p33, %p34
      %p36 = scmp.ne.s32.totalorder %s28, %s31
      %p37 = scmp.eq.s32.totalorder %s18, 0
      %p38 = por %p36, %p37
      %p39 = scmp.ne.s32.totalorder %s28, %s31
      %p40 = scmp.eq.s32.totalorder %s23, 1
      %p41 = por %p39, %p40
      %p42 = scmp.ne.s32.totalorder %s31, %s32
      %p43 = scmp.eq.s32.totalorder %s23, 0
      %p44 = por %p42, %p43
      %p45 = scmp.ne.s32.totalorder %s31, %s32
      %p46 = scmp.eq.s32.totalorder %s24, 1
      %p47 = por %p45, %p46
      %p49 = scmp.ne.s32.totalorder %s32, %s48
      %p50 = scmp.eq.s32.totalorder %s24, 0
      %p51 = por %p49, %p50
      %s53 = sadd.s32 %s52, 1
      %p56 = scmp.eq.s32.totalorder %s18, 1
      %p57 = scmp.ne.s32.totalorder %s52, %s54
      %p58 = scmp.eq.s32.totalorder %s18, 0
      %p59 = por %p57, %p58
      %p60 = scmp.ne.s32.totalorder %s52, %s54
      %p61 = scmp.eq.s32.totalorder %s23, 1
      %p62 = por %p60, %p61
      %p63 = scmp.ne.s32.totalorder %s54, %s55
      %p64 = scmp.eq.s32.totalorder %s23, 0
      %p65 = por %p63, %p64
      %p66 = scmp.ne.s32.totalorder %s54, %s55
      %p67 = scmp.eq.s32.totalorder %s24, 1
      %p68 = por %p66, %p67
      %p70 = scmp.ne.s32.totalorder %s55, %s69
      %p71 = scmp.eq.s32.totalorder %s24, 0
      %p72 = por %p70, %p71
      %s74 = sadd.s32 %s73, 1
      %p77 = scmp.eq.s32.totalorder %s18, 1
      %p78 = scmp.ne.s32.totalorder %s73, %s75
      %p79 = scmp.eq.s32.totalorder %s18, 0
      %p80 = por %p78, %p79
      %p81 = scmp.ne.s32.totalorder %s73, %s75
      %p82 = scmp.eq.s32.totalorder %s23, 1
      %p83 = por %p81, %p82
      %p84 = scmp.ne.s32.totalorder %s75, %s76
      %p85 = scmp.eq.s32.totalorder %s23, 0
      %p86 = por %p84, %p85
      %p87 = scmp.ne.s32.totalorder %s75, %s76
      %p88 = scmp.eq.s32.totalorder %s24, 1
      %p89 = por %p87, %p88
      %p91 = scmp.ne.s32.totalorder %s76, %s90
      %p92 = scmp.eq.s32.totalorder %s24, 0
      %p93 = por %p91, %p92
      %s95 = sadd.s32 %s94, 1
      %p98 = scmp.eq.s32.totalorder %s18, 1
      %p99 = scmp.ne.s32.totalorder %s94, %s96
      %p100 = scmp.eq.s32.totalorder %s18, 0
      %p101 = por %p99, %p100
      %p102 = scmp.ne.s32.totalorder %s94, %s96
      %p103 = scmp.eq.s32.totalorder %s23, 1
      %p104 = por %p102, %p103
      %p105 = scmp.ne.s32.totalorder %s96, %s97
      %p106 = scmp.eq.s32.totalorder %s23, 0
      %p107 = por %p105, %p106
      %p108 = scmp.ne.s32.totalorder %s96, %s97
      %p109 = scmp.eq.s32.totalorder %s24, 1
      %p110 = por %p108, %p109
      %p112 = scmp.ne.s32.totalorder %s97, %s111
      %p113 = scmp.eq.s32.totalorder %s24, 0
      %p114 = por %p112, %p113
      %s116 = sadd.s32 %s115, 1
      %p119 = scmp.eq.s32.totalorder %s18, 1
      %p120 = scmp.ne.s32.totalorder %s115, %s117
      %p121 = scmp.eq.s32.totalorder %s18, 0
      %p122 = por %p120, %p121
      %p123 = scmp.ne.s32.totalorder %s115, %s117
      %p124 = scmp.eq.s32.totalorder %s23, 1
      %p125 = por %p123, %p124
      %p126 = scmp.ne.s32.totalorder %s117, %s118
      %p127 = scmp.eq.s32.totalorder %s23, 0
      %p128 = por %p126, %p127
      %p129 = scmp.ne.s32.totalorder %s117, %s118
      %p130 = scmp.eq.s32.totalorder %s24, 1
      %p131 = por %p129, %p130
      %p133 = scmp.ne.s32.totalorder %s118, %s132
      %p134 = scmp.eq.s32.totalorder %s24, 0
      %p135 = por %p133, %p134
      %s137 = sadd.s32 %s136, 1
      %p140 = scmp.eq.s32.totalorder %s18, 1
      %p141 = scmp.ne.s32.totalorder %s136, %s138
      %p142 = scmp.eq.s32.totalorder %s18, 0
      %p143 = por %p141, %p142
      %p144 = scmp.ne.s32.totalorder %s136, %s138
      %p145 = scmp.eq.s32.totalorder %s23, 1
      %p146 = por %p144, %p145
      %p147 = scmp.ne.s32.totalorder %s138, %s139
      %p148 = scmp.eq.s32.totalorder %s23, 0
      %p149 = por %p147, %p148
      %p150 = scmp.ne.s32.totalorder %s138, %s139
      %p151 = scmp.eq.s32.totalorder %s24, 1
      %p152 = por %p150, %p151
      %p154 = scmp.ne.s32.totalorder %s139, %s153
      %p155 = scmp.eq.s32.totalorder %s24, 0
      %p156 = por %p154, %p155
      %s158 = sadd.s32 %s157, 1
      %p161 = scmp.eq.s32.totalorder %s18, 1
      %p162 = scmp.ne.s32.totalorder %s157, %s159
      %p163 = scmp.eq.s32.totalorder %s18, 0
      %p164 = por %p162, %p163
      %p165 = scmp.ne.s32.totalorder %s157, %s159
      %p166 = scmp.eq.s32.totalorder %s23, 1
      %p167 = por %p165, %p166
      %p168 = scmp.ne.s32.totalorder %s159, %s160
      %p169 = scmp.eq.s32.totalorder %s23, 0
      %p170 = por %p168, %p169
      %p171 = scmp.ne.s32.totalorder %s159, %s160
      %p172 = scmp.eq.s32.totalorder %s24, 1
      %p173 = por %p171, %p172
      %p175 = scmp.ne.s32.totalorder %s160, %s174
      %p176 = scmp.eq.s32.totalorder %s24, 0
      %p177 = por %p175, %p176
      %s179 = sadd.s32 %s178, 1
      %p182 = scmp.eq.s32.totalorder %s18, 1
      %p183 = scmp.ne.s32.totalorder %s178, %s180
      %p184 = scmp.eq.s32.totalorder %s18, 0
      %p185 = por %p183, %p184
      %p186 = scmp.ne.s32.totalorder %s178, %s180
      %p187 = scmp.eq.s32.totalorder %s23, 1
      %p188 = por %p186, %p187
      %p189 = scmp.ne.s32.totalorder %s180, %s181
      %p190 = scmp.eq.s32.totalorder %s23, 0
      %p191 = por %p189, %p190
      %p192 = scmp.ne.s32.totalorder %s180, %s181
      %p193 = scmp.eq.s32.totalorder %s24, 1
      %p194 = por %p192, %p193
      %p196 = scmp.ne.s32.totalorder %s181, %s195
      %p197 = scmp.eq.s32.totalorder %s24, 0
      %p198 = por %p196, %p197
      %s200 = sadd.s32 %s199, 1
      %p203 = scmp.eq.s32.totalorder %s18, 1
      %p204 = scmp.ne.s32.totalorder %s199, %s201
      %p205 = scmp.eq.s32.totalorder %s18, 0
      %p206 = por %p204, %p205
      %p207 = scmp.ne.s32.totalorder %s199, %s201
      %p208 = scmp.eq.s32.totalorder %s23, 1
      %p209 = por %p207, %p208
      %p210 = scmp.ne.s32.totalorder %s201, %s202
      %p211 = scmp.eq.s32.totalorder %s23, 0
      %p212 = por %p210, %p211
      %p213 = scmp.ne.s32.totalorder %s201, %s202
      %p214 = scmp.eq.s32.totalorder %s24, 1
      %p215 = por %p213, %p214
      %p217 = scmp.ne.s32.totalorder %s202, %s216
      %p218 = scmp.eq.s32.totalorder %s24, 0
      %p219 = por %p217, %p218
      %s220 = ssub.s32 %s18, %s25
      %p221 = scmp.eq.s32.totalorder %s220, 0
      %s223 = sadd.s32 %s222, 1
      %s224 = scalar_select %p221, %s222, %s223
      %p227 = pneg %p221
      %p228 = scmp.eq.s32.totalorder %s18, 1
      %p229 = por %p227, %p228
      %p230 = scmp.ne.s32.totalorder %s222, %s225
      %p231 = scmp.eq.s32.totalorder %s18, 0
      %p232 = por %p230, %p231
      %p233 = scmp.ne.s32.totalorder %s222, %s225
      %p234 = scmp.eq.s32.totalorder %s23, 1
      %p235 = por %p233, %p234
      %p236 = scmp.ne.s32.totalorder %s225, %s226
      %p237 = scmp.eq.s32.totalorder %s23, 0
      %p238 = por %p236, %p237
      %p239 = scmp.ne.s32.totalorder %s225, %s226
      %p240 = scmp.eq.s32.totalorder %s24, 1
      %p241 = por %p239, %p240
      %p243 = scmp.ne.s32.totalorder %s226, %s242
      %p244 = scmp.eq.s32.totalorder %s24, 0
      %p245 = por %p243, %p244
      %p246 = scmp.le.s32.totalorder 1, %s18
      %p247 = scmp.lt.s32.totalorder %s18, 3
      %p248 = pnand %p246, %p247
      %p249 = pneg %p248
      // Predicated region
      $region9: #{model_forward.1} parent=5 // pred_check
        _
      $region10: #{model_forward.1} parent=5 // pred_check_branch
        %251 = sbr.rel (%p248) target = $region12
      $region11: #{model_forward.1} parent=5 // pred_region
        %s252 = ssub.s32 %s18, 1
        // Predicated region
        $region13: #{model_forward.1} parent=11 // pred_check
          %p253 = pneg %p65
        $region14: #{model_forward.1} parent=11 // pred_check_branch
          %255 = sbr.rel (%p253) target = $region16
        $region15: #{model_forward.1} parent=11 // pred_region
          _
        $region16: #{model_forward.1} parent=11 // pred_fallthru
          _
        // Predicated region
        $region17: #{model_forward.1} parent=11 // pred_check
          %p256 = pneg %p86
        $region18: #{model_forward.1} parent=11 // pred_check_branch
          %258 = sbr.rel (%p256) target = $region20
        $region19: #{model_forward.1} parent=11 // pred_region
          _
        $region20: #{model_forward.1} parent=11 // pred_fallthru
          _
        // Predicated region
        $region21: #{model_forward.1} parent=11 // pred_check
          %p259 = pneg %p107
        $region22: #{model_forward.1} parent=11 // pred_check_branch
          %261 = sbr.rel (%p259) target = $region24
        $region23: #{model_forward.1} parent=11 // pred_region
          _
        $region24: #{model_forward.1} parent=11 // pred_fallthru
          _
        // Predicated region
        $region25: #{model_forward.1} parent=11 // pred_check
          %p262 = pneg %p128
        $region26: #{model_forward.1} parent=11 // pred_check_branch
          %264 = sbr.rel (%p262) target = $region28
        $region27: #{model_forward.1} parent=11 // pred_region
          _
        $region28: #{model_forward.1} parent=11 // pred_fallthru
          _
        // Predicated region
        $region29: #{model_forward.1} parent=11 // pred_check
          %p265 = pneg %p149
        $region30: #{model_forward.1} parent=11 // pred_check_branch
          %267 = sbr.rel (%p265) target = $region32
        $region31: #{model_forward.1} parent=11 // pred_region
          _
        $region32: #{model_forward.1} parent=11 // pred_fallthru
          _
        // Predicated region
        $region33: #{model_forward.1} parent=11 // pred_check
          %p268 = pneg %p170
        $region34: #{model_forward.1} parent=11 // pred_check_branch
          %270 = sbr.rel (%p268) target = $region36
        $region35: #{model_forward.1} parent=11 // pred_region
          _
        $region36: #{model_forward.1} parent=11 // pred_fallthru
          _
        // Predicated region
        $region37: #{model_forward.1} parent=11 // pred_check
          %p271 = pneg %p191
        $region38: #{model_forward.1} parent=11 // pred_check_branch
          %273 = sbr.rel (%p271) target = $region40
        $region39: #{model_forward.1} parent=11 // pred_region
          _
        $region40: #{model_forward.1} parent=11 // pred_fallthru
          _
        // Predicated region
        $region41: #{model_forward.1} parent=11 // pred_check
          %p274 = pneg %p212
        $region42: #{model_forward.1} parent=11 // pred_check_branch
          %276 = sbr.rel (%p274) target = $region44
        $region43: #{model_forward.1} parent=11 // pred_region
          _
        $region44: #{model_forward.1} parent=11 // pred_fallthru
          _
      $region12: #{model_forward.1} parent=5 // pred_fallthru
        _
      %p277 = scmp.lt.s32.totalorder %s18, 2
      // Predicated region
      $region45: #{model_forward.1} parent=5 // pred_check
        %p278 = pneg %p277
      $region46: #{model_forward.1} parent=5 // pred_check_branch
        %280 = sbr.rel (%p278) target = $region48
      $region47: #{model_forward.1} parent=5 // pred_region
        // Predicated region
        $region49: #{model_forward.1} parent=47 // pred_check
          %p281 = pneg %p38
        $region50: #{model_forward.1} parent=47 // pred_check_branch
          %283 = sbr.rel (%p281) target = $region52
        $region51: #{model_forward.1} parent=47 // pred_region
          %p284 = scmp.lt.s32.totalorder %s18, 1
          %s285 = scalar_select %p284, %s18, 1
          %s286 = smul.addr %s285, 54
          %s287 = smul.addr %s286, 8
          %s288 = scalar_lea.vmem %s0, %s287
        $region52: #{model_forward.1} parent=47 // pred_fallthru
          _
      $region48: #{model_forward.1} parent=5 // pred_fallthru
        _
      %p289 = scmp.le.s32.totalorder 1, %s18
      %p290 = scmp.lt.s32.totalorder %s18, 3
      %p291 = pnand %p289, %p290
      %p292 = pneg %p291
      // Predicated region
      $region53: #{model_forward.1} parent=5 // pred_check
        _
      $region54: #{model_forward.1} parent=5 // pred_check_branch
        %294 = sbr.rel (%p291) target = $region56
      $region55: #{model_forward.1} parent=5 // pred_region
        %s295 = ssub.s32 %s18, 1
        %p296 = scmp.lt.s32.totalorder %s23, 1
        %s297 = scalar_select %p296, %s23, 1
        %s298 = smul.addr %s297, 54
        %s299 = smul.addr %s298, 8
        %s300 = scalar_lea.vmem %s0, %s299
        %p301 = pneg %p44
        %p302 = pneg %p41
        %p303 = pneg %p65
        %p304 = pneg %p62
        %p305 = pneg %p86
        %p306 = pneg %p83
        %p307 = pneg %p107
        %p308 = pneg %p104
        %p309 = pneg %p128
        %p310 = pneg %p125
        %p311 = pneg %p149
        %p312 = pneg %p146
        %p313 = pneg %p170
        %p314 = pneg %p167
        %p315 = pneg %p191
        %p316 = pneg %p188
        %p317 = pneg %p212
        %p318 = pneg %p209
        %p319 = pneg %p238
        %p320 = pneg %p235
        %s321 = sand.u32 %s225, 1
        %s322 = scalar_lea.sflag [#allocation4], %s321
        %s323 = sand.u32 %s225, 1
        %s324 = scalar_lea.vmem [#allocation3], %s323
        %p325 = scmp.lt.s32.totalorder %s23, 1
        %s326 = scalar_select %p325, %s23, 1
        %s327 = smul.addr %s326, 54
        %s328 = smul.addr %s327, 8
        %s329 = scalar_lea.vmem %s0, %s328
        %vm331 = vcmask 64512
        %332 = vst.msk [vmem:[#allocation2] sm:$0xff] %vm331, 0.0
        %333 = vst.msk [vmem:[#allocation2 + $0x8] sm:$0xff] %vm331, 0.0
        %vm334 = vcmask 58368
        %335 = vst.msk [vmem:[#allocation2 + $0x10] sm:$0x3] %vm334, 0.0
        %336 = vst.msk [vmem:[#allocation2 + $0x18] sm:$0xff] %vm331, 0.0
        %337 = vst.msk [vmem:[#allocation2 + $0x20] sm:$0xff] %vm331, 0.0
        %338 = vst.msk [vmem:[#allocation2 + $0x28] sm:$0x3] %vm334, 0.0
        %339 = vst.msk [vmem:[#allocation2 + $0x30] sm:$0xff] %vm331, 0.0
        %340 = vst.msk [vmem:[#allocation2 + $0x38] sm:$0xff] %vm331, 0.0
        %341 = vst.msk [vmem:[#allocation2 + $0x40] sm:$0x3] %vm334, 0.0
        %342 = vst.msk [vmem:[#allocation2 + $0x48] sm:$0xff] %vm331, 0.0
        %343 = vst.msk [vmem:[#allocation2 + $0x50] sm:$0xff] %vm331, 0.0
        %344 = vst.msk [vmem:[#allocation2 + $0x58] sm:$0x3] %vm334, 0.0
        %345 = vst.msk [vmem:[#allocation2 + $0x60] sm:$0xff] %vm331, 0.0
        %346 = vst.msk [vmem:[#allocation2 + $0x68] sm:$0xff] %vm331, 0.0
        %347 = vst.msk [vmem:[#allocation2 + $0x70] sm:$0x3] %vm334, 0.0
        %348 = vst.msk [vmem:[#allocation2 + $0x78] sm:$0xff] %vm331, 0.0
        %349 = vst.msk [vmem:[#allocation2 + $0x80] sm:$0xff] %vm331, 0.0
        %350 = vst.msk [vmem:[#allocation2 + $0x88] sm:$0x3] %vm334, 0.0
        %351 = vst.msk [vmem:[#allocation2 + $0x90] sm:$0xff] %vm331, 0.0
        %352 = vst.msk [vmem:[#allocation2 + $0x98] sm:$0xff] %vm331, 0.0
        %353 = vst.msk [vmem:[#allocation2 + $0xa0] sm:$0x3] %vm334, 0.0
        %354 = vst.msk [vmem:[#allocation2 + $0xa8] sm:$0xff] %vm331, 0.0
        %355 = vst.msk [vmem:[#allocation2 + $0xb0] sm:$0xff] %vm331, 0.0
        %356 = vst.msk [vmem:[#allocation2 + $0xb8] sm:$0x3] %vm334, 0.0
        %357 = vst.msk [vmem:[#allocation2 + $0xc0] sm:$0xff] %vm331, 0.0
        %358 = vst.msk [vmem:[#allocation2 + $0xc8] sm:$0xff] %vm331, 0.0
        %359 = vst.msk [vmem:[#allocation2 + $0xd0] sm:$0x3] %vm334, 0.0
        %360 = vst.msk [vmem:[#allocation2 + $0xd8] sm:$0xff] %vm331, 0.0
        %361 = vst.msk [vmem:[#allocation2 + $0xe0] sm:$0xff] %vm331, 0.0
        %362 = vst.msk [vmem:[#allocation2 + $0xe8] sm:$0x3] %vm334, 0.0
        %363 = vst.msk [vmem:[#allocation2 + $0xf0] sm:$0xff] %vm331, 0.0
        %364 = vst.msk [vmem:[#allocation2 + $0xf8] sm:$0xff] %vm331, 0.0
        %365 = vst.msk [vmem:[#allocation2 + $0x100] sm:$0x3] %vm334, 0.0
        %366 = vst.msk [vmem:[#allocation2 + $0x108] sm:$0xff] %vm331, 0.0
        %367 = vst.msk [vmem:[#allocation2 + $0x110] sm:$0xff] %vm331, 0.0
        %368 = vst.msk [vmem:[#allocation2 + $0x118] sm:$0x3] %vm334, 0.0
        %369 = vst.msk [vmem:[#allocation2 + $0x120] sm:$0xff] %vm331, 0.0
        %370 = vst.msk [vmem:[#allocation2 + $0x128] sm:$0xff] %vm331, 0.0
        %371 = vst.msk [vmem:[#allocation2 + $0x130] sm:$0x3] %vm334, 0.0
        %372 = vst.msk [vmem:[#allocation2 + $0x138] sm:$0xff] %vm331, 0.0
        %373 = vst.msk [vmem:[#allocation2 + $0x140] sm:$0xff] %vm331, 0.0
        %374 = vst.msk [vmem:[#allocation2 + $0x148] sm:$0x3] %vm334, 0.0
        %375 = vst.msk [vmem:[#allocation2 + $0x150] sm:$0xff] %vm331, 0.0
        %376 = vst.msk [vmem:[#allocation2 + $0x158] sm:$0xff] %vm331, 0.0
        %377 = vst.msk [vmem:[#allocation2 + $0x160] sm:$0x3] %vm334, 0.0
        %378 = vst.msk [vmem:[#allocation2 + $0x168] sm:$0xff] %vm331, 0.0
        %379 = vst.msk [vmem:[#allocation2 + $0x170] sm:$0xff] %vm331, 0.0
        %380 = vst.msk [vmem:[#allocation2 + $0x178] sm:$0x3] %vm334, 0.0
        %381 = vst.msk [vmem:[#allocation2 + $0x180] sm:$0xff] %vm331, 0.0
        %382 = vst.msk [vmem:[#allocation2 + $0x188] sm:$0xff] %vm331, 0.0
        %383 = vst.msk [vmem:[#allocation2 + $0x190] sm:$0x3] %vm334, 0.0
        %384 = vst.msk [vmem:[#allocation2 + $0x198] sm:$0xff] %vm331, 0.0
        %385 = vst.msk [vmem:[#allocation2 + $0x1a0] sm:$0xff] %vm331, 0.0
        %386 = vst.msk [vmem:[#allocation2 + $0x1a8] sm:$0x3] %vm334, 0.0
        %v387 = vld [vmem:[%s2] sm:$0x1]
        %v388 = vld [vmem:[%s329] sm:$0xff]
        %v389 = vld [vmem:[%s329 + $0x8] sm:$0xff]
        %v390 = vld [vmem:[%s329 + $0x18] sm:$0xff]
        %v391 = vld [vmem:[%s329 + $0x20] sm:$0xff]
        %v392 = vld [vmem:[%s329 + $0x30] sm:$0xff]
        %v393 = vld [vmem:[%s329 + $0x38] sm:$0xff]
        %v394 = vld [vmem:[%s329 + $0x48] sm:$0xff]
        %v395 = vld [vmem:[%s329 + $0x50] sm:$0xff]
        %v396 = vld [vmem:[%s329 + $0x60] sm:$0xff]
        %v397 = vld [vmem:[%s329 + $0x68] sm:$0xff]
        %v398 = vld [vmem:[%s329 + $0x78] sm:$0xff]
        %v399 = vld [vmem:[%s329 + $0x80] sm:$0xff]
        %v400 = vld [vmem:[%s329 + $0x90] sm:$0xff]
        %v401 = vld [vmem:[%s329 + $0x98] sm:$0xff]
        %v402 = vld [vmem:[%s329 + $0xa8] sm:$0xff]
        %v403 = vld [vmem:[%s329 + $0xb0] sm:$0xff]
        %v404 = vpack.c.bf16 %v389, %v388
        %v405 = vpack.c.bf16 %v391, %v390
        %v406 = vpack.c.bf16 %v393, %v392
        %v407 = vpack.c.bf16 %v395, %v394
        %v408 = vpack.c.bf16 %v397, %v396
        %v409 = vpack.c.bf16 %v399, %v398
        %v410 = vpack.c.bf16 %v401, %v400
        %v411 = vpack.c.bf16 %v403, %v402
        %v412 = vld [vmem:[%s1] sm:$0x3]
        %v413 = vld [vmem:[%s329 + $0x1] sm:$0xff]
        %v414 = vld [vmem:[%s329 + $0x9] sm:$0xff]
        %v415 = vld [vmem:[%s329 + $0x19] sm:$0xff]
        %v416 = vld [vmem:[%s329 + $0x21] sm:$0xff]
        %v417 = vld [vmem:[%s329 + $0x31] sm:$0xff]
        %v418 = vld [vmem:[%s329 + $0x39] sm:$0xff]
        %v419 = vld [vmem:[%s329 + $0x49] sm:$0xff]
        %v420 = vld [vmem:[%s329 + $0x51] sm:$0xff]
        %v421 = vld [vmem:[%s329 + $0x61] sm:$0xff]
        %v422 = vld [vmem:[%s329 + $0x69] sm:$0xff]
        %v423 = vld [vmem:[%s329 + $0x79] sm:$0xff]
        %v424 = vld [vmem:[%s329 + $0x81] sm:$0xff]
        %v425 = vld [vmem:[%s329 + $0x91] sm:$0xff]
        %v426 = vld [vmem:[%s329 + $0x99] sm:$0xff]
        %v427 = vld [vmem:[%s329 + $0xa9] sm:$0xff]
        %v428 = vld [vmem:[%s329 + $0xb1] sm:$0xff]
        %v429 = vpack.c.bf16 %v414, %v413
        %v430 = vpack.c.bf16 %v416, %v415
        %v431 = vpack.c.bf16 %v418, %v417
        %v432 = vpack.c.bf16 %v420, %v419
        %v433 = vpack.c.bf16 %v422, %v421
        %v434 = vpack.c.bf16 %v424, %v423
        %v435 = vpack.c.bf16 %v426, %v425
        %v436 = vpack.c.bf16 %v428, %v427
        %s437 = scalar_lea.vmem %s1, 2
        %v438 = vld [vmem:[%s437] sm:$0x3]
        %vm439 = vcmask 31744
        %v441 = vsel %vm439, %v429, 0
        %v444 = vsel %vm439, %v430, 0
        %v447 = vsel %vm439, %v431, 0
        %v450 = vsel %vm439, %v432, 0
        %v453 = vsel %vm439, %v433, 0
        %v456 = vsel %vm439, %v434, 0
        %v459 = vsel %vm439, %v435, 0
        %v462 = vsel %vm439, %v436, 0
        %vm464 = vcmask 1041408
        %v466 = vsel %vm464, %v438, 0
        %468 = vmatpush.bf16.msra.mxu0 0
        %469 = vmatpush.bf16.msra.mxu0 0
        %470 = vmatpush.bf16.msra.mxu0 0
        %471 = vmatpush.bf16.msra.mxu0 0
        %472 = vmatpush.bf16.msra.mxu0 0
        %473 = vmatpush.bf16.msra.mxu0 0
        %474 = vmatpush.bf16.msra.mxu0 0
        %475 = vmatpush.bf16.msra.mxu0 %v466
        %476 = vmatmul.bf16.gmra.mxu0 %v441
        %v477 = vpop.f32.mrf.mxu0
        %v478 = vadd.f32 0.0, %v477
        %v479 = vpop.f32.mrf.mxu0
        %v480 = vadd.f32 0.0, %v479
        %481 = vmatmul.bf16.gmra.mxu0 %v444
        %v482 = vpop.f32.mrf.mxu0
        %v483 = vadd.f32 0.0, %v482
        %v484 = vpop.f32.mrf.mxu0
        %v485 = vadd.f32 0.0, %v484
        %486 = vmatmul.bf16.gmra.mxu0 %v447
        %v487 = vpop.f32.mrf.mxu0
        %v488 = vadd.f32 0.0, %v487
        %v489 = vpop.f32.mrf.mxu0
        %v490 = vadd.f32 0.0, %v489
        %491 = vmatmul.bf16.gmra.mxu0 %v450
        %v492 = vpop.f32.mrf.mxu0
        %v493 = vadd.f32 0.0, %v492
        %v494 = vpop.f32.mrf.mxu0
        %v495 = vadd.f32 0.0, %v494
        %496 = vmatmul.bf16.gmra.mxu0 %v453
        %v497 = vpop.f32.mrf.mxu0
        %v498 = vadd.f32 0.0, %v497
        %v499 = vpop.f32.mrf.mxu0
        %v500 = vadd.f32 0.0, %v499
        %501 = vmatmul.bf16.gmra.mxu0 %v456
        %v502 = vpop.f32.mrf.mxu0
        %v503 = vadd.f32 0.0, %v502
        %v504 = vpop.f32.mrf.mxu0
        %v505 = vadd.f32 0.0, %v504
        %506 = vmatmul.bf16.gmra.mxu0 %v459
        %v507 = vpop.f32.mrf.mxu0
        %v508 = vadd.f32 0.0, %v507
        %v509 = vpop.f32.mrf.mxu0
        %v510 = vadd.f32 0.0, %v509
        %511 = vmatmul.bf16.gmra.mxu0 %v462
        %v512 = vpop.f32.mrf.mxu0
        %v513 = vadd.f32 0.0, %v512
        %v514 = vpop.f32.mrf.mxu0
        %v515 = vadd.f32 0.0, %v514
        %516 = vdwg.mxu0
        %v518 = vsel %vm439, %v404, 0
        %v521 = vsel %vm439, %v405, 0
        %v524 = vsel %vm439, %v406, 0
        %v527 = vsel %vm439, %v407, 0
        %v530 = vsel %vm439, %v408, 0
        %v533 = vsel %vm439, %v409, 0
        %v536 = vsel %vm439, %v410, 0
        %v539 = vsel %vm439, %v411, 0
        %v542 = vsel %vm464, %v412, 0
        %544 = vmatpush.bf16.msra.mxu0 0
        %545 = vmatpush.bf16.msra.mxu0 0
        %546 = vmatpush.bf16.msra.mxu0 0
        %547 = vmatpush.bf16.msra.mxu0 0
        %548 = vmatpush.bf16.msra.mxu0 0
        %549 = vmatpush.bf16.msra.mxu0 0
        %550 = vmatpush.bf16.msra.mxu0 0
        %551 = vmatpush.bf16.msra.mxu0 %v542
        %552 = vmatmul.bf16.gmra.mxu0 %v518
        %v553 = vpop.f32.mrf.mxu0
        %v554 = vadd.f32 %v478, %v553
        %v555 = vpop.f32.mrf.mxu0
        %v556 = vadd.f32 %v480, %v555
        %557 = vmatmul.bf16.gmra.mxu0 %v521
        %v558 = vpop.f32.mrf.mxu0
        %v559 = vadd.f32 %v483, %v558
        %v560 = vpop.f32.mrf.mxu0
        %v561 = vadd.f32 %v485, %v560
        %562 = vmatmul.bf16.gmra.mxu0 %v524
        %v563 = vpop.f32.mrf.mxu0
        %v564 = vadd.f32 %v488, %v563
        %v565 = vpop.f32.mrf.mxu0
        %v566 = vadd.f32 %v490, %v565
        %567 = vmatmul.bf16.gmra.mxu0 %v527
        %v568 = vpop.f32.mrf.mxu0
        %v569 = vadd.f32 %v493, %v568
        %v570 = vpop.f32.mrf.mxu0
        %v571 = vadd.f32 %v495, %v570
        %572 = vmatmul.bf16.gmra.mxu0 %v530
        %v573 = vpop.f32.mrf.mxu0
        %v574 = vadd.f32 %v498, %v573
        %v575 = vpop.f32.mrf.mxu0
        %v576 = vadd.f32 %v500, %v575
        %577 = vmatmul.bf16.gmra.mxu0 %v533
        %v578 = vpop.f32.mrf.mxu0
        %v579 = vadd.f32 %v503, %v578
        %v580 = vpop.f32.mrf.mxu0
        %v581 = vadd.f32 %v505, %v580
        %582 = vmatmul.bf16.gmra.mxu0 %v536
        %v583 = vpop.f32.mrf.mxu0
        %v584 = vadd.f32 %v508, %v583
        %v585 = vpop.f32.mrf.mxu0
        %v586 = vadd.f32 %v510, %v585
        %587 = vmatmul.bf16.gmra.mxu0 %v539
        %v588 = vpop.f32.mrf.mxu0
        %v589 = vadd.f32 %v513, %v588
        %v590 = vpop.f32.mrf.mxu0
        %v591 = vadd.f32 %v515, %v590
        %592 = vdwg.mxu0
        %v593 = vld [vmem:[%s329 + $0x2] sm:$0xff]
        %v594 = vld [vmem:[%s329 + $0xa] sm:$0xff]
        %v595 = vld [vmem:[%s329 + $0x1a] sm:$0xff]
        %v596 = vld [vmem:[%s329 + $0x22] sm:$0xff]
        %v597 = vld [vmem:[%s329 + $0x32] sm:$0xff]
        %v598 = vld [vmem:[%s329 + $0x3a] sm:$0xff]
        %v599 = vld [vmem:[%s329 + $0x4a] sm:$0xff]
        %v600 = vld [vmem:[%s329 + $0x52] sm:$0xff]
        %v601 = vld [vmem:[%s329 + $0x62] sm:$0xff]
        %v602 = vld [vmem:[%s329 + $0x6a] sm:$0xff]
        %v603 = vld [vmem:[%s329 + $0x7a] sm:$0xff]
        %v604 = vld [vmem:[%s329 + $0x82] sm:$0xff]
        %v605 = vld [vmem:[%s329 + $0x92] sm:$0xff]
        %v606 = vld [vmem:[%s329 + $0x9a] sm:$0xff]
        %v607 = vld [vmem:[%s329 + $0xaa] sm:$0xff]
        %v608 = vld [vmem:[%s329 + $0xb2] sm:$0xff]
        %v609 = vpack.c.bf16 %v594, %v593
        %v610 = vpack.c.bf16 %v596, %v595
        %v611 = vpack.c.bf16 %v598, %v597
        %v612 = vpack.c.bf16 %v600, %v599
        %v613 = vpack.c.bf16 %v602, %v601
        %v614 = vpack.c.bf16 %v604, %v603
        %v615 = vpack.c.bf16 %v606, %v605
        %v616 = vpack.c.bf16 %v608, %v607
        %s617 = scalar_lea.vmem %s1, 4
        %v618 = vld [vmem:[%s617] sm:$0x3]
        %v620 = vsel %vm439, %v609, 0
        %v623 = vsel %vm439, %v610, 0
        %v626 = vsel %vm439, %v611, 0
        %v629 = vsel %vm439, %v612, 0
        %v632 = vsel %vm439, %v613, 0
        %v635 = vsel %vm439, %v614, 0
        %v638 = vsel %vm439, %v615, 0
        %v641 = vsel %vm439, %v616, 0
        %v644 = vsel %vm464, %v618, 0
        %646 = vmatpush.bf16.msra.mxu0 0
        %647 = vmatpush.bf16.msra.mxu0 0
        %648 = vmatpush.bf16.msra.mxu0 0
        %649 = vmatpush.bf16.msra.mxu0 0
        %650 = vmatpush.bf16.msra.mxu0 0
        %651 = vmatpush.bf16.msra.mxu0 0
        %652 = vmatpush.bf16.msra.mxu0 0
        %653 = vmatpush.bf16.msra.mxu0 %v644
        %654 = vmatmul.bf16.gmra.mxu0 %v620
        %v655 = vpop.f32.mrf.mxu0
        %v656 = vadd.f32 0.0, %v655
        %v657 = vpop.f32.mrf.mxu0
        %v658 = vadd.f32 0.0, %v657
        %659 = vmatmul.bf16.gmra.mxu0 %v623
        %v660 = vpop.f32.mrf.mxu0
        %v661 = vadd.f32 0.0, %v660
        %v662 = vpop.f32.mrf.mxu0
        %v663 = vadd.f32 0.0, %v662
        %664 = vmatmul.bf16.gmra.mxu0 %v626
        %v665 = vpop.f32.mrf.mxu0
        %v666 = vadd.f32 0.0, %v665
        %v667 = vpop.f32.mrf.mxu0
        %v668 = vadd.f32 0.0, %v667
        %669 = vmatmul.bf16.gmra.mxu0 %v629
        %v670 = vpop.f32.mrf.mxu0
        %v671 = vadd.f32 0.0, %v670
        %v672 = vpop.f32.mrf.mxu0
        %v673 = vadd.f32 0.0, %v672
        %674 = vmatmul.bf16.gmra.mxu0 %v632
        %v675 = vpop.f32.mrf.mxu0
        %v676 = vadd.f32 0.0, %v675
        %v677 = vpop.f32.mrf.mxu0
        %v678 = vadd.f32 0.0, %v677
        %679 = vmatmul.bf16.gmra.mxu0 %v635
        %v680 = vpop.f32.mrf.mxu0
        %v681 = vadd.f32 0.0, %v680
        %v682 = vpop.f32.mrf.mxu0
        %v683 = vadd.f32 0.0, %v682
        %684 = vmatmul.bf16.gmra.mxu0 %v638
        %v685 = vpop.f32.mrf.mxu0
        %v686 = vadd.f32 0.0, %v685
        %v687 = vpop.f32.mrf.mxu0
        %v688 = vadd.f32 0.0, %v687
        %689 = vmatmul.bf16.gmra.mxu0 %v641
        %v690 = vpop.f32.mrf.mxu0
        %v691 = vadd.f32 0.0, %v690
        %v692 = vpop.f32.mrf.mxu0
        %v693 = vadd.f32 0.0, %v692
        %694 = vdwg.mxu0
        %v695 = vadd.f32 %v554, %v656
        %v696 = vadd.f32 %v556, %v658
        %v697 = vadd.f32 %v559, %v661
        %v698 = vadd.f32 %v561, %v663
        %v699 = vadd.f32 %v564, %v666
        %v700 = vadd.f32 %v566, %v668
        %v701 = vadd.f32 %v569, %v671
        %v702 = vadd.f32 %v571, %v673
        %v703 = vadd.f32 %v574, %v676
        %v704 = vadd.f32 %v576, %v678
        %v705 = vadd.f32 %v579, %v681
        %v706 = vadd.f32 %v581, %v683
        %v707 = vadd.f32 %v584, %v686
        %v708 = vadd.f32 %v586, %v688
        %v709 = vadd.f32 %v589, %v691
        %v710 = vadd.f32 %v591, %v693
        %s711 = scalar_lea.vmem %s329, 24
        %v712 = vld [vmem:[%s711] sm:$0xff]
        %v713 = vld [vmem:[%s711 + $0x8] sm:$0xff]
        %v714 = vld [vmem:[%s711 + $0x18] sm:$0xff]
        %v715 = vld [vmem:[%s711 + $0x20] sm:$0xff]
        %v716 = vld [vmem:[%s711 + $0x30] sm:$0xff]
        %v717 = vld [vmem:[%s711 + $0x38] sm:$0xff]
        %v718 = vld [vmem:[%s711 + $0x48] sm:$0xff]
        %v719 = vld [vmem:[%s711 + $0x50] sm:$0xff]
        %v720 = vld [vmem:[%s711 + $0x60] sm:$0xff]
        %v721 = vld [vmem:[%s711 + $0x68] sm:$0xff]
        %v722 = vld [vmem:[%s711 + $0x78] sm:$0xff]
        %v723 = vld [vmem:[%s711 + $0x80] sm:$0xff]
        %v724 = vld [vmem:[%s711 + $0x90] sm:$0xff]
        %v725 = vld [vmem:[%s711 + $0x98] sm:$0xff]
        %v726 = vld [vmem:[%s711 + $0xa8] sm:$0xff]
        %v727 = vld [vmem:[%s711 + $0xb0] sm:$0xff]
        %v728 = vpack.c.bf16 %v713, %v712
        %v729 = vpack.c.bf16 %v715, %v714
        %v730 = vpack.c.bf16 %v717, %v716
        %v731 = vpack.c.bf16 %v719, %v718
        %v732 = vpack.c.bf16 %v721, %v720
        %v733 = vpack.c.bf16 %v723, %v722
        %v734 = vpack.c.bf16 %v725, %v724
        %v735 = vpack.c.bf16 %v727, %v726
        %s736 = scalar_lea.vmem %s1, 6
        %v737 = vld [vmem:[%s736] sm:$0x3]
        %v739 = vsel %vm439, %v728, 0
        %v742 = vsel %vm439, %v729, 0
        %v745 = vsel %vm439, %v730, 0
        %v748 = vsel %vm439, %v731, 0
        %v751 = vsel %vm439, %v732, 0
        %v754 = vsel %vm439, %v733, 0
        %v757 = vsel %vm439, %v734, 0
        %v760 = vsel %vm439, %v735, 0
        %v763 = vsel %vm464, %v737, 0
        %765 = vmatpush.bf16.msra.mxu0 0
        %766 = vmatpush.bf16.msra.mxu0 0
        %767 = vmatpush.bf16.msra.mxu0 0
        %768 = vmatpush.bf16.msra.mxu0 0
        %769 = vmatpush.bf16.msra.mxu0 0
        %770 = vmatpush.bf16.msra.mxu0 0
        %771 = vmatpush.bf16.msra.mxu0 0
        %772 = vmatpush.bf16.msra.mxu0 %v763
        %773 = vmatmul.bf16.gmra.mxu0 %v739
        %v774 = vpop.f32.mrf.mxu0
        %v775 = vadd.f32 0.0, %v774
        %v776 = vpop.f32.mrf.mxu0
        %v777 = vadd.f32 0.0, %v776
        %778 = vmatmul.bf16.gmra.mxu0 %v742
        %v779 = vpop.f32.mrf.mxu0
        %v780 = vadd.f32 0.0, %v779
        %v781 = vpop.f32.mrf.mxu0
        %v782 = vadd.f32 0.0, %v781
        %783 = vmatmul.bf16.gmra.mxu0 %v745
        %v784 = vpop.f32.mrf.mxu0
        %v785 = vadd.f32 0.0, %v784
        %v786 = vpop.f32.mrf.mxu0
        %v787 = vadd.f32 0.0, %v786
        %788 = vmatmul.bf16.gmra.mxu0 %v748
        %v789 = vpop.f32.mrf.mxu0
        %v790 = vadd.f32 0.0, %v789
        %v791 = vpop.f32.mrf.mxu0
        %v792 = vadd.f32 0.0, %v791
        %793 = vmatmul.bf16.gmra.mxu0 %v751
        %v794 = vpop.f32.mrf.mxu0
        %v795 = vadd.f32 0.0, %v794
        %v796 = vpop.f32.mrf.mxu0
        %v797 = vadd.f32 0.0, %v796
        %798 = vmatmul.bf16.gmra.mxu0 %v754
        %v799 = vpop.f32.mrf.mxu0
        %v800 = vadd.f32 0.0, %v799
        %v801 = vpop.f32.mrf.mxu0
        %v802 = vadd.f32 0.0, %v801
        %803 = vmatmul.bf16.gmra.mxu0 %v757
        %v804 = vpop.f32.mrf.mxu0
        %v805 = vadd.f32 0.0, %v804
        %v806 = vpop.f32.mrf.mxu0
        %v807 = vadd.f32 0.0, %v806
        %808 = vmatmul.bf16.gmra.mxu0 %v760
        %v809 = vpop.f32.mrf.mxu0
        %v810 = vadd.f32 0.0, %v809
        %v811 = vpop.f32.mrf.mxu0
        %v812 = vadd.f32 0.0, %v811
        %813 = vdwg.mxu0
        %v814 = vadd.f32 %v695, %v775
        %v815 = vadd.f32 %v696, %v777
        %v816 = vadd.f32 %v697, %v780
        %v817 = vadd.f32 %v698, %v782
        %v818 = vadd.f32 %v699, %v785
        %v819 = vadd.f32 %v700, %v787
        %v820 = vadd.f32 %v701, %v790
        %v821 = vadd.f32 %v702, %v792
        %v822 = vadd.f32 %v703, %v795
        %v823 = vadd.f32 %v704, %v797
        %v824 = vadd.f32 %v705, %v800
        %v825 = vadd.f32 %v706, %v802
        %v826 = vadd.f32 %v707, %v805
        %v827 = vadd.f32 %v708, %v807
        %v828 = vadd.f32 %v709, %v810
        %v829 = vadd.f32 %v710, %v812
        %v830 = vld [vmem:[%s711 + $0x1] sm:$0xff]
        %v831 = vld [vmem:[%s711 + $0x9] sm:$0xff]
        %v832 = vld [vmem:[%s711 + $0x19] sm:$0xff]
        %v833 = vld [vmem:[%s711 + $0x21] sm:$0xff]
        %v834 = vld [vmem:[%s711 + $0x31] sm:$0xff]
        %v835 = vld [vmem:[%s711 + $0x39] sm:$0xff]
        %v836 = vld [vmem:[%s711 + $0x49] sm:$0xff]
        %v837 = vld [vmem:[%s711 + $0x51] sm:$0xff]
        %v838 = vld [vmem:[%s711 + $0x61] sm:$0xff]
        %v839 = vld [vmem:[%s711 + $0x69] sm:$0xff]
        %v840 = vld [vmem:[%s711 + $0x79] sm:$0xff]
        %v841 = vld [vmem:[%s711 + $0x81] sm:$0xff]
        %v842 = vld [vmem:[%s711 + $0x91] sm:$0xff]
        %v843 = vld [vmem:[%s711 + $0x99] sm:$0xff]
        %v844 = vld [vmem:[%s711 + $0xa9] sm:$0xff]
        %v845 = vld [vmem:[%s711 + $0xb1] sm:$0xff]
        %v846 = vpack.c.bf16 %v831, %v830
        %v847 = vpack.c.bf16 %v833, %v832
        %v848 = vpack.c.bf16 %v835, %v834
        %v849 = vpack.c.bf16 %v837, %v836
        %v850 = vpack.c.bf16 %v839, %v838
        %v851 = vpack.c.bf16 %v841, %v840
        %v852 = vpack.c.bf16 %v843, %v842
        %v853 = vpack.c.bf16 %v845, %v844
        %s854 = scalar_lea.vmem %s1, 8
        %v855 = vld [vmem:[%s854] sm:$0x3]
        %v857 = vsel %vm439, %v846, 0
        %v860 = vsel %vm439, %v847, 0
        %v863 = vsel %vm439, %v848, 0
        %v866 = vsel %vm439, %v849, 0
        %v869 = vsel %vm439, %v850, 0
        %v872 = vsel %vm439, %v851, 0
        %v875 = vsel %vm439, %v852, 0
        %v878 = vsel %vm439, %v853, 0
        %v881 = vsel %vm464, %v855, 0
        %883 = vmatpush.bf16.msra.mxu0 0
        %884 = vmatpush.bf16.msra.mxu0 0
        %885 = vmatpush.bf16.msra.mxu0 0
        %886 = vmatpush.bf16.msra.mxu0 0
        %887 = vmatpush.bf16.msra.mxu0 0
        %888 = vmatpush.bf16.msra.mxu0 0
        %889 = vmatpush.bf16.msra.mxu0 0
        %890 = vmatpush.bf16.msra.mxu0 %v881
        %891 = vmatmul.bf16.gmra.mxu0 %v857
        %v892 = vpop.f32.mrf.mxu0
        %v893 = vadd.f32 0.0, %v892
        %v894 = vpop.f32.mrf.mxu0
        %v895 = vadd.f32 0.0, %v894
        %896 = vmatmul.bf16.gmra.mxu0 %v860
        %v897 = vpop.f32.mrf.mxu0
        %v898 = vadd.f32 0.0, %v897
        %v899 = vpop.f32.mrf.mxu0
        %v900 = vadd.f32 0.0, %v899
        %901 = vmatmul.bf16.gmra.mxu0 %v863
        %v902 = vpop.f32.mrf.mxu0
        %v903 = vadd.f32 0.0, %v902
        %v904 = vpop.f32.mrf.mxu0
        %v905 = vadd.f32 0.0, %v904
        %906 = vmatmul.bf16.gmra.mxu0 %v866
        %v907 = vpop.f32.mrf.mxu0
        %v908 = vadd.f32 0.0, %v907
        %v909 = vpop.f32.mrf.mxu0
        %v910 = vadd.f32 0.0, %v909
        %911 = vmatmul.bf16.gmra.mxu0 %v869
        %v912 = vpop.f32.mrf.mxu0
        %v913 = vadd.f32 0.0, %v912
        %v914 = vpop.f32.mrf.mxu0
        %v915 = vadd.f32 0.0, %v914
        %916 = vmatmul.bf16.gmra.mxu0 %v872
        %v917 = vpop.f32.mrf.mxu0
        %v918 = vadd.f32 0.0, %v917
        %v919 = vpop.f32.mrf.mxu0
        %v920 = vadd.f32 0.0, %v919
        %921 = vmatmul.bf16.gmra.mxu0 %v875
        %v922 = vpop.f32.mrf.mxu0
        %v923 = vadd.f32 0.0, %v922
        %v924 = vpop.f32.mrf.mxu0
        %v925 = vadd.f32 0.0, %v924
        %926 = vmatmul.bf16.gmra.mxu0 %v878
        %v927 = vpop.f32.mrf.mxu0
        %v928 = vadd.f32 0.0, %v927
        %v929 = vpop.f32.mrf.mxu0
        %v930 = vadd.f32 0.0, %v929
        %931 = vdwg.mxu0
        %v932 = vadd.f32 %v814, %v893
        %v933 = vadd.f32 %v815, %v895
        %v934 = vadd.f32 %v816, %v898
        %v935 = vadd.f32 %v817, %v900
        %v936 = vadd.f32 %v818, %v903
        %v937 = vadd.f32 %v819, %v905
        %v938 = vadd.f32 %v820, %v908
        %v939 = vadd.f32 %v821, %v910
        %v940 = vadd.f32 %v822, %v913
        %v941 = vadd.f32 %v823, %v915
        %v942 = vadd.f32 %v824, %v918
        %v943 = vadd.f32 %v825, %v920
        %v944 = vadd.f32 %v826, %v923
        %v945 = vadd.f32 %v827, %v925
        %v946 = vadd.f32 %v828, %v928
        %v947 = vadd.f32 %v829, %v930
        %v948 = vld [vmem:[%s711 + $0x2] sm:$0xff]
        %v949 = vld [vmem:[%s711 + $0xa] sm:$0xff]
        %v950 = vld [vmem:[%s711 + $0x1a] sm:$0xff]
        %v951 = vld [vmem:[%s711 + $0x22] sm:$0xff]
        %v952 = vld [vmem:[%s711 + $0x32] sm:$0xff]
        %v953 = vld [vmem:[%s711 + $0x3a] sm:$0xff]
        %v954 = vld [vmem:[%s711 + $0x4a] sm:$0xff]
        %v955 = vld [vmem:[%s711 + $0x52] sm:$0xff]
        %v956 = vld [vmem:[%s711 + $0x62] sm:$0xff]
        %v957 = vld [vmem:[%s711 + $0x6a] sm:$0xff]
        %v958 = vld [vmem:[%s711 + $0x7a] sm:$0xff]
        %v959 = vld [vmem:[%s711 + $0x82] sm:$0xff]
        %v960 = vld [vmem:[%s711 + $0x92] sm:$0xff]
        %v961 = vld [vmem:[%s711 + $0x9a] sm:$0xff]
        %v962 = vld [vmem:[%s711 + $0xaa] sm:$0xff]
        %v963 = vld [vmem:[%s711 + $0xb2] sm:$0xff]
        %v964 = vpack.c.bf16 %v949, %v948
        %v965 = vpack.c.bf16 %v951, %v950
        %v966 = vpack.c.bf16 %v953, %v952
        %v967 = vpack.c.bf16 %v955, %v954
        %v968 = vpack.c.bf16 %v957, %v956
        %v969 = vpack.c.bf16 %v959, %v958
        %v970 = vpack.c.bf16 %v961, %v960
        %v971 = vpack.c.bf16 %v963, %v962
        %s972 = scalar_lea.vmem %s1, 10
        %v973 = vld [vmem:[%s972] sm:$0x3]
        %v975 = vsel %vm439, %v964, 0
        %v978 = vsel %vm439, %v965, 0
        %v981 = vsel %vm439, %v966, 0
        %v984 = vsel %vm439, %v967, 0
        %v987 = vsel %vm439, %v968, 0
        %v990 = vsel %vm439, %v969, 0
        %v993 = vsel %vm439, %v970, 0
        %v996 = vsel %vm439, %v971, 0
        %v999 = vsel %vm464, %v973, 0
        %1001 = vmatpush.bf16.msra.mxu0 0
        %1002 = vmatpush.bf16.msra.mxu0 0
        %1003 = vmatpush.bf16.msra.mxu0 0
        %1004 = vmatpush.bf16.msra.mxu0 0
        %1005 = vmatpush.bf16.msra.mxu0 0
        %1006 = vmatpush.bf16.msra.mxu0 0
        %1007 = vmatpush.bf16.msra.mxu0 0
        %1008 = vmatpush.bf16.msra.mxu0 %v999
        %1009 = vmatmul.bf16.gmra.mxu0 %v975
        %v1010 = vpop.f32.mrf.mxu0
        %v1011 = vadd.f32 0.0, %v1010
        %v1012 = vpop.f32.mrf.mxu0
        %v1013 = vadd.f32 0.0, %v1012
        %1014 = vmatmul.bf16.gmra.mxu0 %v978
        %v1015 = vpop.f32.mrf.mxu0
        %v1016 = vadd.f32 0.0, %v1015
        %v1017 = vpop.f32.mrf.mxu0
        %v1018 = vadd.f32 0.0, %v1017
        %1019 = vmatmul.bf16.gmra.mxu0 %v981
        %v1020 = vpop.f32.mrf.mxu0
        %v1021 = vadd.f32 0.0, %v1020
        %v1022 = vpop.f32.mrf.mxu0
        %v1023 = vadd.f32 0.0, %v1022
        %1024 = vmatmul.bf16.gmra.mxu0 %v984
        %v1025 = vpop.f32.mrf.mxu0
        %v1026 = vadd.f32 0.0, %v1025
        %v1027 = vpop.f32.mrf.mxu0
        %v1028 = vadd.f32 0.0, %v1027
        %1029 = vmatmul.bf16.gmra.mxu0 %v987
        %v1030 = vpop.f32.mrf.mxu0
        %v1031 = vadd.f32 0.0, %v1030
        %v1032 = vpop.f32.mrf.mxu0
        %v1033 = vadd.f32 0.0, %v1032
        %1034 = vmatmul.bf16.gmra.mxu0 %v990
        %v1035 = vpop.f32.mrf.mxu0
        %v1036 = vadd.f32 0.0, %v1035
        %v1037 = vpop.f32.mrf.mxu0
        %v1038 = vadd.f32 0.0, %v1037
        %1039 = vmatmul.bf16.gmra.mxu0 %v993
        %v1040 = vpop.f32.mrf.mxu0
        %v1041 = vadd.f32 0.0, %v1040
        %v1042 = vpop.f32.mrf.mxu0
        %v1043 = vadd.f32 0.0, %v1042
        %1044 = vmatmul.bf16.gmra.mxu0 %v996
        %v1045 = vpop.f32.mrf.mxu0
        %v1046 = vadd.f32 0.0, %v1045
        %v1047 = vpop.f32.mrf.mxu0
        %v1048 = vadd.f32 0.0, %v1047
        %1049 = vdwg.mxu0
        %v1050 = vadd.f32 %v932, %v1011
        %v1051 = vadd.f32 %v933, %v1013
        %v1052 = vadd.f32 %v934, %v1016
        %v1053 = vadd.f32 %v935, %v1018
        %v1054 = vadd.f32 %v936, %v1021
        %v1055 = vadd.f32 %v937, %v1023
        %v1056 = vadd.f32 %v938, %v1026
        %v1057 = vadd.f32 %v939, %v1028
        %v1058 = vadd.f32 %v940, %v1031
        %v1059 = vadd.f32 %v941, %v1033
        %v1060 = vadd.f32 %v942, %v1036
        %v1061 = vadd.f32 %v943, %v1038
        %v1062 = vadd.f32 %v944, %v1041
        %v1063 = vadd.f32 %v945, %v1043
        %v1064 = vadd.f32 %v946, %v1046
        %v1065 = vadd.f32 %v947, %v1048
        %s1066 = scalar_lea.vmem %s329, 48
        %v1067 = vld [vmem:[%s1066] sm:$0xff]
        %v1068 = vld [vmem:[%s1066 + $0x8] sm:$0xff]
        %v1069 = vld [vmem:[%s1066 + $0x18] sm:$0xff]
        %v1070 = vld [vmem:[%s1066 + $0x20] sm:$0xff]
        %v1071 = vld [vmem:[%s1066 + $0x30] sm:$0xff]
        %v1072 = vld [vmem:[%s1066 + $0x38] sm:$0xff]
        %v1073 = vld [vmem:[%s1066 + $0x48] sm:$0xff]
        %v1074 = vld [vmem:[%s1066 + $0x50] sm:$0xff]
        %v1075 = vld [vmem:[%s1066 + $0x60] sm:$0xff]
        %v1076 = vld [vmem:[%s1066 + $0x68] sm:$0xff]
        %v1077 = vld [vmem:[%s1066 + $0x78] sm:$0xff]
        %v1078 = vld [vmem:[%s1066 + $0x80] sm:$0xff]
        %v1079 = vld [vmem:[%s1066 + $0x90] sm:$0xff]
        %v1080 = vld [vmem:[%s1066 + $0x98] sm:$0xff]
        %v1081 = vld [vmem:[%s1066 + $0xa8] sm:$0xff]
        %v1082 = vld [vmem:[%s1066 + $0xb0] sm:$0xff]
        %v1083 = vpack.c.bf16 %v1068, %v1067
        %v1084 = vpack.c.bf16 %v1070, %v1069
        %v1085 = vpack.c.bf16 %v1072, %v1071
        %v1086 = vpack.c.bf16 %v1074, %v1073
        %v1087 = vpack.c.bf16 %v1076, %v1075
        %v1088 = vpack.c.bf16 %v1078, %v1077
        %v1089 = vpack.c.bf16 %v1080, %v1079
        %v1090 = vpack.c.bf16 %v1082, %v1081
        %s1091 = scalar_lea.vmem %s1, 12
        %v1092 = vld [vmem:[%s1091] sm:$0x3]
        %v1094 = vsel %vm439, %v1083, 0
        %v1097 = vsel %vm439, %v1084, 0
        %v1100 = vsel %vm439, %v1085, 0
        %v1103 = vsel %vm439, %v1086, 0
        %v1106 = vsel %vm439, %v1087, 0
        %v1109 = vsel %vm439, %v1088, 0
        %v1112 = vsel %vm439, %v1089, 0
        %v1115 = vsel %vm439, %v1090, 0
        %v1118 = vsel %vm464, %v1092, 0
        %1120 = vmatpush.bf16.msra.mxu0 0
        %1121 = vmatpush.bf16.msra.mxu0 0
        %1122 = vmatpush.bf16.msra.mxu0 0
        %1123 = vmatpush.bf16.msra.mxu0 0
        %1124 = vmatpush.bf16.msra.mxu0 0
        %1125 = vmatpush.bf16.msra.mxu0 0
        %1126 = vmatpush.bf16.msra.mxu0 0
        %1127 = vmatpush.bf16.msra.mxu0 %v1118
        %1128 = vmatmul.bf16.gmra.mxu0 %v1094
        %v1129 = vpop.f32.mrf.mxu0
        %v1130 = vadd.f32 0.0, %v1129
        %v1131 = vpop.f32.mrf.mxu0
        %v1132 = vadd.f32 0.0, %v1131
        %1133 = vmatmul.bf16.gmra.mxu0 %v1097
        %v1134 = vpop.f32.mrf.mxu0
        %v1135 = vadd.f32 0.0, %v1134
        %v1136 = vpop.f32.mrf.mxu0
        %v1137 = vadd.f32 0.0, %v1136
        %1138 = vmatmul.bf16.gmra.mxu0 %v1100
        %v1139 = vpop.f32.mrf.mxu0
        %v1140 = vadd.f32 0.0, %v1139
        %v1141 = vpop.f32.mrf.mxu0
        %v1142 = vadd.f32 0.0, %v1141
        %1143 = vmatmul.bf16.gmra.mxu0 %v1103
        %v1144 = vpop.f32.mrf.mxu0
        %v1145 = vadd.f32 0.0, %v1144
        %v1146 = vpop.f32.mrf.mxu0
        %v1147 = vadd.f32 0.0, %v1146
        %1148 = vmatmul.bf16.gmra.mxu0 %v1106
        %v1149 = vpop.f32.mrf.mxu0
        %v1150 = vadd.f32 0.0, %v1149
        %v1151 = vpop.f32.mrf.mxu0
        %v1152 = vadd.f32 0.0, %v1151
        %1153 = vmatmul.bf16.gmra.mxu0 %v1109
        %v1154 = vpop.f32.mrf.mxu0
        %v1155 = vadd.f32 0.0, %v1154
        %v1156 = vpop.f32.mrf.mxu0
        %v1157 = vadd.f32 0.0, %v1156
        %1158 = vmatmul.bf16.gmra.mxu0 %v1112
        %v1159 = vpop.f32.mrf.mxu0
        %v1160 = vadd.f32 0.0, %v1159
        %v1161 = vpop.f32.mrf.mxu0
        %v1162 = vadd.f32 0.0, %v1161
        %1163 = vmatmul.bf16.gmra.mxu0 %v1115
        %v1164 = vpop.f32.mrf.mxu0
        %v1165 = vadd.f32 0.0, %v1164
        %v1166 = vpop.f32.mrf.mxu0
        %v1167 = vadd.f32 0.0, %v1166
        %1168 = vdwg.mxu0
        %v1169 = vadd.f32 %v1050, %v1130
        %v1170 = vadd.f32 %v1051, %v1132
        %v1171 = vadd.f32 %v1052, %v1135
        %v1172 = vadd.f32 %v1053, %v1137
        %v1173 = vadd.f32 %v1054, %v1140
        %v1174 = vadd.f32 %v1055, %v1142
        %v1175 = vadd.f32 %v1056, %v1145
        %v1176 = vadd.f32 %v1057, %v1147
        %v1177 = vadd.f32 %v1058, %v1150
        %v1178 = vadd.f32 %v1059, %v1152
        %v1179 = vadd.f32 %v1060, %v1155
        %v1180 = vadd.f32 %v1061, %v1157
        %v1181 = vadd.f32 %v1062, %v1160
        %v1182 = vadd.f32 %v1063, %v1162
        %v1183 = vadd.f32 %v1064, %v1165
        %v1184 = vadd.f32 %v1065, %v1167
        %v1185 = vld [vmem:[%s1066 + $0x1] sm:$0xff]
        %v1186 = vld [vmem:[%s1066 + $0x9] sm:$0xff]
        %v1187 = vld [vmem:[%s1066 + $0x19] sm:$0xff]
        %v1188 = vld [vmem:[%s1066 + $0x21] sm:$0xff]
        %v1189 = vld [vmem:[%s1066 + $0x31] sm:$0xff]
        %v1190 = vld [vmem:[%s1066 + $0x39] sm:$0xff]
        %v1191 = vld [vmem:[%s1066 + $0x49] sm:$0xff]
        %v1192 = vld [vmem:[%s1066 + $0x51] sm:$0xff]
        %v1193 = vld [vmem:[%s1066 + $0x61] sm:$0xff]
        %v1194 = vld [vmem:[%s1066 + $0x69] sm:$0xff]
        %v1195 = vld [vmem:[%s1066 + $0x79] sm:$0xff]
        %v1196 = vld [vmem:[%s1066 + $0x81] sm:$0xff]
        %v1197 = vld [vmem:[%s1066 + $0x91] sm:$0xff]
        %v1198 = vld [vmem:[%s1066 + $0x99] sm:$0xff]
        %v1199 = vld [vmem:[%s1066 + $0xa9] sm:$0xff]
        %v1200 = vld [vmem:[%s1066 + $0xb1] sm:$0xff]
        %v1201 = vpack.c.bf16 %v1186, %v1185
        %v1202 = vpack.c.bf16 %v1188, %v1187
        %v1203 = vpack.c.bf16 %v1190, %v1189
        %v1204 = vpack.c.bf16 %v1192, %v1191
        %v1205 = vpack.c.bf16 %v1194, %v1193
        %v1206 = vpack.c.bf16 %v1196, %v1195
        %v1207 = vpack.c.bf16 %v1198, %v1197
        %v1208 = vpack.c.bf16 %v1200, %v1199
        %s1209 = scalar_lea.vmem %s1, 14
        %v1210 = vld [vmem:[%s1209] sm:$0x3]
        %v1212 = vsel %vm439, %v1201, 0
        %v1215 = vsel %vm439, %v1202, 0
        %v1218 = vsel %vm439, %v1203, 0
        %v1221 = vsel %vm439, %v1204, 0
        %v1224 = vsel %vm439, %v1205, 0
        %v1227 = vsel %vm439, %v1206, 0
        %v1230 = vsel %vm439, %v1207, 0
        %v1233 = vsel %vm439, %v1208, 0
        %v1236 = vsel %vm464, %v1210, 0
        %1238 = vmatpush.bf16.msra.mxu0 0
        %1239 = vmatpush.bf16.msra.mxu0 0
        %1240 = vmatpush.bf16.msra.mxu0 0
        %1241 = vmatpush.bf16.msra.mxu0 0
        %1242 = vmatpush.bf16.msra.mxu0 0
        %1243 = vmatpush.bf16.msra.mxu0 0
        %1244 = vmatpush.bf16.msra.mxu0 0
        %1245 = vmatpush.bf16.msra.mxu0 %v1236
        %1246 = vmatmul.bf16.gmra.mxu0 %v1212
        %v1247 = vpop.f32.mrf.mxu0
        %v1248 = vadd.f32 0.0, %v1247
        %v1249 = vpop.f32.mrf.mxu0
        %v1250 = vadd.f32 0.0, %v1249
        %1251 = vmatmul.bf16.gmra.mxu0 %v1215
        %v1252 = vpop.f32.mrf.mxu0
        %v1253 = vadd.f32 0.0, %v1252
        %v1254 = vpop.f32.mrf.mxu0
        %v1255 = vadd.f32 0.0, %v1254
        %1256 = vmatmul.bf16.gmra.mxu0 %v1218
        %v1257 = vpop.f32.mrf.mxu0
        %v1258 = vadd.f32 0.0, %v1257
        %v1259 = vpop.f32.mrf.mxu0
        %v1260 = vadd.f32 0.0, %v1259
        %1261 = vmatmul.bf16.gmra.mxu0 %v1221
        %v1262 = vpop.f32.mrf.mxu0
        %v1263 = vadd.f32 0.0, %v1262
        %v1264 = vpop.f32.mrf.mxu0
        %v1265 = vadd.f32 0.0, %v1264
        %1266 = vmatmul.bf16.gmra.mxu0 %v1224
        %v1267 = vpop.f32.mrf.mxu0
        %v1268 = vadd.f32 0.0, %v1267
        %v1269 = vpop.f32.mrf.mxu0
        %v1270 = vadd.f32 0.0, %v1269
        %1271 = vmatmul.bf16.gmra.mxu0 %v1227
        %v1272 = vpop.f32.mrf.mxu0
        %v1273 = vadd.f32 0.0, %v1272
        %v1274 = vpop.f32.mrf.mxu0
        %v1275 = vadd.f32 0.0, %v1274
        %1276 = vmatmul.bf16.gmra.mxu0 %v1230
        %v1277 = vpop.f32.mrf.mxu0
        %v1278 = vadd.f32 0.0, %v1277
        %v1279 = vpop.f32.mrf.mxu0
        %v1280 = vadd.f32 0.0, %v1279
        %1281 = vmatmul.bf16.gmra.mxu0 %v1233
        %v1282 = vpop.f32.mrf.mxu0
        %v1283 = vadd.f32 0.0, %v1282
        %v1284 = vpop.f32.mrf.mxu0
        %v1285 = vadd.f32 0.0, %v1284
        %1286 = vdwg.mxu0
        %v1287 = vadd.f32 %v1169, %v1248
        %v1288 = vadd.f32 %v1170, %v1250
        %v1289 = vadd.f32 %v1171, %v1253
        %v1290 = vadd.f32 %v1172, %v1255
        %v1291 = vadd.f32 %v1173, %v1258
        %v1292 = vadd.f32 %v1174, %v1260
        %v1293 = vadd.f32 %v1175, %v1263
        %v1294 = vadd.f32 %v1176, %v1265
        %v1295 = vadd.f32 %v1177, %v1268
        %v1296 = vadd.f32 %v1178, %v1270
        %v1297 = vadd.f32 %v1179, %v1273
        %v1298 = vadd.f32 %v1180, %v1275
        %v1299 = vadd.f32 %v1181, %v1278
        %v1300 = vadd.f32 %v1182, %v1280
        %v1301 = vadd.f32 %v1183, %v1283
        %v1302 = vadd.f32 %v1184, %v1285
        %v1303 = vld [vmem:[%s1066 + $0x2] sm:$0xff]
        %v1304 = vld [vmem:[%s1066 + $0xa] sm:$0xff]
        %v1305 = vld [vmem:[%s1066 + $0x1a] sm:$0xff]
        %v1306 = vld [vmem:[%s1066 + $0x22] sm:$0xff]
        %v1307 = vld [vmem:[%s1066 + $0x32] sm:$0xff]
        %v1308 = vld [vmem:[%s1066 + $0x3a] sm:$0xff]
        %v1309 = vld [vmem:[%s1066 + $0x4a] sm:$0xff]
        %v1310 = vld [vmem:[%s1066 + $0x52] sm:$0xff]
        %v1311 = vld [vmem:[%s1066 + $0x62] sm:$0xff]
        %v1312 = vld [vmem:[%s1066 + $0x6a] sm:$0xff]
        %v1313 = vld [vmem:[%s1066 + $0x7a] sm:$0xff]
        %v1314 = vld [vmem:[%s1066 + $0x82] sm:$0xff]
        %v1315 = vld [vmem:[%s1066 + $0x92] sm:$0xff]
        %v1316 = vld [vmem:[%s1066 + $0x9a] sm:$0xff]
        %v1317 = vld [vmem:[%s1066 + $0xaa] sm:$0xff]
        %v1318 = vld [vmem:[%s1066 + $0xb2] sm:$0xff]
        %v1319 = vpack.c.bf16 %v1304, %v1303
        %v1320 = vpack.c.bf16 %v1306, %v1305
        %v1321 = vpack.c.bf16 %v1308, %v1307
        %v1322 = vpack.c.bf16 %v1310, %v1309
        %v1323 = vpack.c.bf16 %v1312, %v1311
        %v1324 = vpack.c.bf16 %v1314, %v1313
        %v1325 = vpack.c.bf16 %v1316, %v1315
        %v1326 = vpack.c.bf16 %v1318, %v1317
        %s1327 = scalar_lea.vmem %s1, 16
        %v1328 = vld [vmem:[%s1327] sm:$0x3]
        %v1330 = vsel %vm439, %v1319, 0
        %v1333 = vsel %vm439, %v1320, 0
        %v1336 = vsel %vm439, %v1321, 0
        %v1339 = vsel %vm439, %v1322, 0
        %v1342 = vsel %vm439, %v1323, 0
        %v1345 = vsel %vm439, %v1324, 0
        %v1348 = vsel %vm439, %v1325, 0
        %v1351 = vsel %vm439, %v1326, 0
        %v1354 = vsel %vm464, %v1328, 0
        %1356 = vmatpush.bf16.msra.mxu0 0
        %1357 = vmatpush.bf16.msra.mxu0 0
        %1358 = vmatpush.bf16.msra.mxu0 0
        %1359 = vmatpush.bf16.msra.mxu0 0
        %1360 = vmatpush.bf16.msra.mxu0 0
        %1361 = vmatpush.bf16.msra.mxu0 0
        %1362 = vmatpush.bf16.msra.mxu0 0
        %1363 = vmatpush.bf16.msra.mxu0 %v1354
        %1364 = vmatmul.bf16.gmra.mxu0 %v1330
        %v1365 = vpop.f32.mrf.mxu0
        %v1366 = vadd.f32 0.0, %v1365
        %v1367 = vpop.f32.mrf.mxu0
        %v1368 = vadd.f32 0.0, %v1367
        %1369 = vmatmul.bf16.gmra.mxu0 %v1333
        %v1370 = vpop.f32.mrf.mxu0
        %v1371 = vadd.f32 0.0, %v1370
        %v1372 = vpop.f32.mrf.mxu0
        %v1373 = vadd.f32 0.0, %v1372
        %1374 = vmatmul.bf16.gmra.mxu0 %v1336
        %v1375 = vpop.f32.mrf.mxu0
        %v1376 = vadd.f32 0.0, %v1375
        %v1377 = vpop.f32.mrf.mxu0
        %v1378 = vadd.f32 0.0, %v1377
        %1379 = vmatmul.bf16.gmra.mxu0 %v1339
        %v1380 = vpop.f32.mrf.mxu0
        %v1381 = vadd.f32 0.0, %v1380
        %v1382 = vpop.f32.mrf.mxu0
        %v1383 = vadd.f32 0.0, %v1382
        %1384 = vmatmul.bf16.gmra.mxu0 %v1342
        %v1385 = vpop.f32.mrf.mxu0
        %v1386 = vadd.f32 0.0, %v1385
        %v1387 = vpop.f32.mrf.mxu0
        %v1388 = vadd.f32 0.0, %v1387
        %1389 = vmatmul.bf16.gmra.mxu0 %v1345
        %v1390 = vpop.f32.mrf.mxu0
        %v1391 = vadd.f32 0.0, %v1390
        %v1392 = vpop.f32.mrf.mxu0
        %v1393 = vadd.f32 0.0, %v1392
        %1394 = vmatmul.bf16.gmra.mxu0 %v1348
        %v1395 = vpop.f32.mrf.mxu0
        %v1396 = vadd.f32 0.0, %v1395
        %v1397 = vpop.f32.mrf.mxu0
        %v1398 = vadd.f32 0.0, %v1397
        %1399 = vmatmul.bf16.gmra.mxu0 %v1351
        %v1400 = vpop.f32.mrf.mxu0
        %v1401 = vadd.f32 0.0, %v1400
        %v1402 = vpop.f32.mrf.mxu0
        %v1403 = vadd.f32 0.0, %v1402
        %1404 = vdwg.mxu0
        %v1405 = vadd.f32 %v1287, %v1366
        %v1406 = vadd.f32 %v1288, %v1368
        %v1407 = vadd.f32 %v1289, %v1371
        %v1408 = vadd.f32 %v1290, %v1373
        %v1409 = vadd.f32 %v1291, %v1376
        %v1410 = vadd.f32 %v1292, %v1378
        %v1411 = vadd.f32 %v1293, %v1381
        %v1412 = vadd.f32 %v1294, %v1383
        %v1413 = vadd.f32 %v1295, %v1386
        %v1414 = vadd.f32 %v1296, %v1388
        %v1415 = vadd.f32 %v1297, %v1391
        %v1416 = vadd.f32 %v1298, %v1393
        %v1417 = vadd.f32 %v1299, %v1396
        %v1418 = vadd.f32 %v1300, %v1398
        %v1419 = vadd.f32 %v1301, %v1401
        %v1420 = vadd.f32 %v1302, %v1403
        %v1422 = vperm.slane %v387, 0
        %v1424 = vadd.f32 %v1405, %v1422
        %v1425 = vadd.f32 %v1406, %v1422
        %v1426 = vadd.f32 %v1407, %v1422
        %v1427 = vadd.f32 %v1408, %v1422
        %v1428 = vadd.f32 %v1409, %v1422
        %v1429 = vadd.f32 %v1410, %v1422
        %v1430 = vadd.f32 %v1411, %v1422
        %v1431 = vadd.f32 %v1412, %v1422
        %v1432 = vadd.f32 %v1413, %v1422
        %v1433 = vadd.f32 %v1414, %v1422
        %v1434 = vadd.f32 %v1415, %v1422
        %v1435 = vadd.f32 %v1416, %v1422
        %v1436 = vadd.f32 %v1417, %v1422
        %v1437 = vadd.f32 %v1418, %v1422
        %v1438 = vadd.f32 %v1419, %v1422
        %v1439 = vadd.f32 %v1420, %v1422
        %v1440 = vmax.f32 %v1424, 0.0
        %v1441 = vmax.f32 %v1425, 0.0
        %v1442 = vmax.f32 %v1426, 0.0
        %v1443 = vmax.f32 %v1427, 0.0
        %v1444 = vmax.f32 %v1428, 0.0
        %v1445 = vmax.f32 %v1429, 0.0
        %v1446 = vmax.f32 %v1430, 0.0
        %v1447 = vmax.f32 %v1431, 0.0
        %v1448 = vmax.f32 %v1432, 0.0
        %v1449 = vmax.f32 %v1433, 0.0
        %v1450 = vmax.f32 %v1434, 0.0
        %v1451 = vmax.f32 %v1435, 0.0
        %v1452 = vmax.f32 %v1436, 0.0
        %v1453 = vmax.f32 %v1437, 0.0
        %v1454 = vmax.f32 %v1438, 0.0
        %v1455 = vmax.f32 %v1439, 0.0
        %s1456 = scalar_lea.vmem [#allocation2], 24
        %1457 = vst.msk [vmem:[%s1456 + $0x1] sm:$0xff] %vm331, %v1440
        %1458 = vst.msk [vmem:[%s1456 + $0x9] sm:$0xff] %vm331, %v1441
        %1459 = vst.msk [vmem:[%s1456 + $0x19] sm:$0xff] %vm331, %v1442
        %1460 = vst.msk [vmem:[%s1456 + $0x21] sm:$0xff] %vm331, %v1443
        %1461 = vst.msk [vmem:[%s1456 + $0x31] sm:$0xff] %vm331, %v1444
        %1462 = vst.msk [vmem:[%s1456 + $0x39] sm:$0xff] %vm331, %v1445
        %1463 = vst.msk [vmem:[%s1456 + $0x49] sm:$0xff] %vm331, %v1446
        %1464 = vst.msk [vmem:[%s1456 + $0x51] sm:$0xff] %vm331, %v1447
        %1465 = vst.msk [vmem:[%s1456 + $0x61] sm:$0xff] %vm331, %v1448
        %1466 = vst.msk [vmem:[%s1456 + $0x69] sm:$0xff] %vm331, %v1449
        %1467 = vst.msk [vmem:[%s1456 + $0x79] sm:$0xff] %vm331, %v1450
        %1468 = vst.msk [vmem:[%s1456 + $0x81] sm:$0xff] %vm331, %v1451
        %1469 = vst.msk [vmem:[%s1456 + $0x91] sm:$0xff] %vm331, %v1452
        %1470 = vst.msk [vmem:[%s1456 + $0x99] sm:$0xff] %vm331, %v1453
        %1471 = vst.msk [vmem:[%s1456 + $0xa9] sm:$0xff] %vm331, %v1454
        %1472 = vst.msk [vmem:[%s1456 + $0xb1] sm:$0xff] %vm331, %v1455
        %s1473 = scalar_lea.vmem %s329, 192
        %v1474 = vld [vmem:[%s1473] sm:$0xff]
        %v1475 = vld [vmem:[%s1473 + $0x8] sm:$0xff]
        %v1476 = vld [vmem:[%s1473 + $0x18] sm:$0xff]
        %v1477 = vld [vmem:[%s1473 + $0x20] sm:$0xff]
        %v1478 = vld [vmem:[%s1473 + $0x30] sm:$0xff]
        %v1479 = vld [vmem:[%s1473 + $0x38] sm:$0xff]
        %v1480 = vld [vmem:[%s1473 + $0x48] sm:$0xff]
        %v1481 = vld [vmem:[%s1473 + $0x50] sm:$0xff]
        %v1482 = vld [vmem:[%s1473 + $0x60] sm:$0xff]
        %v1483 = vld [vmem:[%s1473 + $0x68] sm:$0xff]
        %v1484 = vld [vmem:[%s1473 + $0x78] sm:$0xff]
        %v1485 = vld [vmem:[%s1473 + $0x80] sm:$0xff]
        %v1486 = vld [vmem:[%s1473 + $0x90] sm:$0xff]
        %v1487 = vld [vmem:[%s1473 + $0x98] sm:$0xff]
        %v1488 = vld [vmem:[%s1473 + $0xa8] sm:$0xff]
        %v1489 = vld [vmem:[%s1473 + $0xb0] sm:$0xff]
        %v1490 = vpack.c.bf16 %v1475, %v1474
        %v1491 = vpack.c.bf16 %v1477, %v1476
        %v1492 = vpack.c.bf16 %v1479, %v1478
        %v1493 = vpack.c.bf16 %v1481, %v1480
        %v1494 = vpack.c.bf16 %v1483, %v1482
        %v1495 = vpack.c.bf16 %v1485, %v1484
        %v1496 = vpack.c.bf16 %v1487, %v1486
        %v1497 = vpack.c.bf16 %v1489, %v1488
        %v1498 = vld [vmem:[%s1] sm:$0x3]
        %v1499 = vld [vmem:[%s1473 + $0x1] sm:$0xff]
        %v1500 = vld [vmem:[%s1473 + $0x9] sm:$0xff]
        %v1501 = vld [vmem:[%s1473 + $0x19] sm:$0xff]
        %v1502 = vld [vmem:[%s1473 + $0x21] sm:$0xff]
        %v1503 = vld [vmem:[%s1473 + $0x31] sm:$0xff]
        %v1504 = vld [vmem:[%s1473 + $0x39] sm:$0xff]
        %v1505 = vld [vmem:[%s1473 + $0x49] sm:$0xff]
        %v1506 = vld [vmem:[%s1473 + $0x51] sm:$0xff]
        %v1507 = vld [vmem:[%s1473 + $0x61] sm:$0xff]
        %v1508 = vld [vmem:[%s1473 + $0x69] sm:$0xff]
        %v1509 = vld [vmem:[%s1473 + $0x79] sm:$0xff]
        %v1510 = vld [vmem:[%s1473 + $0x81] sm:$0xff]
        %v1511 = vld [vmem:[%s1473 + $0x91] sm:$0xff]
        %v1512 = vld [vmem:[%s1473 + $0x99] sm:$0xff]
        %v1513 = vld [vmem:[%s1473 + $0xa9] sm:$0xff]
        %v1514 = vld [vmem:[%s1473 + $0xb1] sm:$0xff]
        %v1515 = vpack.c.bf16 %v1500, %v1499
        %v1516 = vpack.c.bf16 %v1502, %v1501
        %v1517 = vpack.c.bf16 %v1504, %v1503
        %v1518 = vpack.c.bf16 %v1506, %v1505
        %v1519 = vpack.c.bf16 %v1508, %v1507
        %v1520 = vpack.c.bf16 %v1510, %v1509
        %v1521 = vpack.c.bf16 %v1512, %v1511
        %v1522 = vpack.c.bf16 %v1514, %v1513
        %v1523 = vld [vmem:[%s437] sm:$0x3]
        %v1525 = vsel %vm439, %v1515, 0
        %v1528 = vsel %vm439, %v1516, 0
        %v1531 = vsel %vm439, %v1517, 0
        %v1534 = vsel %vm439, %v1518, 0
        %v1537 = vsel %vm439, %v1519, 0
        %v1540 = vsel %vm439, %v1520, 0
        %v1543 = vsel %vm439, %v1521, 0
        %v1546 = vsel %vm439, %v1522, 0
        %v1549 = vsel %vm464, %v1523, 0
        %1551 = vmatpush.bf16.msra.mxu0 0
        %1552 = vmatpush.bf16.msra.mxu0 0
        %1553 = vmatpush.bf16.msra.mxu0 0
        %1554 = vmatpush.bf16.msra.mxu0 0
        %1555 = vmatpush.bf16.msra.mxu0 0
        %1556 = vmatpush.bf16.msra.mxu0 0
        %1557 = vmatpush.bf16.msra.mxu0 0
        %1558 = vmatpush.bf16.msra.mxu0 %v1549
        %1559 = vmatmul.bf16.gmra.mxu0 %v1525
        %v1560 = vpop.f32.mrf.mxu0
        %v1561 = vadd.f32 0.0, %v1560
        %v1562 = vpop.f32.mrf.mxu0
        %v1563 = vadd.f32 0.0, %v1562
        %1564 = vmatmul.bf16.gmra.mxu0 %v1528
        %v1565 = vpop.f32.mrf.mxu0
        %v1566 = vadd.f32 0.0, %v1565
        %v1567 = vpop.f32.mrf.mxu0
        %v1568 = vadd.f32 0.0, %v1567
        %1569 = vmatmul.bf16.gmra.mxu0 %v1531
        %v1570 = vpop.f32.mrf.mxu0
        %v1571 = vadd.f32 0.0, %v1570
        %v1572 = vpop.f32.mrf.mxu0
        %v1573 = vadd.f32 0.0, %v1572
        %1574 = vmatmul.bf16.gmra.mxu0 %v1534
        %v1575 = vpop.f32.mrf.mxu0
        %v1576 = vadd.f32 0.0, %v1575
        %v1577 = vpop.f32.mrf.mxu0
        %v1578 = vadd.f32 0.0, %v1577
        %1579 = vmatmul.bf16.gmra.mxu0 %v1537
        %v1580 = vpop.f32.mrf.mxu0
        %v1581 = vadd.f32 0.0, %v1580
        %v1582 = vpop.f32.mrf.mxu0
        %v1583 = vadd.f32 0.0, %v1582
        %1584 = vmatmul.bf16.gmra.mxu0 %v1540
        %v1585 = vpop.f32.mrf.mxu0
        %v1586 = vadd.f32 0.0, %v1585
        %v1587 = vpop.f32.mrf.mxu0
        %v1588 = vadd.f32 0.0, %v1587
        %1589 = vmatmul.bf16.gmra.mxu0 %v1543
        %v1590 = vpop.f32.mrf.mxu0
        %v1591 = vadd.f32 0.0, %v1590
        %v1592 = vpop.f32.mrf.mxu0
        %v1593 = vadd.f32 0.0, %v1592
        %1594 = vmatmul.bf16.gmra.mxu0 %v1546
        %v1595 = vpop.f32.mrf.mxu0
        %v1596 = vadd.f32 0.0, %v1595
        %v1597 = vpop.f32.mrf.mxu0
        %v1598 = vadd.f32 0.0, %v1597
        %1599 = vdwg.mxu0
        %v1601 = vsel %vm439, %v1490, 0
        %v1604 = vsel %vm439, %v1491, 0
        %v1607 = vsel %vm439, %v1492, 0
        %v1610 = vsel %vm439, %v1493, 0
        %v1613 = vsel %vm439, %v1494, 0
        %v1616 = vsel %vm439, %v1495, 0
        %v1619 = vsel %vm439, %v1496, 0
        %v1622 = vsel %vm439, %v1497, 0
        %v1625 = vsel %vm464, %v1498, 0
        %1627 = vmatpush.bf16.msra.mxu0 0
        %1628 = vmatpush.bf16.msra.mxu0 0
        %1629 = vmatpush.bf16.msra.mxu0 0
        %1630 = vmatpush.bf16.msra.mxu0 0
        %1631 = vmatpush.bf16.msra.mxu0 0
        %1632 = vmatpush.bf16.msra.mxu0 0
        %1633 = vmatpush.bf16.msra.mxu0 0
        %1634 = vmatpush.bf16.msra.mxu0 %v1625
        %1635 = vmatmul.bf16.gmra.mxu0 %v1601
        %v1636 = vpop.f32.mrf.mxu0
        %v1637 = vadd.f32 %v1561, %v1636
        %v1638 = vpop.f32.mrf.mxu0
        %v1639 = vadd.f32 %v1563, %v1638
        %1640 = vmatmul.bf16.gmra.mxu0 %v1604
        %v1641 = vpop.f32.mrf.mxu0
        %v1642 = vadd.f32 %v1566, %v1641
        %v1643 = vpop.f32.mrf.mxu0
        %v1644 = vadd.f32 %v1568, %v1643
        %1645 = vmatmul.bf16.gmra.mxu0 %v1607
        %v1646 = vpop.f32.mrf.mxu0
        %v1647 = vadd.f32 %v1571, %v1646
        %v1648 = vpop.f32.mrf.mxu0
        %v1649 = vadd.f32 %v1573, %v1648
        %1650 = vmatmul.bf16.gmra.mxu0 %v1610
        %v1651 = vpop.f32.mrf.mxu0
        %v1652 = vadd.f32 %v1576, %v1651
        %v1653 = vpop.f32.mrf.mxu0
        %v1654 = vadd.f32 %v1578, %v1653
        %1655 = vmatmul.bf16.gmra.mxu0 %v1613
        %v1656 = vpop.f32.mrf.mxu0
        %v1657 = vadd.f32 %v1581, %v1656
        %v1658 = vpop.f32.mrf.mxu0
        %v1659 = vadd.f32 %v1583, %v1658
        %1660 = vmatmul.bf16.gmra.mxu0 %v1616
        %v1661 = vpop.f32.mrf.mxu0
        %v1662 = vadd.f32 %v1586, %v1661
        %v1663 = vpop.f32.mrf.mxu0
        %v1664 = vadd.f32 %v1588, %v1663
        %1665 = vmatmul.bf16.gmra.mxu0 %v1619
        %v1666 = vpop.f32.mrf.mxu0
        %v1667 = vadd.f32 %v1591, %v1666
        %v1668 = vpop.f32.mrf.mxu0
        %v1669 = vadd.f32 %v1593, %v1668
        %1670 = vmatmul.bf16.gmra.mxu0 %v1622
        %v1671 = vpop.f32.mrf.mxu0
        %v1672 = vadd.f32 %v1596, %v1671
        %v1673 = vpop.f32.mrf.mxu0
        %v1674 = vadd.f32 %v1598, %v1673
        %1675 = vdwg.mxu0
        %v1676 = vld [vmem:[%s1473 + $0x2] sm:$0xff]
        %v1677 = vld [vmem:[%s1473 + $0xa] sm:$0xff]
        %v1678 = vld [vmem:[%s1473 + $0x1a] sm:$0xff]
        %v1679 = vld [vmem:[%s1473 + $0x22] sm:$0xff]
        %v1680 = vld [vmem:[%s1473 + $0x32] sm:$0xff]
        %v1681 = vld [vmem:[%s1473 + $0x3a] sm:$0xff]
        %v1682 = vld [vmem:[%s1473 + $0x4a] sm:$0xff]
        %v1683 = vld [vmem:[%s1473 + $0x52] sm:$0xff]
        %v1684 = vld [vmem:[%s1473 + $0x62] sm:$0xff]
        %v1685 = vld [vmem:[%s1473 + $0x6a] sm:$0xff]
        %v1686 = vld [vmem:[%s1473 + $0x7a] sm:$0xff]
        %v1687 = vld [vmem:[%s1473 + $0x82] sm:$0xff]
        %v1688 = vld [vmem:[%s1473 + $0x92] sm:$0xff]
        %v1689 = vld [vmem:[%s1473 + $0x9a] sm:$0xff]
        %v1690 = vld [vmem:[%s1473 + $0xaa] sm:$0xff]
        %v1691 = vld [vmem:[%s1473 + $0xb2] sm:$0xff]
        %v1692 = vpack.c.bf16 %v1677, %v1676
        %v1693 = vpack.c.bf16 %v1679, %v1678
        %v1694 = vpack.c.bf16 %v1681, %v1680
        %v1695 = vpack.c.bf16 %v1683, %v1682
        %v1696 = vpack.c.bf16 %v1685, %v1684
        %v1697 = vpack.c.bf16 %v1687, %v1686
        %v1698 = vpack.c.bf16 %v1689, %v1688
        %v1699 = vpack.c.bf16 %v1691, %v1690
        %v1700 = vld [vmem:[%s617] sm:$0x3]
        %v1702 = vsel %vm439, %v1692, 0
        %v1705 = vsel %vm439, %v1693, 0
        %v1708 = vsel %vm439, %v1694, 0
        %v1711 = vsel %vm439, %v1695, 0
        %v1714 = vsel %vm439, %v1696, 0
        %v1717 = vsel %vm439, %v1697, 0
        %v1720 = vsel %vm439, %v1698, 0
        %v1723 = vsel %vm439, %v1699, 0
        %v1726 = vsel %vm464, %v1700, 0
        %1728 = vmatpush.bf16.msra.mxu0 0
        %1729 = vmatpush.bf16.msra.mxu0 0
        %1730 = vmatpush.bf16.msra.mxu0 0
        %1731 = vmatpush.bf16.msra.mxu0 0
        %1732 = vmatpush.bf16.msra.mxu0 0
        %1733 = vmatpush.bf16.msra.mxu0 0
        %1734 = vmatpush.bf16.msra.mxu0 0
        %1735 = vmatpush.bf16.msra.mxu0 %v1726
        %1736 = vmatmul.bf16.gmra.mxu0 %v1702
        %v1737 = vpop.f32.mrf.mxu0
        %v1738 = vadd.f32 0.0, %v1737
        %v1739 = vpop.f32.mrf.mxu0
        %v1740 = vadd.f32 0.0, %v1739
        %1741 = vmatmul.bf16.gmra.mxu0 %v1705
        %v1742 = vpop.f32.mrf.mxu0
        %v1743 = vadd.f32 0.0, %v1742
        %v1744 = vpop.f32.mrf.mxu0
        %v1745 = vadd.f32 0.0, %v1744
        %1746 = vmatmul.bf16.gmra.mxu0 %v1708
        %v1747 = vpop.f32.mrf.mxu0
        %v1748 = vadd.f32 0.0, %v1747
        %v1749 = vpop.f32.mrf.mxu0
        %v1750 = vadd.f32 0.0, %v1749
        %1751 = vmatmul.bf16.gmra.mxu0 %v1711
        %v1752 = vpop.f32.mrf.mxu0
        %v1753 = vadd.f32 0.0, %v1752
        %v1754 = vpop.f32.mrf.mxu0
        %v1755 = vadd.f32 0.0, %v1754
        %1756 = vmatmul.bf16.gmra.mxu0 %v1714
        %v1757 = vpop.f32.mrf.mxu0
        %v1758 = vadd.f32 0.0, %v1757
        %v1759 = vpop.f32.mrf.mxu0
        %v1760 = vadd.f32 0.0, %v1759
        %1761 = vmatmul.bf16.gmra.mxu0 %v1717
        %v1762 = vpop.f32.mrf.mxu0
        %v1763 = vadd.f32 0.0, %v1762
        %v1764 = vpop.f32.mrf.mxu0
        %v1765 = vadd.f32 0.0, %v1764
        %1766 = vmatmul.bf16.gmra.mxu0 %v1720
        %v1767 = vpop.f32.mrf.mxu0
        %v1768 = vadd.f32 0.0, %v1767
        %v1769 = vpop.f32.mrf.mxu0
        %v1770 = vadd.f32 0.0, %v1769
        %1771 = vmatmul.bf16.gmra.mxu0 %v1723
        %v1772 = vpop.f32.mrf.mxu0
        %v1773 = vadd.f32 0.0, %v1772
        %v1774 = vpop.f32.mrf.mxu0
        %v1775 = vadd.f32 0.0, %v1774
        %1776 = vdwg.mxu0
        %v1777 = vadd.f32 %v1637, %v1738
        %v1778 = vadd.f32 %v1639, %v1740
        %v1779 = vadd.f32 %v1642, %v1743
        %v1780 = vadd.f32 %v1644, %v1745
        %v1781 = vadd.f32 %v1647, %v1748
        %v1782 = vadd.f32 %v1649, %v1750
        %v1783 = vadd.f32 %v1652, %v1753
        %v1784 = vadd.f32 %v1654, %v1755
        %v1785 = vadd.f32 %v1657, %v1758
        %v1786 = vadd.f32 %v1659, %v1760
        %v1787 = vadd.f32 %v1662, %v1763
        %v1788 = vadd.f32 %v1664, %v1765
        %v1789 = vadd.f32 %v1667, %v1768
        %v1790 = vadd.f32 %v1669, %v1770
        %v1791 = vadd.f32 %v1672, %v1773
        %v1792 = vadd.f32 %v1674, %v1775
        %s1793 = scalar_lea.vmem %s329, 216
        %v1794 = vld [vmem:[%s1793] sm:$0xff]
        %v1795 = vld [vmem:[%s1793 + $0x8] sm:$0xff]
        %v1796 = vld [vmem:[%s1793 + $0x18] sm:$0xff]
        %v1797 = vld [vmem:[%s1793 + $0x20] sm:$0xff]
        %v1798 = vld [vmem:[%s1793 + $0x30] sm:$0xff]
        %v1799 = vld [vmem:[%s1793 + $0x38] sm:$0xff]
        %v1800 = vld [vmem:[%s1793 + $0x48] sm:$0xff]
        %v1801 = vld [vmem:[%s1793 + $0x50] sm:$0xff]
        %v1802 = vld [vmem:[%s1793 + $0x60] sm:$0xff]
        %v1803 = vld [vmem:[%s1793 + $0x68] sm:$0xff]
        %v1804 = vld [vmem:[%s1793 + $0x78] sm:$0xff]
        %v1805 = vld [vmem:[%s1793 + $0x80] sm:$0xff]
        %v1806 = vld [vmem:[%s1793 + $0x90] sm:$0xff]
        %v1807 = vld [vmem:[%s1793 + $0x98] sm:$0xff]
        %v1808 = vld [vmem:[%s1793 + $0xa8] sm:$0xff]
        %v1809 = vld [vmem:[%s1793 + $0xb0] sm:$0xff]
        %v1810 = vpack.c.bf16 %v1795, %v1794
        %v1811 = vpack.c.bf16 %v1797, %v1796
        %v1812 = vpack.c.bf16 %v1799, %v1798
        %v1813 = vpack.c.bf16 %v1801, %v1800
        %v1814 = vpack.c.bf16 %v1803, %v1802
        %v1815 = vpack.c.bf16 %v1805, %v1804
        %v1816 = vpack.c.bf16 %v1807, %v1806
        %v1817 = vpack.c.bf16 %v1809, %v1808
        %v1818 = vld [vmem:[%s736] sm:$0x3]
        %v1820 = vsel %vm439, %v1810, 0
        %v1823 = vsel %vm439, %v1811, 0
        %v1826 = vsel %vm439, %v1812, 0
        %v1829 = vsel %vm439, %v1813, 0
        %v1832 = vsel %vm439, %v1814, 0
        %v1835 = vsel %vm439, %v1815, 0
        %v1838 = vsel %vm439, %v1816, 0
        %v1841 = vsel %vm439, %v1817, 0
        %v1844 = vsel %vm464, %v1818, 0
        %1846 = vmatpush.bf16.msra.mxu0 0
        %1847 = vmatpush.bf16.msra.mxu0 0
        %1848 = vmatpush.bf16.msra.mxu0 0
        %1849 = vmatpush.bf16.msra.mxu0 0
        %1850 = vmatpush.bf16.msra.mxu0 0
        %1851 = vmatpush.bf16.msra.mxu0 0
        %1852 = vmatpush.bf16.msra.mxu0 0
        %1853 = vmatpush.bf16.msra.mxu0 %v1844
        %1854 = vmatmul.bf16.gmra.mxu0 %v1820
        %v1855 = vpop.f32.mrf.mxu0
        %v1856 = vadd.f32 0.0, %v1855
        %v1857 = vpop.f32.mrf.mxu0
        %v1858 = vadd.f32 0.0, %v1857
        %1859 = vmatmul.bf16.gmra.mxu0 %v1823
        %v1860 = vpop.f32.mrf.mxu0
        %v1861 = vadd.f32 0.0, %v1860
        %v1862 = vpop.f32.mrf.mxu0
        %v1863 = vadd.f32 0.0, %v1862
        %1864 = vmatmul.bf16.gmra.mxu0 %v1826
        %v1865 = vpop.f32.mrf.mxu0
        %v1866 = vadd.f32 0.0, %v1865
        %v1867 = vpop.f32.mrf.mxu0
        %v1868 = vadd.f32 0.0, %v1867
        %1869 = vmatmul.bf16.gmra.mxu0 %v1829
        %v1870 = vpop.f32.mrf.mxu0
        %v1871 = vadd.f32 0.0, %v1870
        %v1872 = vpop.f32.mrf.mxu0
        %v1873 = vadd.f32 0.0, %v1872
        %1874 = vmatmul.bf16.gmra.mxu0 %v1832
        %v1875 = vpop.f32.mrf.mxu0
        %v1876 = vadd.f32 0.0, %v1875
        %v1877 = vpop.f32.mrf.mxu0
        %v1878 = vadd.f32 0.0, %v1877
        %1879 = vmatmul.bf16.gmra.mxu0 %v1835
        %v1880 = vpop.f32.mrf.mxu0
        %v1881 = vadd.f32 0.0, %v1880
        %v1882 = vpop.f32.mrf.mxu0
        %v1883 = vadd.f32 0.0, %v1882
        %1884 = vmatmul.bf16.gmra.mxu0 %v1838
        %v1885 = vpop.f32.mrf.mxu0
        %v1886 = vadd.f32 0.0, %v1885
        %v1887 = vpop.f32.mrf.mxu0
        %v1888 = vadd.f32 0.0, %v1887
        %1889 = vmatmul.bf16.gmra.mxu0 %v1841
        %v1890 = vpop.f32.mrf.mxu0
        %v1891 = vadd.f32 0.0, %v1890
        %v1892 = vpop.f32.mrf.mxu0
        %v1893 = vadd.f32 0.0, %v1892
        %1894 = vdwg.mxu0
        %v1895 = vadd.f32 %v1777, %v1856
        %v1896 = vadd.f32 %v1778, %v1858
        %v1897 = vadd.f32 %v1779, %v1861
        %v1898 = vadd.f32 %v1780, %v1863
        %v1899 = vadd.f32 %v1781, %v1866
        %v1900 = vadd.f32 %v1782, %v1868
        %v1901 = vadd.f32 %v1783, %v1871
        %v1902 = vadd.f32 %v1784, %v1873
        %v1903 = vadd.f32 %v1785, %v1876
        %v1904 = vadd.f32 %v1786, %v1878
        %v1905 = vadd.f32 %v1787, %v1881
        %v1906 = vadd.f32 %v1788, %v1883
        %v1907 = vadd.f32 %v1789, %v1886
        %v1908 = vadd.f32 %v1790, %v1888
        %v1909 = vadd.f32 %v1791, %v1891
        %v1910 = vadd.f32 %v1792, %v1893
        %v1911 = vld [vmem:[%s1793 + $0x1] sm:$0xff]
        %v1912 = vld [vmem:[%s1793 + $0x9] sm:$0xff]
        %v1913 = vld [vmem:[%s1793 + $0x19] sm:$0xff]
        %v1914 = vld [vmem:[%s1793 + $0x21] sm:$0xff]
        %v1915 = vld [vmem:[%s1793 + $0x31] sm:$0xff]
        %v1916 = vld [vmem:[%s1793 + $0x39] sm:$0xff]
        %v1917 = vld [vmem:[%s1793 + $0x49] sm:$0xff]
        %v1918 = vld [vmem:[%s1793 + $0x51] sm:$0xff]
        %v1919 = vld [vmem:[%s1793 + $0x61] sm:$0xff]
        %v1920 = vld [vmem:[%s1793 + $0x69] sm:$0xff]
        %v1921 = vld [vmem:[%s1793 + $0x79] sm:$0xff]
        %v1922 = vld [vmem:[%s1793 + $0x81] sm:$0xff]
        %v1923 = vld [vmem:[%s1793 + $0x91] sm:$0xff]
        %v1924 = vld [vmem:[%s1793 + $0x99] sm:$0xff]
        %v1925 = vld [vmem:[%s1793 + $0xa9] sm:$0xff]
        %v1926 = vld [vmem:[%s1793 + $0xb1] sm:$0xff]
        %v1927 = vpack.c.bf16 %v1912, %v1911
        %v1928 = vpack.c.bf16 %v1914, %v1913
        %v1929 = vpack.c.bf16 %v1916, %v1915
        %v1930 = vpack.c.bf16 %v1918, %v1917
        %v1931 = vpack.c.bf16 %v1920, %v1919
        %v1932 = vpack.c.bf16 %v1922, %v1921
        %v1933 = vpack.c.bf16 %v1924, %v1923
        %v1934 = vpack.c.bf16 %v1926, %v1925
        %v1935 = vld [vmem:[%s854] sm:$0x3]
        %v1937 = vsel %vm439, %v1927, 0
        %v1940 = vsel %vm439, %v1928, 0
        %v1943 = vsel %vm439, %v1929, 0
        %v1946 = vsel %vm439, %v1930, 0
        %v1949 = vsel %vm439, %v1931, 0
        %v1952 = vsel %vm439, %v1932, 0
        %v1955 = vsel %vm439, %v1933, 0
        %v1958 = vsel %vm439, %v1934, 0
        %v1961 = vsel %vm464, %v1935, 0
        %1963 = vmatpush.bf16.msra.mxu0 0
        %1964 = vmatpush.bf16.msra.mxu0 0
        %1965 = vmatpush.bf16.msra.mxu0 0
        %1966 = vmatpush.bf16.msra.mxu0 0
        %1967 = vmatpush.bf16.msra.mxu0 0
        %1968 = vmatpush.bf16.msra.mxu0 0
        %1969 = vmatpush.bf16.msra.mxu0 0
        %1970 = vmatpush.bf16.msra.mxu0 %v1961
        %1971 = vmatmul.bf16.gmra.mxu0 %v1937
        %v1972 = vpop.f32.mrf.mxu0
        %v1973 = vadd.f32 0.0, %v1972
        %v1974 = vpop.f32.mrf.mxu0
        %v1975 = vadd.f32 0.0, %v1974
        %1976 = vmatmul.bf16.gmra.mxu0 %v1940
        %v1977 = vpop.f32.mrf.mxu0
        %v1978 = vadd.f32 0.0, %v1977
        %v1979 = vpop.f32.mrf.mxu0
        %v1980 = vadd.f32 0.0, %v1979
        %1981 = vmatmul.bf16.gmra.mxu0 %v1943
        %v1982 = vpop.f32.mrf.mxu0
        %v1983 = vadd.f32 0.0, %v1982
        %v1984 = vpop.f32.mrf.mxu0
        %v1985 = vadd.f32 0.0, %v1984
        %1986 = vmatmul.bf16.gmra.mxu0 %v1946
        %v1987 = vpop.f32.mrf.mxu0
        %v1988 = vadd.f32 0.0, %v1987
        %v1989 = vpop.f32.mrf.mxu0
        %v1990 = vadd.f32 0.0, %v1989
        %1991 = vmatmul.bf16.gmra.mxu0 %v1949
        %v1992 = vpop.f32.mrf.mxu0
        %v1993 = vadd.f32 0.0, %v1992
        %v1994 = vpop.f32.mrf.mxu0
        %v1995 = vadd.f32 0.0, %v1994
        %1996 = vmatmul.bf16.gmra.mxu0 %v1952
        %v1997 = vpop.f32.mrf.mxu0
        %v1998 = vadd.f32 0.0, %v1997
        %v1999 = vpop.f32.mrf.mxu0
        %v2000 = vadd.f32 0.0, %v1999
        %2001 = vmatmul.bf16.gmra.mxu0 %v1955
        %v2002 = vpop.f32.mrf.mxu0
        %v2003 = vadd.f32 0.0, %v2002
        %v2004 = vpop.f32.mrf.mxu0
        %v2005 = vadd.f32 0.0, %v2004
        %2006 = vmatmul.bf16.gmra.mxu0 %v1958
        %v2007 = vpop.f32.mrf.mxu0
        %v2008 = vadd.f32 0.0, %v2007
        %v2009 = vpop.f32.mrf.mxu0
        %v2010 = vadd.f32 0.0, %v2009
        %2011 = vdwg.mxu0
        %v2012 = vadd.f32 %v1895, %v1973
        %v2013 = vadd.f32 %v1896, %v1975
        %v2014 = vadd.f32 %v1897, %v1978
        %v2015 = vadd.f32 %v1898, %v1980
        %v2016 = vadd.f32 %v1899, %v1983
        %v2017 = vadd.f32 %v1900, %v1985
        %v2018 = vadd.f32 %v1901, %v1988
        %v2019 = vadd.f32 %v1902, %v1990
        %v2020 = vadd.f32 %v1903, %v1993
        %v2021 = vadd.f32 %v1904, %v1995
        %v2022 = vadd.f32 %v1905, %v1998
        %v2023 = vadd.f32 %v1906, %v2000
        %v2024 = vadd.f32 %v1907, %v2003
        %v2025 = vadd.f32 %v1908, %v2005
        %v2026 = vadd.f32 %v1909, %v2008
        %v2027 = vadd.f32 %v1910, %v2010
        %v2028 = vld [vmem:[%s1793 + $0x2] sm:$0xff]
        %v2029 = vld [vmem:[%s1793 + $0xa] sm:$0xff]
        %v2030 = vld [vmem:[%s1793 + $0x1a] sm:$0xff]
        %v2031 = vld [vmem:[%s1793 + $0x22] sm:$0xff]
        %v2032 = vld [vmem:[%s1793 + $0x32] sm:$0xff]
        %v2033 = vld [vmem:[%s1793 + $0x3a] sm:$0xff]
        %v2034 = vld [vmem:[%s1793 + $0x4a] sm:$0xff]
        %v2035 = vld [vmem:[%s1793 + $0x52] sm:$0xff]
        %v2036 = vld [vmem:[%s1793 + $0x62] sm:$0xff]
        %v2037 = vld [vmem:[%s1793 + $0x6a] sm:$0xff]
        %v2038 = vld [vmem:[%s1793 + $0x7a] sm:$0xff]
        %v2039 = vld [vmem:[%s1793 + $0x82] sm:$0xff]
        %v2040 = vld [vmem:[%s1793 + $0x92] sm:$0xff]
        %v2041 = vld [vmem:[%s1793 + $0x9a] sm:$0xff]
        %v2042 = vld [vmem:[%s1793 + $0xaa] sm:$0xff]
        %v2043 = vld [vmem:[%s1793 + $0xb2] sm:$0xff]
        %v2044 = vpack.c.bf16 %v2029, %v2028
        %v2045 = vpack.c.bf16 %v2031, %v2030
        %v2046 = vpack.c.bf16 %v2033, %v2032
        %v2047 = vpack.c.bf16 %v2035, %v2034
        %v2048 = vpack.c.bf16 %v2037, %v2036
        %v2049 = vpack.c.bf16 %v2039, %v2038
        %v2050 = vpack.c.bf16 %v2041, %v2040
        %v2051 = vpack.c.bf16 %v2043, %v2042
        %v2052 = vld [vmem:[%s972] sm:$0x3]
        %v2054 = vsel %vm439, %v2044, 0
        %v2057 = vsel %vm439, %v2045, 0
        %v2060 = vsel %vm439, %v2046, 0
        %v2063 = vsel %vm439, %v2047, 0
        %v2066 = vsel %vm439, %v2048, 0
        %v2069 = vsel %vm439, %v2049, 0
        %v2072 = vsel %vm439, %v2050, 0
        %v2075 = vsel %vm439, %v2051, 0
        %v2078 = vsel %vm464, %v2052, 0
        %2080 = vmatpush.bf16.msra.mxu0 0
        %2081 = vmatpush.bf16.msra.mxu0 0
        %2082 = vmatpush.bf16.msra.mxu0 0
        %2083 = vmatpush.bf16.msra.mxu0 0
        %2084 = vmatpush.bf16.msra.mxu0 0
        %2085 = vmatpush.bf16.msra.mxu0 0
        %2086 = vmatpush.bf16.msra.mxu0 0
        %2087 = vmatpush.bf16.msra.mxu0 %v2078
        %2088 = vmatmul.bf16.gmra.mxu0 %v2054
        %v2089 = vpop.f32.mrf.mxu0
        %v2090 = vadd.f32 0.0, %v2089
        %v2091 = vpop.f32.mrf.mxu0
        %v2092 = vadd.f32 0.0, %v2091
        %2093 = vmatmul.bf16.gmra.mxu0 %v2057
        %v2094 = vpop.f32.mrf.mxu0
        %v2095 = vadd.f32 0.0, %v2094
        %v2096 = vpop.f32.mrf.mxu0
        %v2097 = vadd.f32 0.0, %v2096
        %2098 = vmatmul.bf16.gmra.mxu0 %v2060
        %v2099 = vpop.f32.mrf.mxu0
        %v2100 = vadd.f32 0.0, %v2099
        %v2101 = vpop.f32.mrf.mxu0
        %v2102 = vadd.f32 0.0, %v2101
        %2103 = vmatmul.bf16.gmra.mxu0 %v2063
        %v2104 = vpop.f32.mrf.mxu0
        %v2105 = vadd.f32 0.0, %v2104
        %v2106 = vpop.f32.mrf.mxu0
        %v2107 = vadd.f32 0.0, %v2106
        %2108 = vmatmul.bf16.gmra.mxu0 %v2066
        %v2109 = vpop.f32.mrf.mxu0
        %v2110 = vadd.f32 0.0, %v2109
        %v2111 = vpop.f32.mrf.mxu0
        %v2112 = vadd.f32 0.0, %v2111
        %2113 = vmatmul.bf16.gmra.mxu0 %v2069
        %v2114 = vpop.f32.mrf.mxu0
        %v2115 = vadd.f32 0.0, %v2114
        %v2116 = vpop.f32.mrf.mxu0
        %v2117 = vadd.f32 0.0, %v2116
        %2118 = vmatmul.bf16.gmra.mxu0 %v2072
        %v2119 = vpop.f32.mrf.mxu0
        %v2120 = vadd.f32 0.0, %v2119
        %v2121 = vpop.f32.mrf.mxu0
        %v2122 = vadd.f32 0.0, %v2121
        %2123 = vmatmul.bf16.gmra.mxu0 %v2075
        %v2124 = vpop.f32.mrf.mxu0
        %v2125 = vadd.f32 0.0, %v2124
        %v2126 = vpop.f32.mrf.mxu0
        %v2127 = vadd.f32 0.0, %v2126
        %2128 = vdwg.mxu0
        %v2129 = vadd.f32 %v2012, %v2090
        %v2130 = vadd.f32 %v2013, %v2092
        %v2131 = vadd.f32 %v2014, %v2095
        %v2132 = vadd.f32 %v2015, %v2097
        %v2133 = vadd.f32 %v2016, %v2100
        %v2134 = vadd.f32 %v2017, %v2102
        %v2135 = vadd.f32 %v2018, %v2105
        %v2136 = vadd.f32 %v2019, %v2107
        %v2137 = vadd.f32 %v2020, %v2110
        %v2138 = vadd.f32 %v2021, %v2112
        %v2139 = vadd.f32 %v2022, %v2115
        %v2140 = vadd.f32 %v2023, %v2117
        %v2141 = vadd.f32 %v2024, %v2120
        %v2142 = vadd.f32 %v2025, %v2122
        %v2143 = vadd.f32 %v2026, %v2125
        %v2144 = vadd.f32 %v2027, %v2127
        %s2145 = scalar_lea.vmem %s329, 240
        %v2146 = vld [vmem:[%s2145] sm:$0xff]
        %v2147 = vld [vmem:[%s2145 + $0x8] sm:$0xff]
        %v2148 = vld [vmem:[%s2145 + $0x18] sm:$0xff]
        %v2149 = vld [vmem:[%s2145 + $0x20] sm:$0xff]
        %v2150 = vld [vmem:[%s2145 + $0x30] sm:$0xff]
        %v2151 = vld [vmem:[%s2145 + $0x38] sm:$0xff]
        %v2152 = vld [vmem:[%s2145 + $0x48] sm:$0xff]
        %v2153 = vld [vmem:[%s2145 + $0x50] sm:$0xff]
        %v2154 = vld [vmem:[%s2145 + $0x60] sm:$0xff]
        %v2155 = vld [vmem:[%s2145 + $0x68] sm:$0xff]
        %v2156 = vld [vmem:[%s2145 + $0x78] sm:$0xff]
        %v2157 = vld [vmem:[%s2145 + $0x80] sm:$0xff]
        %v2158 = vld [vmem:[%s2145 + $0x90] sm:$0xff]
        %v2159 = vld [vmem:[%s2145 + $0x98] sm:$0xff]
        %v2160 = vld [vmem:[%s2145 + $0xa8] sm:$0xff]
        %v2161 = vld [vmem:[%s2145 + $0xb0] sm:$0xff]
        %v2162 = vpack.c.bf16 %v2147, %v2146
        %v2163 = vpack.c.bf16 %v2149, %v2148
        %v2164 = vpack.c.bf16 %v2151, %v2150
        %v2165 = vpack.c.bf16 %v2153, %v2152
        %v2166 = vpack.c.bf16 %v2155, %v2154
        %v2167 = vpack.c.bf16 %v2157, %v2156
        %v2168 = vpack.c.bf16 %v2159, %v2158
        %v2169 = vpack.c.bf16 %v2161, %v2160
        %v2170 = vld [vmem:[%s1091] sm:$0x3]
        %v2172 = vsel %vm439, %v2162, 0
        %v2175 = vsel %vm439, %v2163, 0
        %v2178 = vsel %vm439, %v2164, 0
        %v2181 = vsel %vm439, %v2165, 0
        %v2184 = vsel %vm439, %v2166, 0
        %v2187 = vsel %vm439, %v2167, 0
        %v2190 = vsel %vm439, %v2168, 0
        %v2193 = vsel %vm439, %v2169, 0
        %v2196 = vsel %vm464, %v2170, 0
        %2198 = vmatpush.bf16.msra.mxu0 0
        %2199 = vmatpush.bf16.msra.mxu0 0
        %2200 = vmatpush.bf16.msra.mxu0 0
        %2201 = vmatpush.bf16.msra.mxu0 0
        %2202 = vmatpush.bf16.msra.mxu0 0
        %2203 = vmatpush.bf16.msra.mxu0 0
        %2204 = vmatpush.bf16.msra.mxu0 0
        %2205 = vmatpush.bf16.msra.mxu0 %v2196
        %2206 = vmatmul.bf16.gmra.mxu0 %v2172
        %v2207 = vpop.f32.mrf.mxu0
        %v2208 = vadd.f32 0.0, %v2207
        %v2209 = vpop.f32.mrf.mxu0
        %v2210 = vadd.f32 0.0, %v2209
        %2211 = vmatmul.bf16.gmra.mxu0 %v2175
        %v2212 = vpop.f32.mrf.mxu0
        %v2213 = vadd.f32 0.0, %v2212
        %v2214 = vpop.f32.mrf.mxu0
        %v2215 = vadd.f32 0.0, %v2214
        %2216 = vmatmul.bf16.gmra.mxu0 %v2178
        %v2217 = vpop.f32.mrf.mxu0
        %v2218 = vadd.f32 0.0, %v2217
        %v2219 = vpop.f32.mrf.mxu0
        %v2220 = vadd.f32 0.0, %v2219
        %2221 = vmatmul.bf16.gmra.mxu0 %v2181
        %v2222 = vpop.f32.mrf.mxu0
        %v2223 = vadd.f32 0.0, %v2222
        %v2224 = vpop.f32.mrf.mxu0
        %v2225 = vadd.f32 0.0, %v2224
        %2226 = vmatmul.bf16.gmra.mxu0 %v2184
        %v2227 = vpop.f32.mrf.mxu0
        %v2228 = vadd.f32 0.0, %v2227
        %v2229 = vpop.f32.mrf.mxu0
        %v2230 = vadd.f32 0.0, %v2229
        %2231 = vmatmul.bf16.gmra.mxu0 %v2187
        %v2232 = vpop.f32.mrf.mxu0
        %v2233 = vadd.f32 0.0, %v2232
        %v2234 = vpop.f32.mrf.mxu0
        %v2235 = vadd.f32 0.0, %v2234
        %2236 = vmatmul.bf16.gmra.mxu0 %v2190
        %v2237 = vpop.f32.mrf.mxu0
        %v2238 = vadd.f32 0.0, %v2237
        %v2239 = vpop.f32.mrf.mxu0
        %v2240 = vadd.f32 0.0, %v2239
        %2241 = vmatmul.bf16.gmra.mxu0 %v2193
        %v2242 = vpop.f32.mrf.mxu0
        %v2243 = vadd.f32 0.0, %v2242
        %v2244 = vpop.f32.mrf.mxu0
        %v2245 = vadd.f32 0.0, %v2244
        %2246 = vdwg.mxu0
        %v2247 = vadd.f32 %v2129, %v2208
        %v2248 = vadd.f32 %v2130, %v2210
        %v2249 = vadd.f32 %v2131, %v2213
        %v2250 = vadd.f32 %v2132, %v2215
        %v2251 = vadd.f32 %v2133, %v2218
        %v2252 = vadd.f32 %v2134, %v2220
        %v2253 = vadd.f32 %v2135, %v2223
        %v2254 = vadd.f32 %v2136, %v2225
        %v2255 = vadd.f32 %v2137, %v2228
        %v2256 = vadd.f32 %v2138, %v2230
        %v2257 = vadd.f32 %v2139, %v2233
        %v2258 = vadd.f32 %v2140, %v2235
        %v2259 = vadd.f32 %v2141, %v2238
        %v2260 = vadd.f32 %v2142, %v2240
        %v2261 = vadd.f32 %v2143, %v2243
        %v2262 = vadd.f32 %v2144, %v2245
        %v2263 = vld [vmem:[%s2145 + $0x1] sm:$0xff]
        %v2264 = vld [vmem:[%s2145 + $0x9] sm:$0xff]
        %v2265 = vld [vmem:[%s2145 + $0x19] sm:$0xff]
        %v2266 = vld [vmem:[%s2145 + $0x21] sm:$0xff]
        %v2267 = vld [vmem:[%s2145 + $0x31] sm:$0xff]
        %v2268 = vld [vmem:[%s2145 + $0x39] sm:$0xff]
        %v2269 = vld [vmem:[%s2145 + $0x49] sm:$0xff]
        %v2270 = vld [vmem:[%s2145 + $0x51] sm:$0xff]
        %v2271 = vld [vmem:[%s2145 + $0x61] sm:$0xff]
        %v2272 = vld [vmem:[%s2145 + $0x69] sm:$0xff]
        %v2273 = vld [vmem:[%s2145 + $0x79] sm:$0xff]
        %v2274 = vld [vmem:[%s2145 + $0x81] sm:$0xff]
        %v2275 = vld [vmem:[%s2145 + $0x91] sm:$0xff]
        %v2276 = vld [vmem:[%s2145 + $0x99] sm:$0xff]
        %v2277 = vld [vmem:[%s2145 + $0xa9] sm:$0xff]
        %v2278 = vld [vmem:[%s2145 + $0xb1] sm:$0xff]
        %v2279 = vpack.c.bf16 %v2264, %v2263
        %v2280 = vpack.c.bf16 %v2266, %v2265
        %v2281 = vpack.c.bf16 %v2268, %v2267
        %v2282 = vpack.c.bf16 %v2270, %v2269
        %v2283 = vpack.c.bf16 %v2272, %v2271
        %v2284 = vpack.c.bf16 %v2274, %v2273
        %v2285 = vpack.c.bf16 %v2276, %v2275
        %v2286 = vpack.c.bf16 %v2278, %v2277
        %v2287 = vld [vmem:[%s1209] sm:$0x3]
        %v2289 = vsel %vm439, %v2279, 0
        %v2292 = vsel %vm439, %v2280, 0
        %v2295 = vsel %vm439, %v2281, 0
        %v2298 = vsel %vm439, %v2282, 0
        %v2301 = vsel %vm439, %v2283, 0
        %v2304 = vsel %vm439, %v2284, 0
        %v2307 = vsel %vm439, %v2285, 0
        %v2310 = vsel %vm439, %v2286, 0
        %v2313 = vsel %vm464, %v2287, 0
        %2315 = vmatpush.bf16.msra.mxu0 0
        %2316 = vmatpush.bf16.msra.mxu0 0
        %2317 = vmatpush.bf16.msra.mxu0 0
        %2318 = vmatpush.bf16.msra.mxu0 0
        %2319 = vmatpush.bf16.msra.mxu0 0
        %2320 = vmatpush.bf16.msra.mxu0 0
        %2321 = vmatpush.bf16.msra.mxu0 0
        %2322 = vmatpush.bf16.msra.mxu0 %v2313
        %2323 = vmatmul.bf16.gmra.mxu0 %v2289
        %v2324 = vpop.f32.mrf.mxu0
        %v2325 = vadd.f32 0.0, %v2324
        %v2326 = vpop.f32.mrf.mxu0
        %v2327 = vadd.f32 0.0, %v2326
        %2328 = vmatmul.bf16.gmra.mxu0 %v2292
        %v2329 = vpop.f32.mrf.mxu0
        %v2330 = vadd.f32 0.0, %v2329
        %v2331 = vpop.f32.mrf.mxu0
        %v2332 = vadd.f32 0.0, %v2331
        %2333 = vmatmul.bf16.gmra.mxu0 %v2295
        %v2334 = vpop.f32.mrf.mxu0
        %v2335 = vadd.f32 0.0, %v2334
        %v2336 = vpop.f32.mrf.mxu0
        %v2337 = vadd.f32 0.0, %v2336
        %2338 = vmatmul.bf16.gmra.mxu0 %v2298
        %v2339 = vpop.f32.mrf.mxu0
        %v2340 = vadd.f32 0.0, %v2339
        %v2341 = vpop.f32.mrf.mxu0
        %v2342 = vadd.f32 0.0, %v2341
        %2343 = vmatmul.bf16.gmra.mxu0 %v2301
        %v2344 = vpop.f32.mrf.mxu0
        %v2345 = vadd.f32 0.0, %v2344
        %v2346 = vpop.f32.mrf.mxu0
        %v2347 = vadd.f32 0.0, %v2346
        %2348 = vmatmul.bf16.gmra.mxu0 %v2304
        %v2349 = vpop.f32.mrf.mxu0
        %v2350 = vadd.f32 0.0, %v2349
        %v2351 = vpop.f32.mrf.mxu0
        %v2352 = vadd.f32 0.0, %v2351
        %2353 = vmatmul.bf16.gmra.mxu0 %v2307
        %v2354 = vpop.f32.mrf.mxu0
        %v2355 = vadd.f32 0.0, %v2354
        %v2356 = vpop.f32.mrf.mxu0
        %v2357 = vadd.f32 0.0, %v2356
        %2358 = vmatmul.bf16.gmra.mxu0 %v2310
        %v2359 = vpop.f32.mrf.mxu0
        %v2360 = vadd.f32 0.0, %v2359
        %v2361 = vpop.f32.mrf.mxu0
        %v2362 = vadd.f32 0.0, %v2361
        %2363 = vdwg.mxu0
        %v2364 = vadd.f32 %v2247, %v2325
        %v2365 = vadd.f32 %v2248, %v2327
        %v2366 = vadd.f32 %v2249, %v2330
        %v2367 = vadd.f32 %v2250, %v2332
        %v2368 = vadd.f32 %v2251, %v2335
        %v2369 = vadd.f32 %v2252, %v2337
        %v2370 = vadd.f32 %v2253, %v2340
        %v2371 = vadd.f32 %v2254, %v2342
        %v2372 = vadd.f32 %v2255, %v2345
        %v2373 = vadd.f32 %v2256, %v2347
        %v2374 = vadd.f32 %v2257, %v2350
        %v2375 = vadd.f32 %v2258, %v2352
        %v2376 = vadd.f32 %v2259, %v2355
        %v2377 = vadd.f32 %v2260, %v2357
        %v2378 = vadd.f32 %v2261, %v2360
        %v2379 = vadd.f32 %v2262, %v2362
        %v2380 = vld [vmem:[%s2145 + $0x2] sm:$0xff]
        %v2381 = vld [vmem:[%s2145 + $0xa] sm:$0xff]
        %v2382 = vld [vmem:[%s2145 + $0x1a] sm:$0xff]
        %v2383 = vld [vmem:[%s2145 + $0x22] sm:$0xff]
        %v2384 = vld [vmem:[%s2145 + $0x32] sm:$0xff]
        %v2385 = vld [vmem:[%s2145 + $0x3a] sm:$0xff]
        %v2386 = vld [vmem:[%s2145 + $0x4a] sm:$0xff]
        %v2387 = vld [vmem:[%s2145 + $0x52] sm:$0xff]
        %v2388 = vld [vmem:[%s2145 + $0x62] sm:$0xff]
        %v2389 = vld [vmem:[%s2145 + $0x6a] sm:$0xff]
        %v2390 = vld [vmem:[%s2145 + $0x7a] sm:$0xff]
        %v2391 = vld [vmem:[%s2145 + $0x82] sm:$0xff]
        %v2392 = vld [vmem:[%s2145 + $0x92] sm:$0xff]
        %v2393 = vld [vmem:[%s2145 + $0x9a] sm:$0xff]
        %v2394 = vld [vmem:[%s2145 + $0xaa] sm:$0xff]
        %v2395 = vld [vmem:[%s2145 + $0xb2] sm:$0xff]
        %v2396 = vpack.c.bf16 %v2381, %v2380
        %v2397 = vpack.c.bf16 %v2383, %v2382
        %v2398 = vpack.c.bf16 %v2385, %v2384
        %v2399 = vpack.c.bf16 %v2387, %v2386
        %v2400 = vpack.c.bf16 %v2389, %v2388
        %v2401 = vpack.c.bf16 %v2391, %v2390
        %v2402 = vpack.c.bf16 %v2393, %v2392
        %v2403 = vpack.c.bf16 %v2395, %v2394
        %v2404 = vld [vmem:[%s1327] sm:$0x3]
        %v2406 = vsel %vm439, %v2396, 0
        %v2409 = vsel %vm439, %v2397, 0
        %v2412 = vsel %vm439, %v2398, 0
        %v2415 = vsel %vm439, %v2399, 0
        %v2418 = vsel %vm439, %v2400, 0
        %v2421 = vsel %vm439, %v2401, 0
        %v2424 = vsel %vm439, %v2402, 0
        %v2427 = vsel %vm439, %v2403, 0
        %v2430 = vsel %vm464, %v2404, 0
        %2432 = vmatpush.bf16.msra.mxu0 0
        %2433 = vmatpush.bf16.msra.mxu0 0
        %2434 = vmatpush.bf16.msra.mxu0 0
        %2435 = vmatpush.bf16.msra.mxu0 0
        %2436 = vmatpush.bf16.msra.mxu0 0
        %2437 = vmatpush.bf16.msra.mxu0 0
        %2438 = vmatpush.bf16.msra.mxu0 0
        %2439 = vmatpush.bf16.msra.mxu0 %v2430
        %2440 = vmatmul.bf16.gmra.mxu0 %v2406
        %v2441 = vpop.f32.mrf.mxu0
        %v2442 = vadd.f32 0.0, %v2441
        %v2443 = vpop.f32.mrf.mxu0
        %v2444 = vadd.f32 0.0, %v2443
        %2445 = vmatmul.bf16.gmra.mxu0 %v2409
        %v2446 = vpop.f32.mrf.mxu0
        %v2447 = vadd.f32 0.0, %v2446
        %v2448 = vpop.f32.mrf.mxu0
        %v2449 = vadd.f32 0.0, %v2448
        %2450 = vmatmul.bf16.gmra.mxu0 %v2412
        %v2451 = vpop.f32.mrf.mxu0
        %v2452 = vadd.f32 0.0, %v2451
        %v2453 = vpop.f32.mrf.mxu0
        %v2454 = vadd.f32 0.0, %v2453
        %2455 = vmatmul.bf16.gmra.mxu0 %v2415
        %v2456 = vpop.f32.mrf.mxu0
        %v2457 = vadd.f32 0.0, %v2456
        %v2458 = vpop.f32.mrf.mxu0
        %v2459 = vadd.f32 0.0, %v2458
        %2460 = vmatmul.bf16.gmra.mxu0 %v2418
        %v2461 = vpop.f32.mrf.mxu0
        %v2462 = vadd.f32 0.0, %v2461
        %v2463 = vpop.f32.mrf.mxu0
        %v2464 = vadd.f32 0.0, %v2463
        %2465 = vmatmul.bf16.gmra.mxu0 %v2421
        %v2466 = vpop.f32.mrf.mxu0
        %v2467 = vadd.f32 0.0, %v2466
        %v2468 = vpop.f32.mrf.mxu0
        %v2469 = vadd.f32 0.0, %v2468
        %2470 = vmatmul.bf16.gmra.mxu0 %v2424
        %v2471 = vpop.f32.mrf.mxu0
        %v2472 = vadd.f32 0.0, %v2471
        %v2473 = vpop.f32.mrf.mxu0
        %v2474 = vadd.f32 0.0, %v2473
        %2475 = vmatmul.bf16.gmra.mxu0 %v2427
        %v2476 = vpop.f32.mrf.mxu0
        %v2477 = vadd.f32 0.0, %v2476
        %v2478 = vpop.f32.mrf.mxu0
        %v2479 = vadd.f32 0.0, %v2478
        %2480 = vdwg.mxu0
        %v2481 = vadd.f32 %v2364, %v2442
        %v2482 = vadd.f32 %v2365, %v2444
        %v2483 = vadd.f32 %v2366, %v2447
        %v2484 = vadd.f32 %v2367, %v2449
        %v2485 = vadd.f32 %v2368, %v2452
        %v2486 = vadd.f32 %v2369, %v2454
        %v2487 = vadd.f32 %v2370, %v2457
        %v2488 = vadd.f32 %v2371, %v2459
        %v2489 = vadd.f32 %v2372, %v2462
        %v2490 = vadd.f32 %v2373, %v2464
        %v2491 = vadd.f32 %v2374, %v2467
        %v2492 = vadd.f32 %v2375, %v2469
        %v2493 = vadd.f32 %v2376, %v2472
        %v2494 = vadd.f32 %v2377, %v2474
        %v2495 = vadd.f32 %v2378, %v2477
        %v2496 = vadd.f32 %v2379, %v2479
        %v2497 = vadd.f32 %v2481, %v1422
        %v2498 = vadd.f32 %v2482, %v1422
        %v2499 = vadd.f32 %v2483, %v1422
        %v2500 = vadd.f32 %v2484, %v1422
        %v2501 = vadd.f32 %v2485, %v1422
        %v2502 = vadd.f32 %v2486, %v1422
        %v2503 = vadd.f32 %v2487, %v1422
        %v2504 = vadd.f32 %v2488, %v1422
        %v2505 = vadd.f32 %v2489, %v1422
        %v2506 = vadd.f32 %v2490, %v1422
        %v2507 = vadd.f32 %v2491, %v1422
        %v2508 = vadd.f32 %v2492, %v1422
        %v2509 = vadd.f32 %v2493, %v1422
        %v2510 = vadd.f32 %v2494, %v1422
        %v2511 = vadd.f32 %v2495, %v1422
        %v2512 = vadd.f32 %v2496, %v1422
        %v2513 = vmax.f32 %v2497, 0.0
        %v2514 = vmax.f32 %v2498, 0.0
        %v2515 = vmax.f32 %v2499, 0.0
        %v2516 = vmax.f32 %v2500, 0.0
        %v2517 = vmax.f32 %v2501, 0.0
        %v2518 = vmax.f32 %v2502, 0.0
        %v2519 = vmax.f32 %v2503, 0.0
        %v2520 = vmax.f32 %v2504, 0.0
        %v2521 = vmax.f32 %v2505, 0.0
        %v2522 = vmax.f32 %v2506, 0.0
        %v2523 = vmax.f32 %v2507, 0.0
        %v2524 = vmax.f32 %v2508, 0.0
        %v2525 = vmax.f32 %v2509, 0.0
        %v2526 = vmax.f32 %v2510, 0.0
        %v2527 = vmax.f32 %v2511, 0.0
        %v2528 = vmax.f32 %v2512, 0.0
        %s2529 = scalar_lea.vmem [#allocation2], 216
        %2530 = vst.msk [vmem:[%s2529 + $0x1] sm:$0xff] %vm331, %v2513
        %2531 = vst.msk [vmem:[%s2529 + $0x9] sm:$0xff] %vm331, %v2514
        %2532 = vst.msk [vmem:[%s2529 + $0x19] sm:$0xff] %vm331, %v2515
        %2533 = vst.msk [vmem:[%s2529 + $0x21] sm:$0xff] %vm331, %v2516
        %2534 = vst.msk [vmem:[%s2529 + $0x31] sm:$0xff] %vm331, %v2517
        %2535 = vst.msk [vmem:[%s2529 + $0x39] sm:$0xff] %vm331, %v2518
        %2536 = vst.msk [vmem:[%s2529 + $0x49] sm:$0xff] %vm331, %v2519
        %2537 = vst.msk [vmem:[%s2529 + $0x51] sm:$0xff] %vm331, %v2520
        %2538 = vst.msk [vmem:[%s2529 + $0x61] sm:$0xff] %vm331, %v2521
        %2539 = vst.msk [vmem:[%s2529 + $0x69] sm:$0xff] %vm331, %v2522
        %2540 = vst.msk [vmem:[%s2529 + $0x79] sm:$0xff] %vm331, %v2523
        %2541 = vst.msk [vmem:[%s2529 + $0x81] sm:$0xff] %vm331, %v2524
        %2542 = vst.msk [vmem:[%s2529 + $0x91] sm:$0xff] %vm331, %v2525
        %2543 = vst.msk [vmem:[%s2529 + $0x99] sm:$0xff] %vm331, %v2526
        %2544 = vst.msk [vmem:[%s2529 + $0xa9] sm:$0xff] %vm331, %v2527
        %2545 = vst.msk [vmem:[%s2529 + $0xb1] sm:$0xff] %vm331, %v2528
        %v2546 = vld [vmem:[%s4] sm:$0x1]
        %v2547 = vld [vmem:[#allocation2] sm:$0xff]
        %v2548 = vld [vmem:[#allocation2 + $0x8] sm:$0xff]
        %v2549 = vld [vmem:[#allocation2 + $0x18] sm:$0xff]
        %v2550 = vld [vmem:[#allocation2 + $0x20] sm:$0xff]
        %v2551 = vld [vmem:[#allocation2 + $0x30] sm:$0xff]
        %v2552 = vld [vmem:[#allocation2 + $0x38] sm:$0xff]
        %v2553 = vld [vmem:[#allocation2 + $0x48] sm:$0xff]
        %v2554 = vld [vmem:[#allocation2 + $0x50] sm:$0xff]
        %v2555 = vld [vmem:[#allocation2 + $0x60] sm:$0xff]
        %v2556 = vld [vmem:[#allocation2 + $0x68] sm:$0xff]
        %v2557 = vld [vmem:[#allocation2 + $0x78] sm:$0xff]
        %v2558 = vld [vmem:[#allocation2 + $0x80] sm:$0xff]
        %v2559 = vld [vmem:[#allocation2 + $0x90] sm:$0xff]
        %v2560 = vld [vmem:[#allocation2 + $0x98] sm:$0xff]
        %v2561 = vld [vmem:[#allocation2 + $0xa8] sm:$0xff]
        %v2562 = vld [vmem:[#allocation2 + $0xb0] sm:$0xff]
        %v2563 = vpack.c.bf16 %v2548, %v2547
        %v2564 = vpack.c.bf16 %v2550, %v2549
        %v2565 = vpack.c.bf16 %v2552, %v2551
        %v2566 = vpack.c.bf16 %v2554, %v2553
        %v2567 = vpack.c.bf16 %v2556, %v2555
        %v2568 = vpack.c.bf16 %v2558, %v2557
        %v2569 = vpack.c.bf16 %v2560, %v2559
        %v2570 = vpack.c.bf16 %v2562, %v2561
        %v2571 = vld [vmem:[%s3] sm:$0xf]
        %v2572 = vld [vmem:[#allocation2 + $0x1] sm:$0xff]
        %v2573 = vld [vmem:[#allocation2 + $0x9] sm:$0xff]
        %v2574 = vld [vmem:[#allocation2 + $0x19] sm:$0xff]
        %v2575 = vld [vmem:[#allocation2 + $0x21] sm:$0xff]
        %v2576 = vld [vmem:[#allocation2 + $0x31] sm:$0xff]
        %v2577 = vld [vmem:[#allocation2 + $0x39] sm:$0xff]
        %v2578 = vld [vmem:[#allocation2 + $0x49] sm:$0xff]
        %v2579 = vld [vmem:[#allocation2 + $0x51] sm:$0xff]
        %v2580 = vld [vmem:[#allocation2 + $0x61] sm:$0xff]
        %v2581 = vld [vmem:[#allocation2 + $0x69] sm:$0xff]
        %v2582 = vld [vmem:[#allocation2 + $0x79] sm:$0xff]
        %v2583 = vld [vmem:[#allocation2 + $0x81] sm:$0xff]
        %v2584 = vld [vmem:[#allocation2 + $0x91] sm:$0xff]
        %v2585 = vld [vmem:[#allocation2 + $0x99] sm:$0xff]
        %v2586 = vld [vmem:[#allocation2 + $0xa9] sm:$0xff]
        %v2587 = vld [vmem:[#allocation2 + $0xb1] sm:$0xff]
        %v2588 = vpack.c.bf16 %v2573, %v2572
        %v2589 = vpack.c.bf16 %v2575, %v2574
        %v2590 = vpack.c.bf16 %v2577, %v2576
        %v2591 = vpack.c.bf16 %v2579, %v2578
        %v2592 = vpack.c.bf16 %v2581, %v2580
        %v2593 = vpack.c.bf16 %v2583, %v2582
        %v2594 = vpack.c.bf16 %v2585, %v2584
        %v2595 = vpack.c.bf16 %v2587, %v2586
        %s2596 = scalar_lea.vmem %s3, 4
        %v2597 = vld [vmem:[%s2596] sm:$0xf]
        %v2599 = vsel %vm331, %v2588, 0
        %v2602 = vsel %vm331, %v2589, 0
        %v2605 = vsel %vm331, %v2590, 0
        %v2608 = vsel %vm331, %v2591, 0
        %v2611 = vsel %vm331, %v2592, 0
        %v2614 = vsel %vm331, %v2593, 0
        %v2617 = vsel %vm331, %v2594, 0
        %v2620 = vsel %vm331, %v2595, 0
        %vm2622 = vcmask 1043456
        %v2624 = vsel %vm2622, %v2597, 0
        %2626 = vmatpush.bf16.msra.mxu0 0
        %2627 = vmatpush.bf16.msra.mxu0 0
        %2628 = vmatpush.bf16.msra.mxu0 0
        %2629 = vmatpush.bf16.msra.mxu0 0
        %2630 = vmatpush.bf16.msra.mxu0 0
        %2631 = vmatpush.bf16.msra.mxu0 0
        %2632 = vmatpush.bf16.msra.mxu0 0
        %2633 = vmatpush.bf16.msra.mxu0 %v2624
        %2634 = vmatmul.bf16.gmra.mxu0 %v2599
        %v2635 = vpop.f32.mrf.mxu0
        %v2636 = vadd.f32 0.0, %v2635
        %v2637 = vpop.f32.mrf.mxu0
        %v2638 = vadd.f32 0.0, %v2637
        %2639 = vmatmul.bf16.gmra.mxu0 %v2602
        %v2640 = vpop.f32.mrf.mxu0
        %v2641 = vadd.f32 0.0, %v2640
        %v2642 = vpop.f32.mrf.mxu0
        %v2643 = vadd.f32 0.0, %v2642
        %2644 = vmatmul.bf16.gmra.mxu0 %v2605
        %v2645 = vpop.f32.mrf.mxu0
        %v2646 = vadd.f32 0.0, %v2645
        %v2647 = vpop.f32.mrf.mxu0
        %v2648 = vadd.f32 0.0, %v2647
        %2649 = vmatmul.bf16.gmra.mxu0 %v2608
        %v2650 = vpop.f32.mrf.mxu0
        %v2651 = vadd.f32 0.0, %v2650
        %v2652 = vpop.f32.mrf.mxu0
        %v2653 = vadd.f32 0.0, %v2652
        %2654 = vmatmul.bf16.gmra.mxu0 %v2611
        %v2655 = vpop.f32.mrf.mxu0
        %v2656 = vadd.f32 0.0, %v2655
        %v2657 = vpop.f32.mrf.mxu0
        %v2658 = vadd.f32 0.0, %v2657
        %2659 = vmatmul.bf16.gmra.mxu0 %v2614
        %v2660 = vpop.f32.mrf.mxu0
        %v2661 = vadd.f32 0.0, %v2660
        %v2662 = vpop.f32.mrf.mxu0
        %v2663 = vadd.f32 0.0, %v2662
        %2664 = vmatmul.bf16.gmra.mxu0 %v2617
        %v2665 = vpop.f32.mrf.mxu0
        %v2666 = vadd.f32 0.0, %v2665
        %v2667 = vpop.f32.mrf.mxu0
        %v2668 = vadd.f32 0.0, %v2667
        %2669 = vmatmul.bf16.gmra.mxu0 %v2620
        %v2670 = vpop.f32.mrf.mxu0
        %v2671 = vadd.f32 0.0, %v2670
        %v2672 = vpop.f32.mrf.mxu0
        %v2673 = vadd.f32 0.0, %v2672
        %2674 = vdwg.mxu0
        %v2676 = vsel %vm331, %v2563, 0
        %v2679 = vsel %vm331, %v2564, 0
        %v2682 = vsel %vm331, %v2565, 0
        %v2685 = vsel %vm331, %v2566, 0
        %v2688 = vsel %vm331, %v2567, 0
        %v2691 = vsel %vm331, %v2568, 0
        %v2694 = vsel %vm331, %v2569, 0
        %v2697 = vsel %vm331, %v2570, 0
        %v2700 = vsel %vm2622, %v2571, 0
        %2702 = vmatpush.bf16.msra.mxu0 0
        %2703 = vmatpush.bf16.msra.mxu0 0
        %2704 = vmatpush.bf16.msra.mxu0 0
        %2705 = vmatpush.bf16.msra.mxu0 0
        %2706 = vmatpush.bf16.msra.mxu0 0
        %2707 = vmatpush.bf16.msra.mxu0 0
        %2708 = vmatpush.bf16.msra.mxu0 0
        %2709 = vmatpush.bf16.msra.mxu0 %v2700
        %2710 = vmatmul.bf16.gmra.mxu0 %v2676
        %v2711 = vpop.f32.mrf.mxu0
        %v2712 = vadd.f32 %v2636, %v2711
        %v2713 = vpop.f32.mrf.mxu0
        %v2714 = vadd.f32 %v2638, %v2713
        %2715 = vmatmul.bf16.gmra.mxu0 %v2679
        %v2716 = vpop.f32.mrf.mxu0
        %v2717 = vadd.f32 %v2641, %v2716
        %v2718 = vpop.f32.mrf.mxu0
        %v2719 = vadd.f32 %v2643, %v2718
        %2720 = vmatmul.bf16.gmra.mxu0 %v2682
        %v2721 = vpop.f32.mrf.mxu0
        %v2722 = vadd.f32 %v2646, %v2721
        %v2723 = vpop.f32.mrf.mxu0
        %v2724 = vadd.f32 %v2648, %v2723
        %2725 = vmatmul.bf16.gmra.mxu0 %v2685
        %v2726 = vpop.f32.mrf.mxu0
        %v2727 = vadd.f32 %v2651, %v2726
        %v2728 = vpop.f32.mrf.mxu0
        %v2729 = vadd.f32 %v2653, %v2728
        %2730 = vmatmul.bf16.gmra.mxu0 %v2688
        %v2731 = vpop.f32.mrf.mxu0
        %v2732 = vadd.f32 %v2656, %v2731
        %v2733 = vpop.f32.mrf.mxu0
        %v2734 = vadd.f32 %v2658, %v2733
        %2735 = vmatmul.bf16.gmra.mxu0 %v2691
        %v2736 = vpop.f32.mrf.mxu0
        %v2737 = vadd.f32 %v2661, %v2736
        %v2738 = vpop.f32.mrf.mxu0
        %v2739 = vadd.f32 %v2663, %v2738
        %2740 = vmatmul.bf16.gmra.mxu0 %v2694
        %v2741 = vpop.f32.mrf.mxu0
        %v2742 = vadd.f32 %v2666, %v2741
        %v2743 = vpop.f32.mrf.mxu0
        %v2744 = vadd.f32 %v2668, %v2743
        %2745 = vmatmul.bf16.gmra.mxu0 %v2697
        %v2746 = vpop.f32.mrf.mxu0
        %v2747 = vadd.f32 %v2671, %v2746
        %v2748 = vpop.f32.mrf.mxu0
        %v2749 = vadd.f32 %v2673, %v2748
        %2750 = vdwg.mxu0
        %v2751 = vld [vmem:[#allocation2 + $0x2] sm:$0xff]
        %v2752 = vld [vmem:[#allocation2 + $0xa] sm:$0xff]
        %v2753 = vld [vmem:[#allocation2 + $0x1a] sm:$0xff]
        %v2754 = vld [vmem:[#allocation2 + $0x22] sm:$0xff]
        %v2755 = vld [vmem:[#allocation2 + $0x32] sm:$0xff]
        %v2756 = vld [vmem:[#allocation2 + $0x3a] sm:$0xff]
        %v2757 = vld [vmem:[#allocation2 + $0x4a] sm:$0xff]
        %v2758 = vld [vmem:[#allocation2 + $0x52] sm:$0xff]
        %v2759 = vld [vmem:[#allocation2 + $0x62] sm:$0xff]
        %v2760 = vld [vmem:[#allocation2 + $0x6a] sm:$0xff]
        %v2761 = vld [vmem:[#allocation2 + $0x7a] sm:$0xff]
        %v2762 = vld [vmem:[#allocation2 + $0x82] sm:$0xff]
        %v2763 = vld [vmem:[#allocation2 + $0x92] sm:$0xff]
        %v2764 = vld [vmem:[#allocation2 + $0x9a] sm:$0xff]
        %v2765 = vld [vmem:[#allocation2 + $0xaa] sm:$0xff]
        %v2766 = vld [vmem:[#allocation2 + $0xb2] sm:$0xff]
        %v2767 = vpack.c.bf16 %v2752, %v2751
        %v2768 = vpack.c.bf16 %v2754, %v2753
        %v2769 = vpack.c.bf16 %v2756, %v2755
        %v2770 = vpack.c.bf16 %v2758, %v2757
        %v2771 = vpack.c.bf16 %v2760, %v2759
        %v2772 = vpack.c.bf16 %v2762, %v2761
        %v2773 = vpack.c.bf16 %v2764, %v2763
        %v2774 = vpack.c.bf16 %v2766, %v2765
        %s2775 = scalar_lea.vmem %s3, 8
        %v2776 = vld [vmem:[%s2775] sm:$0xf]
        %v2778 = vsel %vm331, %v2767, 0
        %v2781 = vsel %vm331, %v2768, 0
        %v2784 = vsel %vm331, %v2769, 0
        %v2787 = vsel %vm331, %v2770, 0
        %v2790 = vsel %vm331, %v2771, 0
        %v2793 = vsel %vm331, %v2772, 0
        %v2796 = vsel %vm331, %v2773, 0
        %v2799 = vsel %vm331, %v2774, 0
        %v2802 = vsel %vm2622, %v2776, 0
        %2804 = vmatpush.bf16.msra.mxu0 0
        %2805 = vmatpush.bf16.msra.mxu0 0
        %2806 = vmatpush.bf16.msra.mxu0 0
        %2807 = vmatpush.bf16.msra.mxu0 0
        %2808 = vmatpush.bf16.msra.mxu0 0
        %2809 = vmatpush.bf16.msra.mxu0 0
        %2810 = vmatpush.bf16.msra.mxu0 0
        %2811 = vmatpush.bf16.msra.mxu0 %v2802
        %2812 = vmatmul.bf16.gmra.mxu0 %v2778
        %v2813 = vpop.f32.mrf.mxu0
        %v2814 = vadd.f32 0.0, %v2813
        %v2815 = vpop.f32.mrf.mxu0
        %v2816 = vadd.f32 0.0, %v2815
        %2817 = vmatmul.bf16.gmra.mxu0 %v2781
        %v2818 = vpop.f32.mrf.mxu0
        %v2819 = vadd.f32 0.0, %v2818
        %v2820 = vpop.f32.mrf.mxu0
        %v2821 = vadd.f32 0.0, %v2820
        %2822 = vmatmul.bf16.gmra.mxu0 %v2784
        %v2823 = vpop.f32.mrf.mxu0
        %v2824 = vadd.f32 0.0, %v2823
        %v2825 = vpop.f32.mrf.mxu0
        %v2826 = vadd.f32 0.0, %v2825
        %2827 = vmatmul.bf16.gmra.mxu0 %v2787
        %v2828 = vpop.f32.mrf.mxu0
        %v2829 = vadd.f32 0.0, %v2828
        %v2830 = vpop.f32.mrf.mxu0
        %v2831 = vadd.f32 0.0, %v2830
        %2832 = vmatmul.bf16.gmra.mxu0 %v2790
        %v2833 = vpop.f32.mrf.mxu0
        %v2834 = vadd.f32 0.0, %v2833
        %v2835 = vpop.f32.mrf.mxu0
        %v2836 = vadd.f32 0.0, %v2835
        %2837 = vmatmul.bf16.gmra.mxu0 %v2793
        %v2838 = vpop.f32.mrf.mxu0
        %v2839 = vadd.f32 0.0, %v2838
        %v2840 = vpop.f32.mrf.mxu0
        %v2841 = vadd.f32 0.0, %v2840
        %2842 = vmatmul.bf16.gmra.mxu0 %v2796
        %v2843 = vpop.f32.mrf.mxu0
        %v2844 = vadd.f32 0.0, %v2843
        %v2845 = vpop.f32.mrf.mxu0
        %v2846 = vadd.f32 0.0, %v2845
        %2847 = vmatmul.bf16.gmra.mxu0 %v2799
        %v2848 = vpop.f32.mrf.mxu0
        %v2849 = vadd.f32 0.0, %v2848
        %v2850 = vpop.f32.mrf.mxu0
        %v2851 = vadd.f32 0.0, %v2850
        %2852 = vdwg.mxu0
        %v2853 = vadd.f32 %v2712, %v2814
        %v2854 = vadd.f32 %v2714, %v2816
        %v2855 = vadd.f32 %v2717, %v2819
        %v2856 = vadd.f32 %v2719, %v2821
        %v2857 = vadd.f32 %v2722, %v2824
        %v2858 = vadd.f32 %v2724, %v2826
        %v2859 = vadd.f32 %v2727, %v2829
        %v2860 = vadd.f32 %v2729, %v2831
        %v2861 = vadd.f32 %v2732, %v2834
        %v2862 = vadd.f32 %v2734, %v2836
        %v2863 = vadd.f32 %v2737, %v2839
        %v2864 = vadd.f32 %v2739, %v2841
        %v2865 = vadd.f32 %v2742, %v2844
        %v2866 = vadd.f32 %v2744, %v2846
        %v2867 = vadd.f32 %v2747, %v2849
        %v2868 = vadd.f32 %v2749, %v2851
        %v2869 = vld [vmem:[%s1456] sm:$0xff]
        %v2870 = vld [vmem:[%s1456 + $0x8] sm:$0xff]
        %v2871 = vld [vmem:[%s1456 + $0x18] sm:$0xff]
        %v2872 = vld [vmem:[%s1456 + $0x20] sm:$0xff]
        %v2873 = vld [vmem:[%s1456 + $0x30] sm:$0xff]
        %v2874 = vld [vmem:[%s1456 + $0x38] sm:$0xff]
        %v2875 = vld [vmem:[%s1456 + $0x48] sm:$0xff]
        %v2876 = vld [vmem:[%s1456 + $0x50] sm:$0xff]
        %v2877 = vld [vmem:[%s1456 + $0x60] sm:$0xff]
        %v2878 = vld [vmem:[%s1456 + $0x68] sm:$0xff]
        %v2879 = vld [vmem:[%s1456 + $0x78] sm:$0xff]
        %v2880 = vld [vmem:[%s1456 + $0x80] sm:$0xff]
        %v2881 = vld [vmem:[%s1456 + $0x90] sm:$0xff]
        %v2882 = vld [vmem:[%s1456 + $0x98] sm:$0xff]
        %v2883 = vld [vmem:[%s1456 + $0xa8] sm:$0xff]
        %v2884 = vld [vmem:[%s1456 + $0xb0] sm:$0xff]
        %v2885 = vpack.c.bf16 %v2870, %v2869
        %v2886 = vpack.c.bf16 %v2872, %v2871
        %v2887 = vpack.c.bf16 %v2874, %v2873
        %v2888 = vpack.c.bf16 %v2876, %v2875
        %v2889 = vpack.c.bf16 %v2878, %v2877
        %v2890 = vpack.c.bf16 %v2880, %v2879
        %v2891 = vpack.c.bf16 %v2882, %v2881
        %v2892 = vpack.c.bf16 %v2884, %v2883
        %s2893 = scalar_lea.vmem %s3, 12
        %v2894 = vld [vmem:[%s2893] sm:$0xf]
        %v2896 = vsel %vm331, %v2885, 0
        %v2899 = vsel %vm331, %v2886, 0
        %v2902 = vsel %vm331, %v2887, 0
        %v2905 = vsel %vm331, %v2888, 0
        %v2908 = vsel %vm331, %v2889, 0
        %v2911 = vsel %vm331, %v2890, 0
        %v2914 = vsel %vm331, %v2891, 0
        %v2917 = vsel %vm331, %v2892, 0
        %v2920 = vsel %vm2622, %v2894, 0
        %2922 = vmatpush.bf16.msra.mxu0 0
        %2923 = vmatpush.bf16.msra.mxu0 0
        %2924 = vmatpush.bf16.msra.mxu0 0
        %2925 = vmatpush.bf16.msra.mxu0 0
        %2926 = vmatpush.bf16.msra.mxu0 0
        %2927 = vmatpush.bf16.msra.mxu0 0
        %2928 = vmatpush.bf16.msra.mxu0 0
        %2929 = vmatpush.bf16.msra.mxu0 %v2920
        %2930 = vmatmul.bf16.gmra.mxu0 %v2896
        %v2931 = vpop.f32.mrf.mxu0
        %v2932 = vadd.f32 0.0, %v2931
        %v2933 = vpop.f32.mrf.mxu0
        %v2934 = vadd.f32 0.0, %v2933
        %2935 = vmatmul.bf16.gmra.mxu0 %v2899
        %v2936 = vpop.f32.mrf.mxu0
        %v2937 = vadd.f32 0.0, %v2936
        %v2938 = vpop.f32.mrf.mxu0
        %v2939 = vadd.f32 0.0, %v2938
        %2940 = vmatmul.bf16.gmra.mxu0 %v2902
        %v2941 = vpop.f32.mrf.mxu0
        %v2942 = vadd.f32 0.0, %v2941
        %v2943 = vpop.f32.mrf.mxu0
        %v2944 = vadd.f32 0.0, %v2943
        %2945 = vmatmul.bf16.gmra.mxu0 %v2905
        %v2946 = vpop.f32.mrf.mxu0
        %v2947 = vadd.f32 0.0, %v2946
        %v2948 = vpop.f32.mrf.mxu0
        %v2949 = vadd.f32 0.0, %v2948
        %2950 = vmatmul.bf16.gmra.mxu0 %v2908
        %v2951 = vpop.f32.mrf.mxu0
        %v2952 = vadd.f32 0.0, %v2951
        %v2953 = vpop.f32.mrf.mxu0
        %v2954 = vadd.f32 0.0, %v2953
        %2955 = vmatmul.bf16.gmra.mxu0 %v2911
        %v2956 = vpop.f32.mrf.mxu0
        %v2957 = vadd.f32 0.0, %v2956
        %v2958 = vpop.f32.mrf.mxu0
        %v2959 = vadd.f32 0.0, %v2958
        %2960 = vmatmul.bf16.gmra.mxu0 %v2914
        %v2961 = vpop.f32.mrf.mxu0
        %v2962 = vadd.f32 0.0, %v2961
        %v2963 = vpop.f32.mrf.mxu0
        %v2964 = vadd.f32 0.0, %v2963
        %2965 = vmatmul.bf16.gmra.mxu0 %v2917
        %v2966 = vpop.f32.mrf.mxu0
        %v2967 = vadd.f32 0.0, %v2966
        %v2968 = vpop.f32.mrf.mxu0
        %v2969 = vadd.f32 0.0, %v2968
        %2970 = vdwg.mxu0
        %v2971 = vadd.f32 %v2853, %v2932
        %v2972 = vadd.f32 %v2854, %v2934
        %v2973 = vadd.f32 %v2855, %v2937
        %v2974 = vadd.f32 %v2856, %v2939
        %v2975 = vadd.f32 %v2857, %v2942
        %v2976 = vadd.f32 %v2858, %v2944
        %v2977 = vadd.f32 %v2859, %v2947
        %v2978 = vadd.f32 %v2860, %v2949
        %v2979 = vadd.f32 %v2861, %v2952
        %v2980 = vadd.f32 %v2862, %v2954
        %v2981 = vadd.f32 %v2863, %v2957
        %v2982 = vadd.f32 %v2864, %v2959
        %v2983 = vadd.f32 %v2865, %v2962
        %v2984 = vadd.f32 %v2866, %v2964
        %v2985 = vadd.f32 %v2867, %v2967
        %v2986 = vadd.f32 %v2868, %v2969
        %v2987 = vld [vmem:[%s1456 + $0x1] sm:$0xff]
        %v2988 = vld [vmem:[%s1456 + $0x9] sm:$0xff]
        %v2989 = vld [vmem:[%s1456 + $0x19] sm:$0xff]
        %v2990 = vld [vmem:[%s1456 + $0x21] sm:$0xff]
        %v2991 = vld [vmem:[%s1456 + $0x31] sm:$0xff]
        %v2992 = vld [vmem:[%s1456 + $0x39] sm:$0xff]
        %v2993 = vld [vmem:[%s1456 + $0x49] sm:$0xff]
        %v2994 = vld [vmem:[%s1456 + $0x51] sm:$0xff]
        %v2995 = vld [vmem:[%s1456 + $0x61] sm:$0xff]
        %v2996 = vld [vmem:[%s1456 + $0x69] sm:$0xff]
        %v2997 = vld [vmem:[%s1456 + $0x79] sm:$0xff]
        %v2998 = vld [vmem:[%s1456 + $0x81] sm:$0xff]
        %v2999 = vld [vmem:[%s1456 + $0x91] sm:$0xff]
        %v3000 = vld [vmem:[%s1456 + $0x99] sm:$0xff]
        %v3001 = vld [vmem:[%s1456 + $0xa9] sm:$0xff]
        %v3002 = vld [vmem:[%s1456 + $0xb1] sm:$0xff]
        %v3003 = vpack.c.bf16 %v2988, %v2987
        %v3004 = vpack.c.bf16 %v2990, %v2989
        %v3005 = vpack.c.bf16 %v2992, %v2991
        %v3006 = vpack.c.bf16 %v2994, %v2993
        %v3007 = vpack.c.bf16 %v2996, %v2995
        %v3008 = vpack.c.bf16 %v2998, %v2997
        %v3009 = vpack.c.bf16 %v3000, %v2999
        %v3010 = vpack.c.bf16 %v3002, %v3001
        %s3011 = scalar_lea.vmem %s3, 16
        %v3012 = vld [vmem:[%s3011] sm:$0xf]
        %v3014 = vsel %vm331, %v3003, 0
        %v3017 = vsel %vm331, %v3004, 0
        %v3020 = vsel %vm331, %v3005, 0
        %v3023 = vsel %vm331, %v3006, 0
        %v3026 = vsel %vm331, %v3007, 0
        %v3029 = vsel %vm331, %v3008, 0
        %v3032 = vsel %vm331, %v3009, 0
        %v3035 = vsel %vm331, %v3010, 0
        %v3038 = vsel %vm2622, %v3012, 0
        %3040 = vmatpush.bf16.msra.mxu0 0
        %3041 = vmatpush.bf16.msra.mxu0 0
        %3042 = vmatpush.bf16.msra.mxu0 0
        %3043 = vmatpush.bf16.msra.mxu0 0
        %3044 = vmatpush.bf16.msra.mxu0 0
        %3045 = vmatpush.bf16.msra.mxu0 0
        %3046 = vmatpush.bf16.msra.mxu0 0
        %3047 = vmatpush.bf16.msra.mxu0 %v3038
        %3048 = vmatmul.bf16.gmra.mxu0 %v3014
        %v3049 = vpop.f32.mrf.mxu0
        %v3050 = vadd.f32 0.0, %v3049
        %v3051 = vpop.f32.mrf.mxu0
        %v3052 = vadd.f32 0.0, %v3051
        %3053 = vmatmul.bf16.gmra.mxu0 %v3017
        %v3054 = vpop.f32.mrf.mxu0
        %v3055 = vadd.f32 0.0, %v3054
        %v3056 = vpop.f32.mrf.mxu0
        %v3057 = vadd.f32 0.0, %v3056
        %3058 = vmatmul.bf16.gmra.mxu0 %v3020
        %v3059 = vpop.f32.mrf.mxu0
        %v3060 = vadd.f32 0.0, %v3059
        %v3061 = vpop.f32.mrf.mxu0
        %v3062 = vadd.f32 0.0, %v3061
        %3063 = vmatmul.bf16.gmra.mxu0 %v3023
        %v3064 = vpop.f32.mrf.mxu0
        %v3065 = vadd.f32 0.0, %v3064
        %v3066 = vpop.f32.mrf.mxu0
        %v3067 = vadd.f32 0.0, %v3066
        %3068 = vmatmul.bf16.gmra.mxu0 %v3026
        %v3069 = vpop.f32.mrf.mxu0
        %v3070 = vadd.f32 0.0, %v3069
        %v3071 = vpop.f32.mrf.mxu0
        %v3072 = vadd.f32 0.0, %v3071
        %3073 = vmatmul.bf16.gmra.mxu0 %v3029
        %v3074 = vpop.f32.mrf.mxu0
        %v3075 = vadd.f32 0.0, %v3074
        %v3076 = vpop.f32.mrf.mxu0
        %v3077 = vadd.f32 0.0, %v3076
        %3078 = vmatmul.bf16.gmra.mxu0 %v3032
        %v3079 = vpop.f32.mrf.mxu0
        %v3080 = vadd.f32 0.0, %v3079
        %v3081 = vpop.f32.mrf.mxu0
        %v3082 = vadd.f32 0.0, %v3081
        %3083 = vmatmul.bf16.gmra.mxu0 %v3035
        %v3084 = vpop.f32.mrf.mxu0
        %v3085 = vadd.f32 0.0, %v3084
        %v3086 = vpop.f32.mrf.mxu0
        %v3087 = vadd.f32 0.0, %v3086
        %3088 = vdwg.mxu0
        %v3089 = vadd.f32 %v2971, %v3050
        %v3090 = vadd.f32 %v2972, %v3052
        %v3091 = vadd.f32 %v2973, %v3055
        %v3092 = vadd.f32 %v2974, %v3057
        %v3093 = vadd.f32 %v2975, %v3060
        %v3094 = vadd.f32 %v2976, %v3062
        %v3095 = vadd.f32 %v2977, %v3065
        %v3096 = vadd.f32 %v2978, %v3067
        %v3097 = vadd.f32 %v2979, %v3070
        %v3098 = vadd.f32 %v2980, %v3072
        %v3099 = vadd.f32 %v2981, %v3075
        %v3100 = vadd.f32 %v2982, %v3077
        %v3101 = vadd.f32 %v2983, %v3080
        %v3102 = vadd.f32 %v2984, %v3082
        %v3103 = vadd.f32 %v2985, %v3085
        %v3104 = vadd.f32 %v2986, %v3087
        %v3105 = vld [vmem:[%s1456 + $0x2] sm:$0xff]
        %v3106 = vld [vmem:[%s1456 + $0xa] sm:$0xff]
        %v3107 = vld [vmem:[%s1456 + $0x1a] sm:$0xff]
        %v3108 = vld [vmem:[%s1456 + $0x22] sm:$0xff]
        %v3109 = vld [vmem:[%s1456 + $0x32] sm:$0xff]
        %v3110 = vld [vmem:[%s1456 + $0x3a] sm:$0xff]
        %v3111 = vld [vmem:[%s1456 + $0x4a] sm:$0xff]
        %v3112 = vld [vmem:[%s1456 + $0x52] sm:$0xff]
        %v3113 = vld [vmem:[%s1456 + $0x62] sm:$0xff]
        %v3114 = vld [vmem:[%s1456 + $0x6a] sm:$0xff]
        %v3115 = vld [vmem:[%s1456 + $0x7a] sm:$0xff]
        %v3116 = vld [vmem:[%s1456 + $0x82] sm:$0xff]
        %v3117 = vld [vmem:[%s1456 + $0x92] sm:$0xff]
        %v3118 = vld [vmem:[%s1456 + $0x9a] sm:$0xff]
        %v3119 = vld [vmem:[%s1456 + $0xaa] sm:$0xff]
        %v3120 = vld [vmem:[%s1456 + $0xb2] sm:$0xff]
        %v3121 = vpack.c.bf16 %v3106, %v3105
        %v3122 = vpack.c.bf16 %v3108, %v3107
        %v3123 = vpack.c.bf16 %v3110, %v3109
        %v3124 = vpack.c.bf16 %v3112, %v3111
        %v3125 = vpack.c.bf16 %v3114, %v3113
        %v3126 = vpack.c.bf16 %v3116, %v3115
        %v3127 = vpack.c.bf16 %v3118, %v3117
        %v3128 = vpack.c.bf16 %v3120, %v3119
        %s3129 = scalar_lea.vmem %s3, 20
        %v3130 = vld [vmem:[%s3129] sm:$0xf]
        %v3132 = vsel %vm331, %v3121, 0
        %v3135 = vsel %vm331, %v3122, 0
        %v3138 = vsel %vm331, %v3123, 0
        %v3141 = vsel %vm331, %v3124, 0
        %v3144 = vsel %vm331, %v3125, 0
        %v3147 = vsel %vm331, %v3126, 0
        %v3150 = vsel %vm331, %v3127, 0
        %v3153 = vsel %vm331, %v3128, 0
        %v3156 = vsel %vm2622, %v3130, 0
        %3158 = vmatpush.bf16.msra.mxu0 0
        %3159 = vmatpush.bf16.msra.mxu0 0
        %3160 = vmatpush.bf16.msra.mxu0 0
        %3161 = vmatpush.bf16.msra.mxu0 0
        %3162 = vmatpush.bf16.msra.mxu0 0
        %3163 = vmatpush.bf16.msra.mxu0 0
        %3164 = vmatpush.bf16.msra.mxu0 0
        %3165 = vmatpush.bf16.msra.mxu0 %v3156
        %3166 = vmatmul.bf16.gmra.mxu0 %v3132
        %v3167 = vpop.f32.mrf.mxu0
        %v3168 = vadd.f32 0.0, %v3167
        %v3169 = vpop.f32.mrf.mxu0
        %v3170 = vadd.f32 0.0, %v3169
        %3171 = vmatmul.bf16.gmra.mxu0 %v3135
        %v3172 = vpop.f32.mrf.mxu0
        %v3173 = vadd.f32 0.0, %v3172
        %v3174 = vpop.f32.mrf.mxu0
        %v3175 = vadd.f32 0.0, %v3174
        %3176 = vmatmul.bf16.gmra.mxu0 %v3138
        %v3177 = vpop.f32.mrf.mxu0
        %v3178 = vadd.f32 0.0, %v3177
        %v3179 = vpop.f32.mrf.mxu0
        %v3180 = vadd.f32 0.0, %v3179
        %3181 = vmatmul.bf16.gmra.mxu0 %v3141
        %v3182 = vpop.f32.mrf.mxu0
        %v3183 = vadd.f32 0.0, %v3182
        %v3184 = vpop.f32.mrf.mxu0
        %v3185 = vadd.f32 0.0, %v3184
        %3186 = vmatmul.bf16.gmra.mxu0 %v3144
        %v3187 = vpop.f32.mrf.mxu0
        %v3188 = vadd.f32 0.0, %v3187
        %v3189 = vpop.f32.mrf.mxu0
        %v3190 = vadd.f32 0.0, %v3189
        %3191 = vmatmul.bf16.gmra.mxu0 %v3147
        %v3192 = vpop.f32.mrf.mxu0
        %v3193 = vadd.f32 0.0, %v3192
        %v3194 = vpop.f32.mrf.mxu0
        %v3195 = vadd.f32 0.0, %v3194
        %3196 = vmatmul.bf16.gmra.mxu0 %v3150
        %v3197 = vpop.f32.mrf.mxu0
        %v3198 = vadd.f32 0.0, %v3197
        %v3199 = vpop.f32.mrf.mxu0
        %v3200 = vadd.f32 0.0, %v3199
        %3201 = vmatmul.bf16.gmra.mxu0 %v3153
        %v3202 = vpop.f32.mrf.mxu0
        %v3203 = vadd.f32 0.0, %v3202
        %v3204 = vpop.f32.mrf.mxu0
        %v3205 = vadd.f32 0.0, %v3204
        %3206 = vdwg.mxu0
        %v3207 = vadd.f32 %v3089, %v3168
        %v3208 = vadd.f32 %v3090, %v3170
        %v3209 = vadd.f32 %v3091, %v3173
        %v3210 = vadd.f32 %v3092, %v3175
        %v3211 = vadd.f32 %v3093, %v3178
        %v3212 = vadd.f32 %v3094, %v3180
        %v3213 = vadd.f32 %v3095, %v3183
        %v3214 = vadd.f32 %v3096, %v3185
        %v3215 = vadd.f32 %v3097, %v3188
        %v3216 = vadd.f32 %v3098, %v3190
        %v3217 = vadd.f32 %v3099, %v3193
        %v3218 = vadd.f32 %v3100, %v3195
        %v3219 = vadd.f32 %v3101, %v3198
        %v3220 = vadd.f32 %v3102, %v3200
        %v3221 = vadd.f32 %v3103, %v3203
        %v3222 = vadd.f32 %v3104, %v3205
        %s3223 = scalar_lea.vmem [#allocation2], 48
        %v3224 = vld [vmem:[%s3223] sm:$0xff]
        %v3225 = vld [vmem:[%s3223 + $0x8] sm:$0xff]
        %v3226 = vld [vmem:[%s3223 + $0x18] sm:$0xff]
        %v3227 = vld [vmem:[%s3223 + $0x20] sm:$0xff]
        %v3228 = vld [vmem:[%s3223 + $0x30] sm:$0xff]
        %v3229 = vld [vmem:[%s3223 + $0x38] sm:$0xff]
        %v3230 = vld [vmem:[%s3223 + $0x48] sm:$0xff]
        %v3231 = vld [vmem:[%s3223 + $0x50] sm:$0xff]
        %v3232 = vld [vmem:[%s3223 + $0x60] sm:$0xff]
        %v3233 = vld [vmem:[%s3223 + $0x68] sm:$0xff]
        %v3234 = vld [vmem:[%s3223 + $0x78] sm:$0xff]
        %v3235 = vld [vmem:[%s3223 + $0x80] sm:$0xff]
        %v3236 = vld [vmem:[%s3223 + $0x90] sm:$0xff]
        %v3237 = vld [vmem:[%s3223 + $0x98] sm:$0xff]
        %v3238 = vld [vmem:[%s3223 + $0xa8] sm:$0xff]
        %v3239 = vld [vmem:[%s3223 + $0xb0] sm:$0xff]
        %v3240 = vpack.c.bf16 %v3225, %v3224
        %v3241 = vpack.c.bf16 %v3227, %v3226
        %v3242 = vpack.c.bf16 %v3229, %v3228
        %v3243 = vpack.c.bf16 %v3231, %v3230
        %v3244 = vpack.c.bf16 %v3233, %v3232
        %v3245 = vpack.c.bf16 %v3235, %v3234
        %v3246 = vpack.c.bf16 %v3237, %v3236
        %v3247 = vpack.c.bf16 %v3239, %v3238
        %s3248 = scalar_lea.vmem %s3, 24
        %v3249 = vld [vmem:[%s3248] sm:$0xf]
        %v3251 = vsel %vm331, %v3240, 0
        %v3254 = vsel %vm331, %v3241, 0
        %v3257 = vsel %vm331, %v3242, 0
        %v3260 = vsel %vm331, %v3243, 0
        %v3263 = vsel %vm331, %v3244, 0
        %v3266 = vsel %vm331, %v3245, 0
        %v3269 = vsel %vm331, %v3246, 0
        %v3272 = vsel %vm331, %v3247, 0
        %v3275 = vsel %vm2622, %v3249, 0
        %3277 = vmatpush.bf16.msra.mxu0 0
        %3278 = vmatpush.bf16.msra.mxu0 0
        %3279 = vmatpush.bf16.msra.mxu0 0
        %3280 = vmatpush.bf16.msra.mxu0 0
        %3281 = vmatpush.bf16.msra.mxu0 0
        %3282 = vmatpush.bf16.msra.mxu0 0
        %3283 = vmatpush.bf16.msra.mxu0 0
        %3284 = vmatpush.bf16.msra.mxu0 %v3275
        %3285 = vmatmul.bf16.gmra.mxu0 %v3251
        %v3286 = vpop.f32.mrf.mxu0
        %v3287 = vadd.f32 0.0, %v3286
        %v3288 = vpop.f32.mrf.mxu0
        %v3289 = vadd.f32 0.0, %v3288
        %3290 = vmatmul.bf16.gmra.mxu0 %v3254
        %v3291 = vpop.f32.mrf.mxu0
        %v3292 = vadd.f32 0.0, %v3291
        %v3293 = vpop.f32.mrf.mxu0
        %v3294 = vadd.f32 0.0, %v3293
        %3295 = vmatmul.bf16.gmra.mxu0 %v3257
        %v3296 = vpop.f32.mrf.mxu0
        %v3297 = vadd.f32 0.0, %v3296
        %v3298 = vpop.f32.mrf.mxu0
        %v3299 = vadd.f32 0.0, %v3298
        %3300 = vmatmul.bf16.gmra.mxu0 %v3260
        %v3301 = vpop.f32.mrf.mxu0
        %v3302 = vadd.f32 0.0, %v3301
        %v3303 = vpop.f32.mrf.mxu0
        %v3304 = vadd.f32 0.0, %v3303
        %3305 = vmatmul.bf16.gmra.mxu0 %v3263
        %v3306 = vpop.f32.mrf.mxu0
        %v3307 = vadd.f32 0.0, %v3306
        %v3308 = vpop.f32.mrf.mxu0
        %v3309 = vadd.f32 0.0, %v3308
        %3310 = vmatmul.bf16.gmra.mxu0 %v3266
        %v3311 = vpop.f32.mrf.mxu0
        %v3312 = vadd.f32 0.0, %v3311
        %v3313 = vpop.f32.mrf.mxu0
        %v3314 = vadd.f32 0.0, %v3313
        %3315 = vmatmul.bf16.gmra.mxu0 %v3269
        %v3316 = vpop.f32.mrf.mxu0
        %v3317 = vadd.f32 0.0, %v3316
        %v3318 = vpop.f32.mrf.mxu0
        %v3319 = vadd.f32 0.0, %v3318
        %3320 = vmatmul.bf16.gmra.mxu0 %v3272
        %v3321 = vpop.f32.mrf.mxu0
        %v3322 = vadd.f32 0.0, %v3321
        %v3323 = vpop.f32.mrf.mxu0
        %v3324 = vadd.f32 0.0, %v3323
        %3325 = vdwg.mxu0
        %v3326 = vadd.f32 %v3207, %v3287
        %v3327 = vadd.f32 %v3208, %v3289
        %v3328 = vadd.f32 %v3209, %v3292
        %v3329 = vadd.f32 %v3210, %v3294
        %v3330 = vadd.f32 %v3211, %v3297
        %v3331 = vadd.f32 %v3212, %v3299
        %v3332 = vadd.f32 %v3213, %v3302
        %v3333 = vadd.f32 %v3214, %v3304
        %v3334 = vadd.f32 %v3215, %v3307
        %v3335 = vadd.f32 %v3216, %v3309
        %v3336 = vadd.f32 %v3217, %v3312
        %v3337 = vadd.f32 %v3218, %v3314
        %v3338 = vadd.f32 %v3219, %v3317
        %v3339 = vadd.f32 %v3220, %v3319
        %v3340 = vadd.f32 %v3221, %v3322
        %v3341 = vadd.f32 %v3222, %v3324
        %v3342 = vld [vmem:[%s3223 + $0x1] sm:$0xff]
        %v3343 = vld [vmem:[%s3223 + $0x9] sm:$0xff]
        %v3344 = vld [vmem:[%s3223 + $0x19] sm:$0xff]
        %v3345 = vld [vmem:[%s3223 + $0x21] sm:$0xff]
        %v3346 = vld [vmem:[%s3223 + $0x31] sm:$0xff]
        %v3347 = vld [vmem:[%s3223 + $0x39] sm:$0xff]
        %v3348 = vld [vmem:[%s3223 + $0x49] sm:$0xff]
        %v3349 = vld [vmem:[%s3223 + $0x51] sm:$0xff]
        %v3350 = vld [vmem:[%s3223 + $0x61] sm:$0xff]
        %v3351 = vld [vmem:[%s3223 + $0x69] sm:$0xff]
        %v3352 = vld [vmem:[%s3223 + $0x79] sm:$0xff]
        %v3353 = vld [vmem:[%s3223 + $0x81] sm:$0xff]
        %v3354 = vld [vmem:[%s3223 + $0x91] sm:$0xff]
        %v3355 = vld [vmem:[%s3223 + $0x99] sm:$0xff]
        %v3356 = vld [vmem:[%s3223 + $0xa9] sm:$0xff]
        %v3357 = vld [vmem:[%s3223 + $0xb1] sm:$0xff]
        %v3358 = vpack.c.bf16 %v3343, %v3342
        %v3359 = vpack.c.bf16 %v3345, %v3344
        %v3360 = vpack.c.bf16 %v3347, %v3346
        %v3361 = vpack.c.bf16 %v3349, %v3348
        %v3362 = vpack.c.bf16 %v3351, %v3350
        %v3363 = vpack.c.bf16 %v3353, %v3352
        %v3364 = vpack.c.bf16 %v3355, %v3354
        %v3365 = vpack.c.bf16 %v3357, %v3356
        %s3366 = scalar_lea.vmem %s3, 28
        %v3367 = vld [vmem:[%s3366] sm:$0xf]
        %v3369 = vsel %vm331, %v3358, 0
        %v3372 = vsel %vm331, %v3359, 0
        %v3375 = vsel %vm331, %v3360, 0
        %v3378 = vsel %vm331, %v3361, 0
        %v3381 = vsel %vm331, %v3362, 0
        %v3384 = vsel %vm331, %v3363, 0
        %v3387 = vsel %vm331, %v3364, 0
        %v3390 = vsel %vm331, %v3365, 0
        %v3393 = vsel %vm2622, %v3367, 0
        %3395 = vmatpush.bf16.msra.mxu0 0
        %3396 = vmatpush.bf16.msra.mxu0 0
        %3397 = vmatpush.bf16.msra.mxu0 0
        %3398 = vmatpush.bf16.msra.mxu0 0
        %3399 = vmatpush.bf16.msra.mxu0 0
        %3400 = vmatpush.bf16.msra.mxu0 0
        %3401 = vmatpush.bf16.msra.mxu0 0
        %3402 = vmatpush.bf16.msra.mxu0 %v3393
        %3403 = vmatmul.bf16.gmra.mxu0 %v3369
        %v3404 = vpop.f32.mrf.mxu0
        %v3405 = vadd.f32 0.0, %v3404
        %v3406 = vpop.f32.mrf.mxu0
        %v3407 = vadd.f32 0.0, %v3406
        %3408 = vmatmul.bf16.gmra.mxu0 %v3372
        %v3409 = vpop.f32.mrf.mxu0
        %v3410 = vadd.f32 0.0, %v3409
        %v3411 = vpop.f32.mrf.mxu0
        %v3412 = vadd.f32 0.0, %v3411
        %3413 = vmatmul.bf16.gmra.mxu0 %v3375
        %v3414 = vpop.f32.mrf.mxu0
        %v3415 = vadd.f32 0.0, %v3414
        %v3416 = vpop.f32.mrf.mxu0
        %v3417 = vadd.f32 0.0, %v3416
        %3418 = vmatmul.bf16.gmra.mxu0 %v3378
        %v3419 = vpop.f32.mrf.mxu0
        %v3420 = vadd.f32 0.0, %v3419
        %v3421 = vpop.f32.mrf.mxu0
        %v3422 = vadd.f32 0.0, %v3421
        %3423 = vmatmul.bf16.gmra.mxu0 %v3381
        %v3424 = vpop.f32.mrf.mxu0
        %v3425 = vadd.f32 0.0, %v3424
        %v3426 = vpop.f32.mrf.mxu0
        %v3427 = vadd.f32 0.0, %v3426
        %3428 = vmatmul.bf16.gmra.mxu0 %v3384
        %v3429 = vpop.f32.mrf.mxu0
        %v3430 = vadd.f32 0.0, %v3429
        %v3431 = vpop.f32.mrf.mxu0
        %v3432 = vadd.f32 0.0, %v3431
        %3433 = vmatmul.bf16.gmra.mxu0 %v3387
        %v3434 = vpop.f32.mrf.mxu0
        %v3435 = vadd.f32 0.0, %v3434
        %v3436 = vpop.f32.mrf.mxu0
        %v3437 = vadd.f32 0.0, %v3436
        %3438 = vmatmul.bf16.gmra.mxu0 %v3390
        %v3439 = vpop.f32.mrf.mxu0
        %v3440 = vadd.f32 0.0, %v3439
        %v3441 = vpop.f32.mrf.mxu0
        %v3442 = vadd.f32 0.0, %v3441
        %3443 = vdwg.mxu0
        %v3444 = vadd.f32 %v3326, %v3405
        %v3445 = vadd.f32 %v3327, %v3407
        %v3446 = vadd.f32 %v3328, %v3410
        %v3447 = vadd.f32 %v3329, %v3412
        %v3448 = vadd.f32 %v3330, %v3415
        %v3449 = vadd.f32 %v3331, %v3417
        %v3450 = vadd.f32 %v3332, %v3420
        %v3451 = vadd.f32 %v3333, %v3422
        %v3452 = vadd.f32 %v3334, %v3425
        %v3453 = vadd.f32 %v3335, %v3427
        %v3454 = vadd.f32 %v3336, %v3430
        %v3455 = vadd.f32 %v3337, %v3432
        %v3456 = vadd.f32 %v3338, %v3435
        %v3457 = vadd.f32 %v3339, %v3437
        %v3458 = vadd.f32 %v3340, %v3440
        %v3459 = vadd.f32 %v3341, %v3442
        %v3460 = vld [vmem:[%s3223 + $0x2] sm:$0xff]
        %v3461 = vld [vmem:[%s3223 + $0xa] sm:$0xff]
        %v3462 = vld [vmem:[%s3223 + $0x1a] sm:$0xff]
        %v3463 = vld [vmem:[%s3223 + $0x22] sm:$0xff]
        %v3464 = vld [vmem:[%s3223 + $0x32] sm:$0xff]
        %v3465 = vld [vmem:[%s3223 + $0x3a] sm:$0xff]
        %v3466 = vld [vmem:[%s3223 + $0x4a] sm:$0xff]
        %v3467 = vld [vmem:[%s3223 + $0x52] sm:$0xff]
        %v3468 = vld [vmem:[%s3223 + $0x62] sm:$0xff]
        %v3469 = vld [vmem:[%s3223 + $0x6a] sm:$0xff]
        %v3470 = vld [vmem:[%s3223 + $0x7a] sm:$0xff]
        %v3471 = vld [vmem:[%s3223 + $0x82] sm:$0xff]
        %v3472 = vld [vmem:[%s3223 + $0x92] sm:$0xff]
        %v3473 = vld [vmem:[%s3223 + $0x9a] sm:$0xff]
        %v3474 = vld [vmem:[%s3223 + $0xaa] sm:$0xff]
        %v3475 = vld [vmem:[%s3223 + $0xb2] sm:$0xff]
        %v3476 = vpack.c.bf16 %v3461, %v3460
        %v3477 = vpack.c.bf16 %v3463, %v3462
        %v3478 = vpack.c.bf16 %v3465, %v3464
        %v3479 = vpack.c.bf16 %v3467, %v3466
        %v3480 = vpack.c.bf16 %v3469, %v3468
        %v3481 = vpack.c.bf16 %v3471, %v3470
        %v3482 = vpack.c.bf16 %v3473, %v3472
        %v3483 = vpack.c.bf16 %v3475, %v3474
        %s3484 = scalar_lea.vmem %s3, 32
        %v3485 = vld [vmem:[%s3484] sm:$0xf]
        %v3487 = vsel %vm331, %v3476, 0
        %v3490 = vsel %vm331, %v3477, 0
        %v3493 = vsel %vm331, %v3478, 0
        %v3496 = vsel %vm331, %v3479, 0
        %v3499 = vsel %vm331, %v3480, 0
        %v3502 = vsel %vm331, %v3481, 0
        %v3505 = vsel %vm331, %v3482, 0
        %v3508 = vsel %vm331, %v3483, 0
        %v3511 = vsel %vm2622, %v3485, 0
        %3513 = vmatpush.bf16.msra.mxu0 0
        %3514 = vmatpush.bf16.msra.mxu0 0
        %3515 = vmatpush.bf16.msra.mxu0 0
        %3516 = vmatpush.bf16.msra.mxu0 0
        %3517 = vmatpush.bf16.msra.mxu0 0
        %3518 = vmatpush.bf16.msra.mxu0 0
        %3519 = vmatpush.bf16.msra.mxu0 0
        %3520 = vmatpush.bf16.msra.mxu0 %v3511
        %3521 = vmatmul.bf16.gmra.mxu0 %v3487
        %v3522 = vpop.f32.mrf.mxu0
        %v3523 = vadd.f32 0.0, %v3522
        %v3524 = vpop.f32.mrf.mxu0
        %v3525 = vadd.f32 0.0, %v3524
        %3526 = vmatmul.bf16.gmra.mxu0 %v3490
        %v3527 = vpop.f32.mrf.mxu0
        %v3528 = vadd.f32 0.0, %v3527
        %v3529 = vpop.f32.mrf.mxu0
        %v3530 = vadd.f32 0.0, %v3529
        %3531 = vmatmul.bf16.gmra.mxu0 %v3493
        %v3532 = vpop.f32.mrf.mxu0
        %v3533 = vadd.f32 0.0, %v3532
        %v3534 = vpop.f32.mrf.mxu0
        %v3535 = vadd.f32 0.0, %v3534
        %3536 = vmatmul.bf16.gmra.mxu0 %v3496
        %v3537 = vpop.f32.mrf.mxu0
        %v3538 = vadd.f32 0.0, %v3537
        %v3539 = vpop.f32.mrf.mxu0
        %v3540 = vadd.f32 0.0, %v3539
        %3541 = vmatmul.bf16.gmra.mxu0 %v3499
        %v3542 = vpop.f32.mrf.mxu0
        %v3543 = vadd.f32 0.0, %v3542
        %v3544 = vpop.f32.mrf.mxu0
        %v3545 = vadd.f32 0.0, %v3544
        %3546 = vmatmul.bf16.gmra.mxu0 %v3502
        %v3547 = vpop.f32.mrf.mxu0
        %v3548 = vadd.f32 0.0, %v3547
        %v3549 = vpop.f32.mrf.mxu0
        %v3550 = vadd.f32 0.0, %v3549
        %3551 = vmatmul.bf16.gmra.mxu0 %v3505
        %v3552 = vpop.f32.mrf.mxu0
        %v3553 = vadd.f32 0.0, %v3552
        %v3554 = vpop.f32.mrf.mxu0
        %v3555 = vadd.f32 0.0, %v3554
        %3556 = vmatmul.bf16.gmra.mxu0 %v3508
        %v3557 = vpop.f32.mrf.mxu0
        %v3558 = vadd.f32 0.0, %v3557
        %v3559 = vpop.f32.mrf.mxu0
        %v3560 = vadd.f32 0.0, %v3559
        %3561 = vdwg.mxu0
        %v3562 = vadd.f32 %v3444, %v3523
        %v3563 = vadd.f32 %v3445, %v3525
        %v3564 = vadd.f32 %v3446, %v3528
        %v3565 = vadd.f32 %v3447, %v3530
        %v3566 = vadd.f32 %v3448, %v3533
        %v3567 = vadd.f32 %v3449, %v3535
        %v3568 = vadd.f32 %v3450, %v3538
        %v3569 = vadd.f32 %v3451, %v3540
        %v3570 = vadd.f32 %v3452, %v3543
        %v3571 = vadd.f32 %v3453, %v3545
        %v3572 = vadd.f32 %v3454, %v3548
        %v3573 = vadd.f32 %v3455, %v3550
        %v3574 = vadd.f32 %v3456, %v3553
        %v3575 = vadd.f32 %v3457, %v3555
        %v3576 = vadd.f32 %v3458, %v3558
        %v3577 = vadd.f32 %v3459, %v3560
        %v3579 = vperm.slane %v2546, 0
        %v3581 = vadd.f32 %v3562, %v3579
        %v3582 = vadd.f32 %v3563, %v3579
        %v3583 = vadd.f32 %v3564, %v3579
        %v3584 = vadd.f32 %v3565, %v3579
        %v3585 = vadd.f32 %v3566, %v3579
        %v3586 = vadd.f32 %v3567, %v3579
        %v3587 = vadd.f32 %v3568, %v3579
        %v3588 = vadd.f32 %v3569, %v3579
        %v3589 = vadd.f32 %v3570, %v3579
        %v3590 = vadd.f32 %v3571, %v3579
        %v3591 = vadd.f32 %v3572, %v3579
        %v3592 = vadd.f32 %v3573, %v3579
        %v3593 = vadd.f32 %v3574, %v3579
        %v3594 = vadd.f32 %v3575, %v3579
        %v3595 = vadd.f32 %v3576, %v3579
        %v3596 = vadd.f32 %v3577, %v3579
        %v3597 = vmax.f32 %v3581, 0.0
        %v3598 = vmax.f32 %v3582, 0.0
        %v3599 = vmax.f32 %v3583, 0.0
        %v3600 = vmax.f32 %v3584, 0.0
        %v3601 = vmax.f32 %v3585, 0.0
        %v3602 = vmax.f32 %v3586, 0.0
        %v3603 = vmax.f32 %v3587, 0.0
        %v3604 = vmax.f32 %v3588, 0.0
        %v3605 = vmax.f32 %v3589, 0.0
        %v3606 = vmax.f32 %v3590, 0.0
        %v3607 = vmax.f32 %v3591, 0.0
        %v3608 = vmax.f32 %v3592, 0.0
        %v3609 = vmax.f32 %v3593, 0.0
        %v3610 = vmax.f32 %v3594, 0.0
        %v3611 = vmax.f32 %v3595, 0.0
        %v3612 = vmax.f32 %v3596, 0.0
        %v3613 = vadd.f32 %v3597, %v3598
        %v3614 = vadd.f32 %v3613, %v3599
        %v3615 = vadd.f32 %v3614, %v3600
        %v3616 = vadd.f32 %v3615, %v3601
        %v3617 = vadd.f32 %v3616, %v3602
        %v3618 = vadd.f32 %v3617, %v3603
        %v3619 = vadd.f32 %v3618, %v3604
        %v3620 = vadd.f32 %v3619, %v3605
        %v3621 = vadd.f32 %v3620, %v3606
        %v3622 = vadd.f32 %v3621, %v3607
        %v3623 = vadd.f32 %v3622, %v3608
        %v3624 = vadd.f32 %v3623, %v3609
        %v3625 = vadd.f32 %v3624, %v3610
        %v3626 = vadd.f32 %v3625, %v3611
        %v3627 = vadd.f32 %v3626, %v3612
        %v3628 = vrot.slane %v3627, 4
        %v3629 = vadd.f32 %v3627, %v3628
        %v3630 = vrot.slane %v3629, 2
        %v3631 = vadd.f32 %v3629, %v3630
        %v3632 = vrot.slane %v3631, 1
        %v3633 = vadd.f32 %v3631, %v3632
        %v3634 = vadd.f32 %v3633, 0.0
        %s3635 = scalar_lea.vmem [#allocation2], 192
        %v3636 = vld [vmem:[%s3635] sm:$0xff]
        %v3637 = vld [vmem:[%s3635 + $0x8] sm:$0xff]
        %v3638 = vld [vmem:[%s3635 + $0x18] sm:$0xff]
        %v3639 = vld [vmem:[%s3635 + $0x20] sm:$0xff]
        %v3640 = vld [vmem:[%s3635 + $0x30] sm:$0xff]
        %v3641 = vld [vmem:[%s3635 + $0x38] sm:$0xff]
        %v3642 = vld [vmem:[%s3635 + $0x48] sm:$0xff]
        %v3643 = vld [vmem:[%s3635 + $0x50] sm:$0xff]
        %v3644 = vld [vmem:[%s3635 + $0x60] sm:$0xff]
        %v3645 = vld [vmem:[%s3635 + $0x68] sm:$0xff]
        %v3646 = vld [vmem:[%s3635 + $0x78] sm:$0xff]
        %v3647 = vld [vmem:[%s3635 + $0x80] sm:$0xff]
        %v3648 = vld [vmem:[%s3635 + $0x90] sm:$0xff]
        %v3649 = vld [vmem:[%s3635 + $0x98] sm:$0xff]
        %v3650 = vld [vmem:[%s3635 + $0xa8] sm:$0xff]
        %v3651 = vld [vmem:[%s3635 + $0xb0] sm:$0xff]
        %v3652 = vpack.c.bf16 %v3637, %v3636
        %v3653 = vpack.c.bf16 %v3639, %v3638
        %v3654 = vpack.c.bf16 %v3641, %v3640
        %v3655 = vpack.c.bf16 %v3643, %v3642
        %v3656 = vpack.c.bf16 %v3645, %v3644
        %v3657 = vpack.c.bf16 %v3647, %v3646
        %v3658 = vpack.c.bf16 %v3649, %v3648
        %v3659 = vpack.c.bf16 %v3651, %v3650
        %v3660 = vld [vmem:[%s3635 + $0x1] sm:$0xff]
        %v3661 = vld [vmem:[%s3635 + $0x9] sm:$0xff]
        %v3662 = vld [vmem:[%s3635 + $0x19] sm:$0xff]
        %v3663 = vld [vmem:[%s3635 + $0x21] sm:$0xff]
        %v3664 = vld [vmem:[%s3635 + $0x31] sm:$0xff]
        %v3665 = vld [vmem:[%s3635 + $0x39] sm:$0xff]
        %v3666 = vld [vmem:[%s3635 + $0x49] sm:$0xff]
        %v3667 = vld [vmem:[%s3635 + $0x51] sm:$0xff]
        %v3668 = vld [vmem:[%s3635 + $0x61] sm:$0xff]
        %v3669 = vld [vmem:[%s3635 + $0x69] sm:$0xff]
        %v3670 = vld [vmem:[%s3635 + $0x79] sm:$0xff]
        %v3671 = vld [vmem:[%s3635 + $0x81] sm:$0xff]
        %v3672 = vld [vmem:[%s3635 + $0x91] sm:$0xff]
        %v3673 = vld [vmem:[%s3635 + $0x99] sm:$0xff]
        %v3674 = vld [vmem:[%s3635 + $0xa9] sm:$0xff]
        %v3675 = vld [vmem:[%s3635 + $0xb1] sm:$0xff]
        %v3676 = vpack.c.bf16 %v3661, %v3660
        %v3677 = vpack.c.bf16 %v3663, %v3662
        %v3678 = vpack.c.bf16 %v3665, %v3664
        %v3679 = vpack.c.bf16 %v3667, %v3666
        %v3680 = vpack.c.bf16 %v3669, %v3668
        %v3681 = vpack.c.bf16 %v3671, %v3670
        %v3682 = vpack.c.bf16 %v3673, %v3672
        %v3683 = vpack.c.bf16 %v3675, %v3674
        %v3685 = vsel %vm331, %v3676, 0
        %v3688 = vsel %vm331, %v3677, 0
        %v3691 = vsel %vm331, %v3678, 0
        %v3694 = vsel %vm331, %v3679, 0
        %v3697 = vsel %vm331, %v3680, 0
        %v3700 = vsel %vm331, %v3681, 0
        %v3703 = vsel %vm331, %v3682, 0
        %v3706 = vsel %vm331, %v3683, 0
        %3708 = vmatpush.bf16.msra.mxu0 0
        %3709 = vmatpush.bf16.msra.mxu0 0
        %3710 = vmatpush.bf16.msra.mxu0 0
        %3711 = vmatpush.bf16.msra.mxu0 0
        %3712 = vmatpush.bf16.msra.mxu0 0
        %3713 = vmatpush.bf16.msra.mxu0 0
        %3714 = vmatpush.bf16.msra.mxu0 0
        %3715 = vmatpush.bf16.msra.mxu0 %v2624
        %3716 = vmatmul.bf16.gmra.mxu0 %v3685
        %v3717 = vpop.f32.mrf.mxu0
        %v3718 = vadd.f32 0.0, %v3717
        %v3719 = vpop.f32.mrf.mxu0
        %v3720 = vadd.f32 0.0, %v3719
        %3721 = vmatmul.bf16.gmra.mxu0 %v3688
        %v3722 = vpop.f32.mrf.mxu0
        %v3723 = vadd.f32 0.0, %v3722
        %v3724 = vpop.f32.mrf.mxu0
        %v3725 = vadd.f32 0.0, %v3724
        %3726 = vmatmul.bf16.gmra.mxu0 %v3691
        %v3727 = vpop.f32.mrf.mxu0
        %v3728 = vadd.f32 0.0, %v3727
        %v3729 = vpop.f32.mrf.mxu0
        %v3730 = vadd.f32 0.0, %v3729
        %3731 = vmatmul.bf16.gmra.mxu0 %v3694
        %v3732 = vpop.f32.mrf.mxu0
        %v3733 = vadd.f32 0.0, %v3732
        %v3734 = vpop.f32.mrf.mxu0
        %v3735 = vadd.f32 0.0, %v3734
        %3736 = vmatmul.bf16.gmra.mxu0 %v3697
        %v3737 = vpop.f32.mrf.mxu0
        %v3738 = vadd.f32 0.0, %v3737
        %v3739 = vpop.f32.mrf.mxu0
        %v3740 = vadd.f32 0.0, %v3739
        %3741 = vmatmul.bf16.gmra.mxu0 %v3700
        %v3742 = vpop.f32.mrf.mxu0
        %v3743 = vadd.f32 0.0, %v3742
        %v3744 = vpop.f32.mrf.mxu0
        %v3745 = vadd.f32 0.0, %v3744
        %3746 = vmatmul.bf16.gmra.mxu0 %v3703
        %v3747 = vpop.f32.mrf.mxu0
        %v3748 = vadd.f32 0.0, %v3747
        %v3749 = vpop.f32.mrf.mxu0
        %v3750 = vadd.f32 0.0, %v3749
        %3751 = vmatmul.bf16.gmra.mxu0 %v3706
        %v3752 = vpop.f32.mrf.mxu0
        %v3753 = vadd.f32 0.0, %v3752
        %v3754 = vpop.f32.mrf.mxu0
        %v3755 = vadd.f32 0.0, %v3754
        %3756 = vdwg.mxu0
        %v3758 = vsel %vm331, %v3652, 0
        %v3761 = vsel %vm331, %v3653, 0
        %v3764 = vsel %vm331, %v3654, 0
        %v3767 = vsel %vm331, %v3655, 0
        %v3770 = vsel %vm331, %v3656, 0
        %v3773 = vsel %vm331, %v3657, 0
        %v3776 = vsel %vm331, %v3658, 0
        %v3779 = vsel %vm331, %v3659, 0
        %3781 = vmatpush.bf16.msra.mxu0 0
        %3782 = vmatpush.bf16.msra.mxu0 0
        %3783 = vmatpush.bf16.msra.mxu0 0
        %3784 = vmatpush.bf16.msra.mxu0 0
        %3785 = vmatpush.bf16.msra.mxu0 0
        %3786 = vmatpush.bf16.msra.mxu0 0
        %3787 = vmatpush.bf16.msra.mxu0 0
        %3788 = vmatpush.bf16.msra.mxu0 %v2700
        %3789 = vmatmul.bf16.gmra.mxu0 %v3758
        %v3790 = vpop.f32.mrf.mxu0
        %v3791 = vadd.f32 %v3718, %v3790
        %v3792 = vpop.f32.mrf.mxu0
        %v3793 = vadd.f32 %v3720, %v3792
        %3794 = vmatmul.bf16.gmra.mxu0 %v3761
        %v3795 = vpop.f32.mrf.mxu0
        %v3796 = vadd.f32 %v3723, %v3795
        %v3797 = vpop.f32.mrf.mxu0
        %v3798 = vadd.f32 %v3725, %v3797
        %3799 = vmatmul.bf16.gmra.mxu0 %v3764
        %v3800 = vpop.f32.mrf.mxu0
        %v3801 = vadd.f32 %v3728, %v3800
        %v3802 = vpop.f32.mrf.mxu0
        %v3803 = vadd.f32 %v3730, %v3802
        %3804 = vmatmul.bf16.gmra.mxu0 %v3767
        %v3805 = vpop.f32.mrf.mxu0
        %v3806 = vadd.f32 %v3733, %v3805
        %v3807 = vpop.f32.mrf.mxu0
        %v3808 = vadd.f32 %v3735, %v3807
        %3809 = vmatmul.bf16.gmra.mxu0 %v3770
        %v3810 = vpop.f32.mrf.mxu0
        %v3811 = vadd.f32 %v3738, %v3810
        %v3812 = vpop.f32.mrf.mxu0
        %v3813 = vadd.f32 %v3740, %v3812
        %3814 = vmatmul.bf16.gmra.mxu0 %v3773
        %v3815 = vpop.f32.mrf.mxu0
        %v3816 = vadd.f32 %v3743, %v3815
        %v3817 = vpop.f32.mrf.mxu0
        %v3818 = vadd.f32 %v3745, %v3817
        %3819 = vmatmul.bf16.gmra.mxu0 %v3776
        %v3820 = vpop.f32.mrf.mxu0
        %v3821 = vadd.f32 %v3748, %v3820
        %v3822 = vpop.f32.mrf.mxu0
        %v3823 = vadd.f32 %v3750, %v3822
        %3824 = vmatmul.bf16.gmra.mxu0 %v3779
        %v3825 = vpop.f32.mrf.mxu0
        %v3826 = vadd.f32 %v3753, %v3825
        %v3827 = vpop.f32.mrf.mxu0
        %v3828 = vadd.f32 %v3755, %v3827
        %3829 = vdwg.mxu0
        %v3830 = vld [vmem:[%s3635 + $0x2] sm:$0xff]
        %v3831 = vld [vmem:[%s3635 + $0xa] sm:$0xff]
        %v3832 = vld [vmem:[%s3635 + $0x1a] sm:$0xff]
        %v3833 = vld [vmem:[%s3635 + $0x22] sm:$0xff]
        %v3834 = vld [vmem:[%s3635 + $0x32] sm:$0xff]
        %v3835 = vld [vmem:[%s3635 + $0x3a] sm:$0xff]
        %v3836 = vld [vmem:[%s3635 + $0x4a] sm:$0xff]
        %v3837 = vld [vmem:[%s3635 + $0x52] sm:$0xff]
        %v3838 = vld [vmem:[%s3635 + $0x62] sm:$0xff]
        %v3839 = vld [vmem:[%s3635 + $0x6a] sm:$0xff]
        %v3840 = vld [vmem:[%s3635 + $0x7a] sm:$0xff]
        %v3841 = vld [vmem:[%s3635 + $0x82] sm:$0xff]
        %v3842 = vld [vmem:[%s3635 + $0x92] sm:$0xff]
        %v3843 = vld [vmem:[%s3635 + $0x9a] sm:$0xff]
        %v3844 = vld [vmem:[%s3635 + $0xaa] sm:$0xff]
        %v3845 = vld [vmem:[%s3635 + $0xb2] sm:$0xff]
        %v3846 = vpack.c.bf16 %v3831, %v3830
        %v3847 = vpack.c.bf16 %v3833, %v3832
        %v3848 = vpack.c.bf16 %v3835, %v3834
        %v3849 = vpack.c.bf16 %v3837, %v3836
        %v3850 = vpack.c.bf16 %v3839, %v3838
        %v3851 = vpack.c.bf16 %v3841, %v3840
        %v3852 = vpack.c.bf16 %v3843, %v3842
        %v3853 = vpack.c.bf16 %v3845, %v3844
        %v3855 = vsel %vm331, %v3846, 0
        %v3858 = vsel %vm331, %v3847, 0
        %v3861 = vsel %vm331, %v3848, 0
        %v3864 = vsel %vm331, %v3849, 0
        %v3867 = vsel %vm331, %v3850, 0
        %v3870 = vsel %vm331, %v3851, 0
        %v3873 = vsel %vm331, %v3852, 0
        %v3876 = vsel %vm331, %v3853, 0
        %3878 = vmatpush.bf16.msra.mxu0 0
        %3879 = vmatpush.bf16.msra.mxu0 0
        %3880 = vmatpush.bf16.msra.mxu0 0
        %3881 = vmatpush.bf16.msra.mxu0 0
        %3882 = vmatpush.bf16.msra.mxu0 0
        %3883 = vmatpush.bf16.msra.mxu0 0
        %3884 = vmatpush.bf16.msra.mxu0 0
        %3885 = vmatpush.bf16.msra.mxu0 %v2802
        %3886 = vmatmul.bf16.gmra.mxu0 %v3855
        %v3887 = vpop.f32.mrf.mxu0
        %v3888 = vadd.f32 0.0, %v3887
        %v3889 = vpop.f32.mrf.mxu0
        %v3890 = vadd.f32 0.0, %v3889
        %3891 = vmatmul.bf16.gmra.mxu0 %v3858
        %v3892 = vpop.f32.mrf.mxu0
        %v3893 = vadd.f32 0.0, %v3892
        %v3894 = vpop.f32.mrf.mxu0
        %v3895 = vadd.f32 0.0, %v3894
        %3896 = vmatmul.bf16.gmra.mxu0 %v3861
        %v3897 = vpop.f32.mrf.mxu0
        %v3898 = vadd.f32 0.0, %v3897
        %v3899 = vpop.f32.mrf.mxu0
        %v3900 = vadd.f32 0.0, %v3899
        %3901 = vmatmul.bf16.gmra.mxu0 %v3864
        %v3902 = vpop.f32.mrf.mxu0
        %v3903 = vadd.f32 0.0, %v3902
        %v3904 = vpop.f32.mrf.mxu0
        %v3905 = vadd.f32 0.0, %v3904
        %3906 = vmatmul.bf16.gmra.mxu0 %v3867
        %v3907 = vpop.f32.mrf.mxu0
        %v3908 = vadd.f32 0.0, %v3907
        %v3909 = vpop.f32.mrf.mxu0
        %v3910 = vadd.f32 0.0, %v3909
        %3911 = vmatmul.bf16.gmra.mxu0 %v3870
        %v3912 = vpop.f32.mrf.mxu0
        %v3913 = vadd.f32 0.0, %v3912
        %v3914 = vpop.f32.mrf.mxu0
        %v3915 = vadd.f32 0.0, %v3914
        %3916 = vmatmul.bf16.gmra.mxu0 %v3873
        %v3917 = vpop.f32.mrf.mxu0
        %v3918 = vadd.f32 0.0, %v3917
        %v3919 = vpop.f32.mrf.mxu0
        %v3920 = vadd.f32 0.0, %v3919
        %3921 = vmatmul.bf16.gmra.mxu0 %v3876
        %v3922 = vpop.f32.mrf.mxu0
        %v3923 = vadd.f32 0.0, %v3922
        %v3924 = vpop.f32.mrf.mxu0
        %v3925 = vadd.f32 0.0, %v3924
        %3926 = vdwg.mxu0
        %v3927 = vadd.f32 %v3791, %v3888
        %v3928 = vadd.f32 %v3793, %v3890
        %v3929 = vadd.f32 %v3796, %v3893
        %v3930 = vadd.f32 %v3798, %v3895
        %v3931 = vadd.f32 %v3801, %v3898
        %v3932 = vadd.f32 %v3803, %v3900
        %v3933 = vadd.f32 %v3806, %v3903
        %v3934 = vadd.f32 %v3808, %v3905
        %v3935 = vadd.f32 %v3811, %v3908
        %v3936 = vadd.f32 %v3813, %v3910
        %v3937 = vadd.f32 %v3816, %v3913
        %v3938 = vadd.f32 %v3818, %v3915
        %v3939 = vadd.f32 %v3821, %v3918
        %v3940 = vadd.f32 %v3823, %v3920
        %v3941 = vadd.f32 %v3826, %v3923
        %v3942 = vadd.f32 %v3828, %v3925
        %v3943 = vld [vmem:[%s2529] sm:$0xff]
        %v3944 = vld [vmem:[%s2529 + $0x8] sm:$0xff]
        %v3945 = vld [vmem:[%s2529 + $0x18] sm:$0xff]
        %v3946 = vld [vmem:[%s2529 + $0x20] sm:$0xff]
        %v3947 = vld [vmem:[%s2529 + $0x30] sm:$0xff]
        %v3948 = vld [vmem:[%s2529 + $0x38] sm:$0xff]
        %v3949 = vld [vmem:[%s2529 + $0x48] sm:$0xff]
        %v3950 = vld [vmem:[%s2529 + $0x50] sm:$0xff]
        %v3951 = vld [vmem:[%s2529 + $0x60] sm:$0xff]
        %v3952 = vld [vmem:[%s2529 + $0x68] sm:$0xff]
        %v3953 = vld [vmem:[%s2529 + $0x78] sm:$0xff]
        %v3954 = vld [vmem:[%s2529 + $0x80] sm:$0xff]
        %v3955 = vld [vmem:[%s2529 + $0x90] sm:$0xff]
        %v3956 = vld [vmem:[%s2529 + $0x98] sm:$0xff]
        %v3957 = vld [vmem:[%s2529 + $0xa8] sm:$0xff]
        %v3958 = vld [vmem:[%s2529 + $0xb0] sm:$0xff]
        %v3959 = vpack.c.bf16 %v3944, %v3943
        %v3960 = vpack.c.bf16 %v3946, %v3945
        %v3961 = vpack.c.bf16 %v3948, %v3947
        %v3962 = vpack.c.bf16 %v3950, %v3949
        %v3963 = vpack.c.bf16 %v3952, %v3951
        %v3964 = vpack.c.bf16 %v3954, %v3953
        %v3965 = vpack.c.bf16 %v3956, %v3955
        %v3966 = vpack.c.bf16 %v3958, %v3957
        %v3968 = vsel %vm331, %v3959, 0
        %v3971 = vsel %vm331, %v3960, 0
        %v3974 = vsel %vm331, %v3961, 0
        %v3977 = vsel %vm331, %v3962, 0
        %v3980 = vsel %vm331, %v3963, 0
        %v3983 = vsel %vm331, %v3964, 0
        %v3986 = vsel %vm331, %v3965, 0
        %v3989 = vsel %vm331, %v3966, 0
        %3991 = vmatpush.bf16.msra.mxu0 0
        %3992 = vmatpush.bf16.msra.mxu0 0
        %3993 = vmatpush.bf16.msra.mxu0 0
        %3994 = vmatpush.bf16.msra.mxu0 0
        %3995 = vmatpush.bf16.msra.mxu0 0
        %3996 = vmatpush.bf16.msra.mxu0 0
        %3997 = vmatpush.bf16.msra.mxu0 0
        %3998 = vmatpush.bf16.msra.mxu0 %v2920
        %3999 = vmatmul.bf16.gmra.mxu0 %v3968
        %v4000 = vpop.f32.mrf.mxu0
        %v4001 = vadd.f32 0.0, %v4000
        %v4002 = vpop.f32.mrf.mxu0
        %v4003 = vadd.f32 0.0, %v4002
        %4004 = vmatmul.bf16.gmra.mxu0 %v3971
        %v4005 = vpop.f32.mrf.mxu0
        %v4006 = vadd.f32 0.0, %v4005
        %v4007 = vpop.f32.mrf.mxu0
        %v4008 = vadd.f32 0.0, %v4007
        %4009 = vmatmul.bf16.gmra.mxu0 %v3974
        %v4010 = vpop.f32.mrf.mxu0
        %v4011 = vadd.f32 0.0, %v4010
        %v4012 = vpop.f32.mrf.mxu0
        %v4013 = vadd.f32 0.0, %v4012
        %4014 = vmatmul.bf16.gmra.mxu0 %v3977
        %v4015 = vpop.f32.mrf.mxu0
        %v4016 = vadd.f32 0.0, %v4015
        %v4017 = vpop.f32.mrf.mxu0
        %v4018 = vadd.f32 0.0, %v4017
        %4019 = vmatmul.bf16.gmra.mxu0 %v3980
        %v4020 = vpop.f32.mrf.mxu0
        %v4021 = vadd.f32 0.0, %v4020
        %v4022 = vpop.f32.mrf.mxu0
        %v4023 = vadd.f32 0.0, %v4022
        %4024 = vmatmul.bf16.gmra.mxu0 %v3983
        %v4025 = vpop.f32.mrf.mxu0
        %v4026 = vadd.f32 0.0, %v4025
        %v4027 = vpop.f32.mrf.mxu0
        %v4028 = vadd.f32 0.0, %v4027
        %4029 = vmatmul.bf16.gmra.mxu0 %v3986
        %v4030 = vpop.f32.mrf.mxu0
        %v4031 = vadd.f32 0.0, %v4030
        %v4032 = vpop.f32.mrf.mxu0
        %v4033 = vadd.f32 0.0, %v4032
        %4034 = vmatmul.bf16.gmra.mxu0 %v3989
        %v4035 = vpop.f32.mrf.mxu0
        %v4036 = vadd.f32 0.0, %v4035
        %v4037 = vpop.f32.mrf.mxu0
        %v4038 = vadd.f32 0.0, %v4037
        %4039 = vdwg.mxu0
        %v4040 = vadd.f32 %v3927, %v4001
        %v4041 = vadd.f32 %v3928, %v4003
        %v4042 = vadd.f32 %v3929, %v4006
        %v4043 = vadd.f32 %v3930, %v4008
        %v4044 = vadd.f32 %v3931, %v4011
        %v4045 = vadd.f32 %v3932, %v4013
        %v4046 = vadd.f32 %v3933, %v4016
        %v4047 = vadd.f32 %v3934, %v4018
        %v4048 = vadd.f32 %v3935, %v4021
        %v4049 = vadd.f32 %v3936, %v4023
        %v4050 = vadd.f32 %v3937, %v4026
        %v4051 = vadd.f32 %v3938, %v4028
        %v4052 = vadd.f32 %v3939, %v4031
        %v4053 = vadd.f32 %v3940, %v4033
        %v4054 = vadd.f32 %v3941, %v4036
        %v4055 = vadd.f32 %v3942, %v4038
        %v4056 = vld [vmem:[%s2529 + $0x1] sm:$0xff]
        %v4057 = vld [vmem:[%s2529 + $0x9] sm:$0xff]
        %v4058 = vld [vmem:[%s2529 + $0x19] sm:$0xff]
        %v4059 = vld [vmem:[%s2529 + $0x21] sm:$0xff]
        %v4060 = vld [vmem:[%s2529 + $0x31] sm:$0xff]
        %v4061 = vld [vmem:[%s2529 + $0x39] sm:$0xff]
        %v4062 = vld [vmem:[%s2529 + $0x49] sm:$0xff]
        %v4063 = vld [vmem:[%s2529 + $0x51] sm:$0xff]
        %v4064 = vld [vmem:[%s2529 + $0x61] sm:$0xff]
        %v4065 = vld [vmem:[%s2529 + $0x69] sm:$0xff]
        %v4066 = vld [vmem:[%s2529 + $0x79] sm:$0xff]
        %v4067 = vld [vmem:[%s2529 + $0x81] sm:$0xff]
        %v4068 = vld [vmem:[%s2529 + $0x91] sm:$0xff]
        %v4069 = vld [vmem:[%s2529 + $0x99] sm:$0xff]
        %v4070 = vld [vmem:[%s2529 + $0xa9] sm:$0xff]
        %v4071 = vld [vmem:[%s2529 + $0xb1] sm:$0xff]
        %v4072 = vpack.c.bf16 %v4057, %v4056
        %v4073 = vpack.c.bf16 %v4059, %v4058
        %v4074 = vpack.c.bf16 %v4061, %v4060
        %v4075 = vpack.c.bf16 %v4063, %v4062
        %v4076 = vpack.c.bf16 %v4065, %v4064
        %v4077 = vpack.c.bf16 %v4067, %v4066
        %v4078 = vpack.c.bf16 %v4069, %v4068
        %v4079 = vpack.c.bf16 %v4071, %v4070
        %v4081 = vsel %vm331, %v4072, 0
        %v4084 = vsel %vm331, %v4073, 0
        %v4087 = vsel %vm331, %v4074, 0
        %v4090 = vsel %vm331, %v4075, 0
        %v4093 = vsel %vm331, %v4076, 0
        %v4096 = vsel %vm331, %v4077, 0
        %v4099 = vsel %vm331, %v4078, 0
        %v4102 = vsel %vm331, %v4079, 0
        %4104 = vmatpush.bf16.msra.mxu0 0
        %4105 = vmatpush.bf16.msra.mxu0 0
        %4106 = vmatpush.bf16.msra.mxu0 0
        %4107 = vmatpush.bf16.msra.mxu0 0
        %4108 = vmatpush.bf16.msra.mxu0 0
        %4109 = vmatpush.bf16.msra.mxu0 0
        %4110 = vmatpush.bf16.msra.mxu0 0
        %4111 = vmatpush.bf16.msra.mxu0 %v3038
        %4112 = vmatmul.bf16.gmra.mxu0 %v4081
        %v4113 = vpop.f32.mrf.mxu0
        %v4114 = vadd.f32 0.0, %v4113
        %v4115 = vpop.f32.mrf.mxu0
        %v4116 = vadd.f32 0.0, %v4115
        %4117 = vmatmul.bf16.gmra.mxu0 %v4084
        %v4118 = vpop.f32.mrf.mxu0
        %v4119 = vadd.f32 0.0, %v4118
        %v4120 = vpop.f32.mrf.mxu0
        %v4121 = vadd.f32 0.0, %v4120
        %4122 = vmatmul.bf16.gmra.mxu0 %v4087
        %v4123 = vpop.f32.mrf.mxu0
        %v4124 = vadd.f32 0.0, %v4123
        %v4125 = vpop.f32.mrf.mxu0
        %v4126 = vadd.f32 0.0, %v4125
        %4127 = vmatmul.bf16.gmra.mxu0 %v4090
        %v4128 = vpop.f32.mrf.mxu0
        %v4129 = vadd.f32 0.0, %v4128
        %v4130 = vpop.f32.mrf.mxu0
        %v4131 = vadd.f32 0.0, %v4130
        %4132 = vmatmul.bf16.gmra.mxu0 %v4093
        %v4133 = vpop.f32.mrf.mxu0
        %v4134 = vadd.f32 0.0, %v4133
        %v4135 = vpop.f32.mrf.mxu0
        %v4136 = vadd.f32 0.0, %v4135
        %4137 = vmatmul.bf16.gmra.mxu0 %v4096
        %v4138 = vpop.f32.mrf.mxu0
        %v4139 = vadd.f32 0.0, %v4138
        %v4140 = vpop.f32.mrf.mxu0
        %v4141 = vadd.f32 0.0, %v4140
        %4142 = vmatmul.bf16.gmra.mxu0 %v4099
        %v4143 = vpop.f32.mrf.mxu0
        %v4144 = vadd.f32 0.0, %v4143
        %v4145 = vpop.f32.mrf.mxu0
        %v4146 = vadd.f32 0.0, %v4145
        %4147 = vmatmul.bf16.gmra.mxu0 %v4102
        %v4148 = vpop.f32.mrf.mxu0
        %v4149 = vadd.f32 0.0, %v4148
        %v4150 = vpop.f32.mrf.mxu0
        %v4151 = vadd.f32 0.0, %v4150
        %4152 = vdwg.mxu0
        %v4153 = vadd.f32 %v4040, %v4114
        %v4154 = vadd.f32 %v4041, %v4116
        %v4155 = vadd.f32 %v4042, %v4119
        %v4156 = vadd.f32 %v4043, %v4121
        %v4157 = vadd.f32 %v4044, %v4124
        %v4158 = vadd.f32 %v4045, %v4126
        %v4159 = vadd.f32 %v4046, %v4129
        %v4160 = vadd.f32 %v4047, %v4131
        %v4161 = vadd.f32 %v4048, %v4134
        %v4162 = vadd.f32 %v4049, %v4136
        %v4163 = vadd.f32 %v4050, %v4139
        %v4164 = vadd.f32 %v4051, %v4141
        %v4165 = vadd.f32 %v4052, %v4144
        %v4166 = vadd.f32 %v4053, %v4146
        %v4167 = vadd.f32 %v4054, %v4149
        %v4168 = vadd.f32 %v4055, %v4151
        %v4169 = vld [vmem:[%s2529 + $0x2] sm:$0xff]
        %v4170 = vld [vmem:[%s2529 + $0xa] sm:$0xff]
        %v4171 = vld [vmem:[%s2529 + $0x1a] sm:$0xff]
        %v4172 = vld [vmem:[%s2529 + $0x22] sm:$0xff]
        %v4173 = vld [vmem:[%s2529 + $0x32] sm:$0xff]
        %v4174 = vld [vmem:[%s2529 + $0x3a] sm:$0xff]
        %v4175 = vld [vmem:[%s2529 + $0x4a] sm:$0xff]
        %v4176 = vld [vmem:[%s2529 + $0x52] sm:$0xff]
        %v4177 = vld [vmem:[%s2529 + $0x62] sm:$0xff]
        %v4178 = vld [vmem:[%s2529 + $0x6a] sm:$0xff]
        %v4179 = vld [vmem:[%s2529 + $0x7a] sm:$0xff]
        %v4180 = vld [vmem:[%s2529 + $0x82] sm:$0xff]
        %v4181 = vld [vmem:[%s2529 + $0x92] sm:$0xff]
        %v4182 = vld [vmem:[%s2529 + $0x9a] sm:$0xff]
        %v4183 = vld [vmem:[%s2529 + $0xaa] sm:$0xff]
        %v4184 = vld [vmem:[%s2529 + $0xb2] sm:$0xff]
        %v4185 = vpack.c.bf16 %v4170, %v4169
        %v4186 = vpack.c.bf16 %v4172, %v4171
        %v4187 = vpack.c.bf16 %v4174, %v4173
        %v4188 = vpack.c.bf16 %v4176, %v4175
        %v4189 = vpack.c.bf16 %v4178, %v4177
        %v4190 = vpack.c.bf16 %v4180, %v4179
        %v4191 = vpack.c.bf16 %v4182, %v4181
        %v4192 = vpack.c.bf16 %v4184, %v4183
        %v4194 = vsel %vm331, %v4185, 0
        %v4197 = vsel %vm331, %v4186, 0
        %v4200 = vsel %vm331, %v4187, 0
        %v4203 = vsel %vm331, %v4188, 0
        %v4206 = vsel %vm331, %v4189, 0
        %v4209 = vsel %vm331, %v4190, 0
        %v4212 = vsel %vm331, %v4191, 0
        %v4215 = vsel %vm331, %v4192, 0
        %4217 = vmatpush.bf16.msra.mxu0 0
        %4218 = vmatpush.bf16.msra.mxu0 0
        %4219 = vmatpush.bf16.msra.mxu0 0
        %4220 = vmatpush.bf16.msra.mxu0 0
        %4221 = vmatpush.bf16.msra.mxu0 0
        %4222 = vmatpush.bf16.msra.mxu0 0
        %4223 = vmatpush.bf16.msra.mxu0 0
        %4224 = vmatpush.bf16.msra.mxu0 %v3156
        %4225 = vmatmul.bf16.gmra.mxu0 %v4194
        %v4226 = vpop.f32.mrf.mxu0
        %v4227 = vadd.f32 0.0, %v4226
        %v4228 = vpop.f32.mrf.mxu0
        %v4229 = vadd.f32 0.0, %v4228
        %4230 = vmatmul.bf16.gmra.mxu0 %v4197
        %v4231 = vpop.f32.mrf.mxu0
        %v4232 = vadd.f32 0.0, %v4231
        %v4233 = vpop.f32.mrf.mxu0
        %v4234 = vadd.f32 0.0, %v4233
        %4235 = vmatmul.bf16.gmra.mxu0 %v4200
        %v4236 = vpop.f32.mrf.mxu0
        %v4237 = vadd.f32 0.0, %v4236
        %v4238 = vpop.f32.mrf.mxu0
        %v4239 = vadd.f32 0.0, %v4238
        %4240 = vmatmul.bf16.gmra.mxu0 %v4203
        %v4241 = vpop.f32.mrf.mxu0
        %v4242 = vadd.f32 0.0, %v4241
        %v4243 = vpop.f32.mrf.mxu0
        %v4244 = vadd.f32 0.0, %v4243
        %4245 = vmatmul.bf16.gmra.mxu0 %v4206
        %v4246 = vpop.f32.mrf.mxu0
        %v4247 = vadd.f32 0.0, %v4246
        %v4248 = vpop.f32.mrf.mxu0
        %v4249 = vadd.f32 0.0, %v4248
        %4250 = vmatmul.bf16.gmra.mxu0 %v4209
        %v4251 = vpop.f32.mrf.mxu0
        %v4252 = vadd.f32 0.0, %v4251
        %v4253 = vpop.f32.mrf.mxu0
        %v4254 = vadd.f32 0.0, %v4253
        %4255 = vmatmul.bf16.gmra.mxu0 %v4212
        %v4256 = vpop.f32.mrf.mxu0
        %v4257 = vadd.f32 0.0, %v4256
        %v4258 = vpop.f32.mrf.mxu0
        %v4259 = vadd.f32 0.0, %v4258
        %4260 = vmatmul.bf16.gmra.mxu0 %v4215
        %v4261 = vpop.f32.mrf.mxu0
        %v4262 = vadd.f32 0.0, %v4261
        %v4263 = vpop.f32.mrf.mxu0
        %v4264 = vadd.f32 0.0, %v4263
        %4265 = vdwg.mxu0
        %v4266 = vadd.f32 %v4153, %v4227
        %v4267 = vadd.f32 %v4154, %v4229
        %v4268 = vadd.f32 %v4155, %v4232
        %v4269 = vadd.f32 %v4156, %v4234
        %v4270 = vadd.f32 %v4157, %v4237
        %v4271 = vadd.f32 %v4158, %v4239
        %v4272 = vadd.f32 %v4159, %v4242
        %v4273 = vadd.f32 %v4160, %v4244
        %v4274 = vadd.f32 %v4161, %v4247
        %v4275 = vadd.f32 %v4162, %v4249
        %v4276 = vadd.f32 %v4163, %v4252
        %v4277 = vadd.f32 %v4164, %v4254
        %v4278 = vadd.f32 %v4165, %v4257
        %v4279 = vadd.f32 %v4166, %v4259
        %v4280 = vadd.f32 %v4167, %v4262
        %v4281 = vadd.f32 %v4168, %v4264
        %s4282 = scalar_lea.vmem [#allocation2], 240
        %v4283 = vld [vmem:[%s4282] sm:$0xff]
        %v4284 = vld [vmem:[%s4282 + $0x8] sm:$0xff]
        %v4285 = vld [vmem:[%s4282 + $0x18] sm:$0xff]
        %v4286 = vld [vmem:[%s4282 + $0x20] sm:$0xff]
        %v4287 = vld [vmem:[%s4282 + $0x30] sm:$0xff]
        %v4288 = vld [vmem:[%s4282 + $0x38] sm:$0xff]
        %v4289 = vld [vmem:[%s4282 + $0x48] sm:$0xff]
        %v4290 = vld [vmem:[%s4282 + $0x50] sm:$0xff]
        %v4291 = vld [vmem:[%s4282 + $0x60] sm:$0xff]
        %v4292 = vld [vmem:[%s4282 + $0x68] sm:$0xff]
        %v4293 = vld [vmem:[%s4282 + $0x78] sm:$0xff]
        %v4294 = vld [vmem:[%s4282 + $0x80] sm:$0xff]
        %v4295 = vld [vmem:[%s4282 + $0x90] sm:$0xff]
        %v4296 = vld [vmem:[%s4282 + $0x98] sm:$0xff]
        %v4297 = vld [vmem:[%s4282 + $0xa8] sm:$0xff]
        %v4298 = vld [vmem:[%s4282 + $0xb0] sm:$0xff]
        %v4299 = vpack.c.bf16 %v4284, %v4283
        %v4300 = vpack.c.bf16 %v4286, %v4285
        %v4301 = vpack.c.bf16 %v4288, %v4287
        %v4302 = vpack.c.bf16 %v4290, %v4289
        %v4303 = vpack.c.bf16 %v4292, %v4291
        %v4304 = vpack.c.bf16 %v4294, %v4293
        %v4305 = vpack.c.bf16 %v4296, %v4295
        %v4306 = vpack.c.bf16 %v4298, %v4297
        %v4308 = vsel %vm331, %v4299, 0
        %v4311 = vsel %vm331, %v4300, 0
        %v4314 = vsel %vm331, %v4301, 0
        %v4317 = vsel %vm331, %v4302, 0
        %v4320 = vsel %vm331, %v4303, 0
        %v4323 = vsel %vm331, %v4304, 0
        %v4326 = vsel %vm331, %v4305, 0
        %v4329 = vsel %vm331, %v4306, 0
        %4331 = vmatpush.bf16.msra.mxu0 0
        %4332 = vmatpush.bf16.msra.mxu0 0
        %4333 = vmatpush.bf16.msra.mxu0 0
        %4334 = vmatpush.bf16.msra.mxu0 0
        %4335 = vmatpush.bf16.msra.mxu0 0
        %4336 = vmatpush.bf16.msra.mxu0 0
        %4337 = vmatpush.bf16.msra.mxu0 0
        %4338 = vmatpush.bf16.msra.mxu0 %v3275
        %4339 = vmatmul.bf16.gmra.mxu0 %v4308
        %v4340 = vpop.f32.mrf.mxu0
        %v4341 = vadd.f32 0.0, %v4340
        %v4342 = vpop.f32.mrf.mxu0
        %v4343 = vadd.f32 0.0, %v4342
        %4344 = vmatmul.bf16.gmra.mxu0 %v4311
        %v4345 = vpop.f32.mrf.mxu0
        %v4346 = vadd.f32 0.0, %v4345
        %v4347 = vpop.f32.mrf.mxu0
        %v4348 = vadd.f32 0.0, %v4347
        %4349 = vmatmul.bf16.gmra.mxu0 %v4314
        %v4350 = vpop.f32.mrf.mxu0
        %v4351 = vadd.f32 0.0, %v4350
        %v4352 = vpop.f32.mrf.mxu0
        %v4353 = vadd.f32 0.0, %v4352
        %4354 = vmatmul.bf16.gmra.mxu0 %v4317
        %v4355 = vpop.f32.mrf.mxu0
        %v4356 = vadd.f32 0.0, %v4355
        %v4357 = vpop.f32.mrf.mxu0
        %v4358 = vadd.f32 0.0, %v4357
        %4359 = vmatmul.bf16.gmra.mxu0 %v4320
        %v4360 = vpop.f32.mrf.mxu0
        %v4361 = vadd.f32 0.0, %v4360
        %v4362 = vpop.f32.mrf.mxu0
        %v4363 = vadd.f32 0.0, %v4362
        %4364 = vmatmul.bf16.gmra.mxu0 %v4323
        %v4365 = vpop.f32.mrf.mxu0
        %v4366 = vadd.f32 0.0, %v4365
        %v4367 = vpop.f32.mrf.mxu0
        %v4368 = vadd.f32 0.0, %v4367
        %4369 = vmatmul.bf16.gmra.mxu0 %v4326
        %v4370 = vpop.f32.mrf.mxu0
        %v4371 = vadd.f32 0.0, %v4370
        %v4372 = vpop.f32.mrf.mxu0
        %v4373 = vadd.f32 0.0, %v4372
        %4374 = vmatmul.bf16.gmra.mxu0 %v4329
        %v4375 = vpop.f32.mrf.mxu0
        %v4376 = vadd.f32 0.0, %v4375
        %v4377 = vpop.f32.mrf.mxu0
        %v4378 = vadd.f32 0.0, %v4377
        %4379 = vdwg.mxu0
        %v4380 = vadd.f32 %v4266, %v4341
        %v4381 = vadd.f32 %v4267, %v4343
        %v4382 = vadd.f32 %v4268, %v4346
        %v4383 = vadd.f32 %v4269, %v4348
        %v4384 = vadd.f32 %v4270, %v4351
        %v4385 = vadd.f32 %v4271, %v4353
        %v4386 = vadd.f32 %v4272, %v4356
        %v4387 = vadd.f32 %v4273, %v4358
        %v4388 = vadd.f32 %v4274, %v4361
        %v4389 = vadd.f32 %v4275, %v4363
        %v4390 = vadd.f32 %v4276, %v4366
        %v4391 = vadd.f32 %v4277, %v4368
        %v4392 = vadd.f32 %v4278, %v4371
        %v4393 = vadd.f32 %v4279, %v4373
        %v4394 = vadd.f32 %v4280, %v4376
        %v4395 = vadd.f32 %v4281, %v4378
        %v4396 = vld [vmem:[%s4282 + $0x1] sm:$0xff]
        %v4397 = vld [vmem:[%s4282 + $0x9] sm:$0xff]
        %v4398 = vld [vmem:[%s4282 + $0x19] sm:$0xff]
        %v4399 = vld [vmem:[%s4282 + $0x21] sm:$0xff]
        %v4400 = vld [vmem:[%s4282 + $0x31] sm:$0xff]
        %v4401 = vld [vmem:[%s4282 + $0x39] sm:$0xff]
        %v4402 = vld [vmem:[%s4282 + $0x49] sm:$0xff]
        %v4403 = vld [vmem:[%s4282 + $0x51] sm:$0xff]
        %v4404 = vld [vmem:[%s4282 + $0x61] sm:$0xff]
        %v4405 = vld [vmem:[%s4282 + $0x69] sm:$0xff]
        %v4406 = vld [vmem:[%s4282 + $0x79] sm:$0xff]
        %v4407 = vld [vmem:[%s4282 + $0x81] sm:$0xff]
        %v4408 = vld [vmem:[%s4282 + $0x91] sm:$0xff]
        %v4409 = vld [vmem:[%s4282 + $0x99] sm:$0xff]
        %v4410 = vld [vmem:[%s4282 + $0xa9] sm:$0xff]
        %v4411 = vld [vmem:[%s4282 + $0xb1] sm:$0xff]
        %v4412 = vpack.c.bf16 %v4397, %v4396
        %v4413 = vpack.c.bf16 %v4399, %v4398
        %v4414 = vpack.c.bf16 %v4401, %v4400
        %v4415 = vpack.c.bf16 %v4403, %v4402
        %v4416 = vpack.c.bf16 %v4405, %v4404
        %v4417 = vpack.c.bf16 %v4407, %v4406
        %v4418 = vpack.c.bf16 %v4409, %v4408
        %v4419 = vpack.c.bf16 %v4411, %v4410
        %v4421 = vsel %vm331, %v4412, 0
        %v4424 = vsel %vm331, %v4413, 0
        %v4427 = vsel %vm331, %v4414, 0
        %v4430 = vsel %vm331, %v4415, 0
        %v4433 = vsel %vm331, %v4416, 0
        %v4436 = vsel %vm331, %v4417, 0
        %v4439 = vsel %vm331, %v4418, 0
        %v4442 = vsel %vm331, %v4419, 0
        %4444 = vmatpush.bf16.msra.mxu0 0
        %4445 = vmatpush.bf16.msra.mxu0 0
        %4446 = vmatpush.bf16.msra.mxu0 0
        %4447 = vmatpush.bf16.msra.mxu0 0
        %4448 = vmatpush.bf16.msra.mxu0 0
        %4449 = vmatpush.bf16.msra.mxu0 0
        %4450 = vmatpush.bf16.msra.mxu0 0
        %4451 = vmatpush.bf16.msra.mxu0 %v3393
        %4452 = vmatmul.bf16.gmra.mxu0 %v4421
        %v4453 = vpop.f32.mrf.mxu0
        %v4454 = vadd.f32 0.0, %v4453
        %v4455 = vpop.f32.mrf.mxu0
        %v4456 = vadd.f32 0.0, %v4455
        %4457 = vmatmul.bf16.gmra.mxu0 %v4424
        %v4458 = vpop.f32.mrf.mxu0
        %v4459 = vadd.f32 0.0, %v4458
        %v4460 = vpop.f32.mrf.mxu0
        %v4461 = vadd.f32 0.0, %v4460
        %4462 = vmatmul.bf16.gmra.mxu0 %v4427
        %v4463 = vpop.f32.mrf.mxu0
        %v4464 = vadd.f32 0.0, %v4463
        %v4465 = vpop.f32.mrf.mxu0
        %v4466 = vadd.f32 0.0, %v4465
        %4467 = vmatmul.bf16.gmra.mxu0 %v4430
        %v4468 = vpop.f32.mrf.mxu0
        %v4469 = vadd.f32 0.0, %v4468
        %v4470 = vpop.f32.mrf.mxu0
        %v4471 = vadd.f32 0.0, %v4470
        %4472 = vmatmul.bf16.gmra.mxu0 %v4433
        %v4473 = vpop.f32.mrf.mxu0
        %v4474 = vadd.f32 0.0, %v4473
        %v4475 = vpop.f32.mrf.mxu0
        %v4476 = vadd.f32 0.0, %v4475
        %4477 = vmatmul.bf16.gmra.mxu0 %v4436
        %v4478 = vpop.f32.mrf.mxu0
        %v4479 = vadd.f32 0.0, %v4478
        %v4480 = vpop.f32.mrf.mxu0
        %v4481 = vadd.f32 0.0, %v4480
        %4482 = vmatmul.bf16.gmra.mxu0 %v4439
        %v4483 = vpop.f32.mrf.mxu0
        %v4484 = vadd.f32 0.0, %v4483
        %v4485 = vpop.f32.mrf.mxu0
        %v4486 = vadd.f32 0.0, %v4485
        %4487 = vmatmul.bf16.gmra.mxu0 %v4442
        %v4488 = vpop.f32.mrf.mxu0
        %v4489 = vadd.f32 0.0, %v4488
        %v4490 = vpop.f32.mrf.mxu0
        %v4491 = vadd.f32 0.0, %v4490
        %4492 = vdwg.mxu0
        %v4493 = vadd.f32 %v4380, %v4454
        %v4494 = vadd.f32 %v4381, %v4456
        %v4495 = vadd.f32 %v4382, %v4459
        %v4496 = vadd.f32 %v4383, %v4461
        %v4497 = vadd.f32 %v4384, %v4464
        %v4498 = vadd.f32 %v4385, %v4466
        %v4499 = vadd.f32 %v4386, %v4469
        %v4500 = vadd.f32 %v4387, %v4471
        %v4501 = vadd.f32 %v4388, %v4474
        %v4502 = vadd.f32 %v4389, %v4476
        %v4503 = vadd.f32 %v4390, %v4479
        %v4504 = vadd.f32 %v4391, %v4481
        %v4505 = vadd.f32 %v4392, %v4484
        %v4506 = vadd.f32 %v4393, %v4486
        %v4507 = vadd.f32 %v4394, %v4489
        %v4508 = vadd.f32 %v4395, %v4491
        %v4509 = vld [vmem:[%s4282 + $0x2] sm:$0xff]
        %v4510 = vld [vmem:[%s4282 + $0xa] sm:$0xff]
        %v4511 = vld [vmem:[%s4282 + $0x1a] sm:$0xff]
        %v4512 = vld [vmem:[%s4282 + $0x22] sm:$0xff]
        %v4513 = vld [vmem:[%s4282 + $0x32] sm:$0xff]
        %v4514 = vld [vmem:[%s4282 + $0x3a] sm:$0xff]
        %v4515 = vld [vmem:[%s4282 + $0x4a] sm:$0xff]
        %v4516 = vld [vmem:[%s4282 + $0x52] sm:$0xff]
        %v4517 = vld [vmem:[%s4282 + $0x62] sm:$0xff]
        %v4518 = vld [vmem:[%s4282 + $0x6a] sm:$0xff]
        %v4519 = vld [vmem:[%s4282 + $0x7a] sm:$0xff]
        %v4520 = vld [vmem:[%s4282 + $0x82] sm:$0xff]
        %v4521 = vld [vmem:[%s4282 + $0x92] sm:$0xff]
        %v4522 = vld [vmem:[%s4282 + $0x9a] sm:$0xff]
        %v4523 = vld [vmem:[%s4282 + $0xaa] sm:$0xff]
        %v4524 = vld [vmem:[%s4282 + $0xb2] sm:$0xff]
        %v4525 = vpack.c.bf16 %v4510, %v4509
        %v4526 = vpack.c.bf16 %v4512, %v4511
        %v4527 = vpack.c.bf16 %v4514, %v4513
        %v4528 = vpack.c.bf16 %v4516, %v4515
        %v4529 = vpack.c.bf16 %v4518, %v4517
        %v4530 = vpack.c.bf16 %v4520, %v4519
        %v4531 = vpack.c.bf16 %v4522, %v4521
        %v4532 = vpack.c.bf16 %v4524, %v4523
        %v4534 = vsel %vm331, %v4525, 0
        %v4537 = vsel %vm331, %v4526, 0
        %v4540 = vsel %vm331, %v4527, 0
        %v4543 = vsel %vm331, %v4528, 0
        %v4546 = vsel %vm331, %v4529, 0
        %v4549 = vsel %vm331, %v4530, 0
        %v4552 = vsel %vm331, %v4531, 0
        %v4555 = vsel %vm331, %v4532, 0
        %4557 = vmatpush.bf16.msra.mxu0 0
        %4558 = vmatpush.bf16.msra.mxu0 0
        %4559 = vmatpush.bf16.msra.mxu0 0
        %4560 = vmatpush.bf16.msra.mxu0 0
        %4561 = vmatpush.bf16.msra.mxu0 0
        %4562 = vmatpush.bf16.msra.mxu0 0
        %4563 = vmatpush.bf16.msra.mxu0 0
        %4564 = vmatpush.bf16.msra.mxu0 %v3511
        %4565 = vmatmul.bf16.gmra.mxu0 %v4534
        %v4566 = vpop.f32.mrf.mxu0
        %v4567 = vadd.f32 0.0, %v4566
        %v4568 = vpop.f32.mrf.mxu0
        %v4569 = vadd.f32 0.0, %v4568
        %4570 = vmatmul.bf16.gmra.mxu0 %v4537
        %v4571 = vpop.f32.mrf.mxu0
        %v4572 = vadd.f32 0.0, %v4571
        %v4573 = vpop.f32.mrf.mxu0
        %v4574 = vadd.f32 0.0, %v4573
        %4575 = vmatmul.bf16.gmra.mxu0 %v4540
        %v4576 = vpop.f32.mrf.mxu0
        %v4577 = vadd.f32 0.0, %v4576
        %v4578 = vpop.f32.mrf.mxu0
        %v4579 = vadd.f32 0.0, %v4578
        %4580 = vmatmul.bf16.gmra.mxu0 %v4543
        %v4581 = vpop.f32.mrf.mxu0
        %v4582 = vadd.f32 0.0, %v4581
        %v4583 = vpop.f32.mrf.mxu0
        %v4584 = vadd.f32 0.0, %v4583
        %4585 = vmatmul.bf16.gmra.mxu0 %v4546
        %v4586 = vpop.f32.mrf.mxu0
        %v4587 = vadd.f32 0.0, %v4586
        %v4588 = vpop.f32.mrf.mxu0
        %v4589 = vadd.f32 0.0, %v4588
        %4590 = vmatmul.bf16.gmra.mxu0 %v4549
        %v4591 = vpop.f32.mrf.mxu0
        %v4592 = vadd.f32 0.0, %v4591
        %v4593 = vpop.f32.mrf.mxu0
        %v4594 = vadd.f32 0.0, %v4593
        %4595 = vmatmul.bf16.gmra.mxu0 %v4552
        %v4596 = vpop.f32.mrf.mxu0
        %v4597 = vadd.f32 0.0, %v4596
        %v4598 = vpop.f32.mrf.mxu0
        %v4599 = vadd.f32 0.0, %v4598
        %4600 = vmatmul.bf16.gmra.mxu0 %v4555
        %v4601 = vpop.f32.mrf.mxu0
        %v4602 = vadd.f32 0.0, %v4601
        %v4603 = vpop.f32.mrf.mxu0
        %v4604 = vadd.f32 0.0, %v4603
        %4605 = vdwg.mxu0
        %v4606 = vadd.f32 %v4493, %v4567
        %v4607 = vadd.f32 %v4494, %v4569
        %v4608 = vadd.f32 %v4495, %v4572
        %v4609 = vadd.f32 %v4496, %v4574
        %v4610 = vadd.f32 %v4497, %v4577
        %v4611 = vadd.f32 %v4498, %v4579
        %v4612 = vadd.f32 %v4499, %v4582
        %v4613 = vadd.f32 %v4500, %v4584
        %v4614 = vadd.f32 %v4501, %v4587
        %v4615 = vadd.f32 %v4502, %v4589
        %v4616 = vadd.f32 %v4503, %v4592
        %v4617 = vadd.f32 %v4504, %v4594
        %v4618 = vadd.f32 %v4505, %v4597
        %v4619 = vadd.f32 %v4506, %v4599
        %v4620 = vadd.f32 %v4507, %v4602
        %v4621 = vadd.f32 %v4508, %v4604
        %v4622 = vadd.f32 %v4606, %v3579
        %v4623 = vadd.f32 %v4607, %v3579
        %v4624 = vadd.f32 %v4608, %v3579
        %v4625 = vadd.f32 %v4609, %v3579
        %v4626 = vadd.f32 %v4610, %v3579
        %v4627 = vadd.f32 %v4611, %v3579
        %v4628 = vadd.f32 %v4612, %v3579
        %v4629 = vadd.f32 %v4613, %v3579
        %v4630 = vadd.f32 %v4614, %v3579
        %v4631 = vadd.f32 %v4615, %v3579
        %v4632 = vadd.f32 %v4616, %v3579
        %v4633 = vadd.f32 %v4617, %v3579
        %v4634 = vadd.f32 %v4618, %v3579
        %v4635 = vadd.f32 %v4619, %v3579
        %v4636 = vadd.f32 %v4620, %v3579
        %v4637 = vadd.f32 %v4621, %v3579
        %v4638 = vmax.f32 %v4622, 0.0
        %v4639 = vmax.f32 %v4623, 0.0
        %v4640 = vmax.f32 %v4624, 0.0
        %v4641 = vmax.f32 %v4625, 0.0
        %v4642 = vmax.f32 %v4626, 0.0
        %v4643 = vmax.f32 %v4627, 0.0
        %v4644 = vmax.f32 %v4628, 0.0
        %v4645 = vmax.f32 %v4629, 0.0
        %v4646 = vmax.f32 %v4630, 0.0
        %v4647 = vmax.f32 %v4631, 0.0
        %v4648 = vmax.f32 %v4632, 0.0
        %v4649 = vmax.f32 %v4633, 0.0
        %v4650 = vmax.f32 %v4634, 0.0
        %v4651 = vmax.f32 %v4635, 0.0
        %v4652 = vmax.f32 %v4636, 0.0
        %v4653 = vmax.f32 %v4637, 0.0
        %v4654 = vadd.f32 %v4638, %v4639
        %v4655 = vadd.f32 %v4654, %v4640
        %v4656 = vadd.f32 %v4655, %v4641
        %v4657 = vadd.f32 %v4656, %v4642
        %v4658 = vadd.f32 %v4657, %v4643
        %v4659 = vadd.f32 %v4658, %v4644
        %v4660 = vadd.f32 %v4659, %v4645
        %v4661 = vadd.f32 %v4660, %v4646
        %v4662 = vadd.f32 %v4661, %v4647
        %v4663 = vadd.f32 %v4662, %v4648
        %v4664 = vadd.f32 %v4663, %v4649
        %v4665 = vadd.f32 %v4664, %v4650
        %v4666 = vadd.f32 %v4665, %v4651
        %v4667 = vadd.f32 %v4666, %v4652
        %v4668 = vadd.f32 %v4667, %v4653
        %v4669 = vrot.slane %v4668, 4
        %v4670 = vadd.f32 %v4668, %v4669
        %v4671 = vrot.slane %v4670, 2
        %v4672 = vadd.f32 %v4670, %v4671
        %v4673 = vrot.slane %v4672, 1
        %v4674 = vadd.f32 %v4672, %v4673
        %v4675 = vadd.f32 %v3634, %v4674
        %v4676 = vmul.f32 %v4675, 0.00390625
        %v4677 = vpack.c.bf16 %v4676, %v4676
        %v4678 = vld [vmem:[%s5] sm:$0xf]
        %v4679 = vld [vmem:[%s5 + $0x4] sm:$0xf]
        %v4680 = vld [vmem:[%s6] sm:$0x1]
        %v4683 = vunpack.c.l.b16 %v4678
        %v4684 = vunpack.c.l.b16 %v4679
        %v4685 = vpack.c.b16 %v4684, %v4683
        %vm4687 = vcmask 130048
        %v4689 = vsel %vm4687, %v4677, 0
        %4691 = vmatpush.bf16.msra.mxu0 0
        %4692 = vmatpush.bf16.msra.mxu0 0
        %4693 = vmatpush.bf16.msra.mxu0 0
        %4694 = vmatpush.bf16.msra.mxu0 0
        %4695 = vmatpush.bf16.msra.mxu0 0
        %4696 = vmatpush.bf16.msra.mxu0 0
        %4697 = vmatpush.bf16.msra.mxu0 0
        %4698 = vmatpush.bf16.msra.mxu0 %v4685
        %4699 = vmatmul.bf16.gmra.mxu0 %v4689
        %v4700 = vpop.f32.mrf.mxu0
        %v4701 = vadd.f32 %v4680, %v4700
        %v4702 = vpop.f32.mrf.mxu0
        %4703 = vdwg.mxu0
        %v4704 = vmax.f32 %v4701, 0.0
        %v4705 = vpack.c.bf16 %v4704, %v4704
        %v4706 = vld [vmem:[%s7] sm:$0xf]
        %v4707 = vld [vmem:[%s7 + $0x4] sm:$0xf]
        %v4708 = vld [vmem:[%s7 + $0x8] sm:$0xf]
        %v4709 = vld [vmem:[%s7 + $0xc] sm:$0xf]
        %v4710 = vld [vmem:[%s8] sm:$0x1]
        %v4715 = vunpack.c.l.b16 %v4706
        %v4716 = vunpack.c.l.b16 %v4707
        %v4717 = vunpack.c.l.b16 %v4708
        %v4718 = vunpack.c.l.b16 %v4709
        %v4719 = vpack.c.b16 %v4716, %v4715
        %v4720 = vpack.c.b16 %v4718, %v4717
        %vm4723 = vcmask 261120
        %v4725 = vsel %vm4723, %v4705, 0
        %4727 = vmatpush.bf16.msra.mxu0 0
        %4728 = vmatpush.bf16.msra.mxu0 0
        %4729 = vmatpush.bf16.msra.mxu0 0
        %4730 = vmatpush.bf16.msra.mxu0 0
        %4731 = vmatpush.bf16.msra.mxu0 0
        %4732 = vmatpush.bf16.msra.mxu0 0
        %4733 = vmatpush.bf16.msra.mxu0 %v4720
        %4734 = vmatpush.bf16.msra.mxu0 %v4719
        %4735 = vmatmul.bf16.gmra.mxu0 %v4725
        %v4736 = vpop.f32.mrf.mxu0
        %v4737 = vadd.f32 %v4710, %v4736
        %v4738 = vpop.f32.mrf.mxu0
        %4739 = vdwg.mxu0
        %4740 = vst [vmem:[%s324] sm:$0x1] %v4737
        %s4741 = sand.u32 %s225, 1
        %s4742 = scalar_lea.sflag [#allocation4], %s4741
        %s4743 = sand.u32 %s225, 1
        %s4744 = scalar_lea.vmem [#allocation3], %s4743
        // Predicated region
        $region57: #{model_forward.1} parent=55 // pred_check
          %p4745 = pneg %p235
        $region58: #{model_forward.1} parent=55 // pred_check_branch
          %4747 = sbr.rel (%p4745) target = $region60
        $region59: #{model_forward.1} parent=55 // pred_region
          %4749 = vsyncadd %s4742, 0
          %s4750 = scalar_lea.hbm %s9, %s23
          %s4752 = sshll.u32 %s4744, 4
          %s4753 = int_to_ptr.vmem [resolvable:$true] %s4752
          %s4754 = sshll.u32 %s4750, 4
          %s4755 = int_to_ptr.hbm [resolvable:$true] %s4754
          %4757 = dma.vmem_to_hbm [thread:$0]  %s4753, 16, %s4755, %s4742
        $region60: #{model_forward.1} parent=55 // pred_fallthru
          _
      $region56: #{model_forward.1} parent=5 // pred_fallthru
        _
      %p4758 = scmp.le.s32.totalorder 2, %s18
      // Predicated region
      $region61: #{model_forward.1} parent=5 // pred_check
        %p4759 = pneg %p4758
      $region62: #{model_forward.1} parent=5 // pred_check_branch
        %4761 = sbr.rel (%p4759) target = $region64
      $region63: #{model_forward.1} parent=5 // pred_region
        %s4762 = ssub.s32 %s18, 2
        // Predicated region
        $region65: #{model_forward.1} parent=63 // pred_check
          %p4763 = pneg %p241
        $region66: #{model_forward.1} parent=63 // pred_check_branch
          %4765 = sbr.rel (%p4763) target = $region68
        $region67: #{model_forward.1} parent=63 // pred_region
          %s4766 = sand.u32 %s226, 1
          %s4767 = scalar_lea.sflag [#allocation4], %s4766
          %s4768 = sand.u32 %s226, 1
          %s4769 = scalar_lea.vmem [#allocation3], %s4768
          %4771 = dma.done %s4767, 16
        $region68: #{model_forward.1} parent=63 // pred_fallthru
          _
      $region64: #{model_forward.1} parent=5 // pred_fallthru
        _
    $region6: #{model_forward.1} parent=1 // loop_footer
      %s22 = sadd.s32 1, %s18
    $region7: #{model_forward.1} parent=1 // loop_footer_branch
      %17 = sbr.rel target = $region3
    $region8: #{model_forward.1} parent=1 // loop_exit
      _
    %4772 = vsyncpa [#allocation4], 1
    %s4773 = scalar_lea.sflag [#allocation4], 1
    %4774 = vsyncpa %s4773, 1

</llo_original>
